<compile_context>
chip_gen: v7x
topology: tpu7x:2x2x1
jax: 0.10.0
libtpu: 0.0.40
codegen_flags: <defaults>
</compile_context>

<pallas_src>
import functools

import jax
import jax.numpy as jnp
import numpy as np
from jax import lax
from jax.experimental import pallas as pl
from jax.experimental.pallas import tpu as pltpu

NEG_SLOPE = 0.2      # act = nn.LeakyReLU(0.2)
EPS = 1e-5           # BatchNorm2d default eps
LANE = 128           # TPU lane width


def _round_up(x, m):
    return (x + m - 1) // m * m


def _pick_tile(total, target):
    """Largest divisor of `total` that is <= target."""
    t = max(1, min(total, target))
    while total % t:
        t -= 1
    return t


def _vmem_limit_bytes():
    # Per-generation VMEM budget: v7x has 64 MiB/TC, v5e/v6e 128 MiB.
    try:
        cap = int(pltpu.get_tpu_info().vmem_capacity_bytes)
        return min(cap // 2, 64 * 1024 * 1024)
    except Exception:
        return 32 * 1024 * 1024


VMEM_LIMIT = _vmem_limit_bytes()


def _collapse_rows(v, m, k):
    """Collapse a (r, w, k) bf16 tile to (r*w, k).

    When the second-minor dim is not a multiple of the bf16 sublane tile (16),
    do the collapse at f32 layout (always-supported aligned case) and repack.
    """
    if v.shape[-2] % 16 == 0:
        return v.reshape(m, k)
    return v.astype(jnp.float32).reshape(m, k).astype(jnp.bfloat16)


# --------------------- layer 1: conv3x3/s1 (im2col, K=9*Cin) ------------------ #

def _conv1_kernel(x_ref, w_ref, y_ref, ps_ref, pq_ref, *, th, W, K1, Cp):
    # x_ref: (1, th, W, 9*Cin) bf16 im2col tile; w_ref: (9*Cin, Cp) bf16.
    a = _collapse_rows(x_ref[0], th * W, K1)
    acc = jnp.dot(a, w_ref[...], preferred_element_type=jnp.float32)   # (M, Cp) f32

    @pl.when(pl.program_id(1) == 0)
    def _init():
        ps_ref[...] = jnp.zeros_like(ps_ref)
        pq_ref[...] = jnp.zeros_like(pq_ref)

    ps_ref[...] += jnp.sum(acc, axis=0).reshape(1, 1, Cp)
    pq_ref[...] += jnp.sum(acc * acc, axis=0).reshape(1, 1, Cp)
    y_ref[...] = acc.reshape(1, th, W, Cp).astype(y_ref.dtype)          # bf16 intermediate


def _conv1(xim, w1m, Cp, th):
    N, H, W, K1 = xim.shape
    nt = H // th
    kernel = functools.partial(_conv1_kernel, th=th, W=W, K1=K1, Cp=Cp)
    flops = 2 * N * H * W * K1 * Cp
    bytes_acc = xim.size * 2 + w1m.size * 2 + N * H * W * Cp * 2 + 2 * N * Cp * 4
    return pl.pallas_call(
        kernel,
        out_shape=(jax.ShapeDtypeStruct((N, H, W, Cp), jnp.bfloat16),
                   jax.ShapeDtypeStruct((N, 1, Cp), jnp.float32),
                   jax.ShapeDtypeStruct((N, 1, Cp), jnp.float32)),
        grid=(N, nt),
        in_specs=[pl.BlockSpec((1, th, W, K1), lambda n, i: (n, i, 0, 0)),
                  pl.BlockSpec((K1, Cp), lambda n, i: (0, 0))],
        out_specs=(pl.BlockSpec((1, th, W, Cp), lambda n, i: (n, i, 0, 0)),
                   pl.BlockSpec((1, 1, Cp), lambda n, i: (n, 0, 0)),
                   pl.BlockSpec((1, 1, Cp), lambda n, i: (n, 0, 0))),
        compiler_params=pltpu.CompilerParams(
            dimension_semantics=("parallel", "arbitrary"),
            vmem_limit_bytes=VMEM_LIMIT),
        cost_estimate=pl.CostEstimate(flops=flops, transcendentals=0,
                                      bytes_accessed=bytes_acc),
    )(xim, w1m)


# ------------- layer 2: conv3x3/s2 on space-to-depth input, 4 merged taps ----- #

def _conv2_kernel(x_ref, w_ref, y_ref, ps_ref, pq_ref, acc_ref, *, to, Wo, Cp, groups):
    # x_ref: (1, Ho+1, Wo+1, 4*Cp) bf16 -- full s2d (post BN1+act, zero-halo) image,
    #        resident across the row-tile axis.  w_ref: (10*Cp, Cp) bf16 merged taps.
    M = to * Wo
    r0 = pl.multiple_of(pl.program_id(1) * to, to)
    for gi, (ro, co, k, wlo) in enumerate(groups):
        patch = x_ref[0, pl.ds(r0 + ro, to), co:co + Wo, :k]            # (to, Wo, k) bf16
        a = _collapse_rows(patch, M, k)
        d = jnp.dot(a, w_ref[wlo:wlo + k, :], preferred_element_type=jnp.float32)
        if gi == 0:
            acc_ref[...] = d          # f32 VMEM scratch accumulator (no big SSA carry)
        else:
            acc_ref[...] += d
    y = acc_ref[...]

    @pl.when(pl.program_id(1) == 0)
    def _init():
        ps_ref[...] = jnp.zeros_like(ps_ref)
        pq_ref[...] = jnp.zeros_like(pq_ref)

    ps_ref[...] += jnp.sum(y, axis=0).reshape(1, 1, Cp)
    pq_ref[...] += jnp.sum(y * y, axis=0).reshape(1, 1, Cp)
    y_ref[...] = y.reshape(1, to, Wo, Cp)


def _conv2(xe, w2m, Cp, to):
    N, Hp, Wp, C4 = xe.shape
    Ho, Wo = Hp - 1, Wp - 1
    nt = Ho // to
    # merged tap groups: (row_offset, col_offset, K, weight_row_offset)
    groups = ((0, 0, 4 * Cp, 0),
              (0, 1, 3 * Cp, 4 * Cp),
              (1, 0, 2 * Cp, 7 * Cp),
              (1, 1, 1 * Cp, 9 * Cp))
    kernel = functools.partial(_conv2_kernel, to=to, Wo=Wo, Cp=Cp, groups=groups)
    flops = 2 * N * Ho * Wo * 10 * Cp * Cp
    bytes_acc = xe.size * 2 + w2m.size * 2 + N * Ho * Wo * Cp * 4 + 2 * N * Cp * 4
    return pl.pallas_call(
        kernel,
        out_shape=(jax.ShapeDtypeStruct((N, Ho, Wo, Cp), jnp.float32),
                   jax.ShapeDtypeStruct((N, 1, Cp), jnp.float32),
                   jax.ShapeDtypeStruct((N, 1, Cp), jnp.float32)),
        grid=(N, nt),
        in_specs=[pl.BlockSpec((1, Hp, Wp, C4), lambda n, i: (n, 0, 0, 0)),
                  pl.BlockSpec((10 * Cp, Cp), lambda n, i: (0, 0))],
        out_specs=(pl.BlockSpec((1, to, Wo, Cp), lambda n, i: (n, i, 0, 0)),
                   pl.BlockSpec((1, 1, Cp), lambda n, i: (n, 0, 0)),
                   pl.BlockSpec((1, 1, Cp), lambda n, i: (n, 0, 0))),
        scratch_shapes=[pltpu.VMEM((to * Wo, Cp), jnp.float32)],
        compiler_params=pltpu.CompilerParams(
            dimension_semantics=("parallel", "arbitrary"),
            vmem_limit_bytes=VMEM_LIMIT),
        cost_estimate=pl.CostEstimate(flops=flops, transcendentals=0,
                                      bytes_accessed=bytes_acc),
    )(xe, w2m)
    # TODO(synk): for very large images the resident per-image s2d block should be
    # row-tiled with an explicit +1-row halo (manual DMA) to bound VMEM on v7x.


# ----------------------- fused BN2 affine + LeakyReLU(0.2) -------------------- #

def _bn_act_kernel(y_ref, s_ref, b_ref, o_ref, *, Cout):
    z = y_ref[...] * s_ref[...] + b_ref[...]
    z = jnp.maximum(z, NEG_SLOPE * z)          # LeakyReLU without compare+select
    o_ref[...] = z[:, :Cout]                   # write only the real channels


def _bn_act(y2d, scale_row, bias_row, Cout):
    M, Cp = y2d.shape
    tm = M if M <= 2048 else 2048              # big lane-dense row tiles (~1 MiB)
    kernel = functools.partial(_bn_act_kernel, Cout=Cout)
    return pl.pallas_call(
        kernel,
        out_shape=jax.ShapeDtypeStruct((M, Cout), jnp.float32),
        grid=(pl.cdiv(M, tm),),
        in_specs=[pl.BlockSpec((tm, Cp), lambda i: (i, 0)),
                  pl.BlockSpec((1, Cp), lambda i: (0, 0)),
                  pl.BlockSpec((1, Cp), lambda i: (0, 0))],
        out_specs=pl.BlockSpec((tm, Cout), lambda i: (i, 0)),
        compiler_params=pltpu.CompilerParams(
            dimension_semantics=("parallel",),
            vmem_limit_bytes=VMEM_LIMIT),
    )(y2d, scale_row, bias_row)


# --------------------------------- JAX glue ----------------------------------- #

def _bn_affine(psum, psq, gamma_p, beta_p, count):
    s = jnp.sum(psum, axis=(0, 1))             # (Cp,)
    sq = jnp.sum(psq, axis=(0, 1))
    mean = s / count
    # TODO(synk): E[x^2]-E[x]^2 can cancel in f32 for very large counts; a shifted
    # or two-pass variance would be more robust at huge batch*spatial sizes.
    var = jnp.maximum(sq / count - mean * mean, 0.0)
    scale = gamma_p / jnp.sqrt(var + EPS)
    bias = beta_p - mean * scale
    return scale, bias


@jax.jit
def conv_block_forward(x_nhwc, params):
    N, H, W, Cin = x_nhwc.shape
    Cout = params["w1"].shape[-1]
    assert H % 2 == 0 and W % 2 == 0, "stride-2 path assumes even spatial dims"
    Cp = _round_up(Cout, LANE)                 # lane-dense channel axis
    pad_c = Cp - Cout
    Ho2, Wo2 = H // 2, W // 2

    # NOTE: conv biases b1/b2 are accepted but unused -- a per-channel conv bias
    # cancels exactly under the following BatchNorm (it shifts y and the batch
    # mean identically), so the forward output is unchanged.

    # ---- parameters (channel-padded, weights bf16 for the MXU) ----
    K1 = 9 * Cin
    w1m = jnp.pad(params["w1"], ((0, 0), (0, 0), (0, 0), (0, pad_c)))
    w1m = w1m.reshape(K1, Cp).astype(jnp.bfloat16)                     # (9*Cin, Cp)
    g1 = jnp.pad(params["g1"], (0, pad_c)).astype(jnp.float32)
    be1 = jnp.pad(params["be1"], (0, pad_c)).astype(jnp.float32)

    w2p = jnp.pad(params["w2"], ((0, 0), (0, 0), (0, pad_c), (0, pad_c)))
    w2p = w2p.astype(jnp.bfloat16)                                     # (3,3,Cp,Cp)
    zero = jnp.zeros((Cp, Cp), jnp.bfloat16)
    # merged tap-group weights; input lane blocks are (row-parity, col-parity)-major:
    #   group (ro,co)=(0,0): K=4Cp  taps (0,0),(0,1),(1,0),(1,1)
    #   group (0,1):         K=3Cp  taps (0,2), <zero>, (1,2)
    #   group (1,0):         K=2Cp  taps (2,0),(2,1)
    #   group (1,1):         K=1Cp  tap  (2,2)
    w2m = jnp.concatenate([w2p[0, 0], w2p[0, 1], w2p[1, 0], w2p[1, 1],
                           w2p[0, 2], zero, w2p[1, 2],
                           w2p[2, 0], w2p[2, 1],
                           w2p[2, 2]], axis=0)                         # (10*Cp, Cp)
    g2 = jnp.pad(params["g2"], (0, pad_c)).astype(jnp.float32)
    be2 = jnp.pad(params["be2"], (0, pad_c)).astype(jnp.float32)

    # ---- layer 1: conv3x3 stride 1 as ONE K=9*Cin matmul per spatial row tile ----
    # im2col in JAX (Cin is tiny, the 9x blowup is cheap) -> no halo blocks,
    # maximal K-merge, bf16 input so the kernel never re-casts.
    xp1 = jnp.pad(x_nhwc, ((0, 0), (1, 1), (1, 1), (0, 0)))
    xim = jnp.concatenate([xp1[:, dy:dy + H, dx:dx + W, :]
                           for dy in range(3) for dx in range(3)],
                          axis=-1).astype(jnp.bfloat16)                # (N, H, W, 9*Cin)
    th1 = _pick_tile(H, 32)
    y1, ps1, pq1 = _conv1(xim, w1m, Cp, th1)                           # y1 bf16 (N,H,W,Cp)

    # ---- BN1 affine + LeakyReLU + pad + space-to-depth: one fused bf16 XLA pass.
    # Padding is applied AFTER the activation so the stride-2 conv's zero halo
    # stays exactly zero.
    scale1, bias1 = _bn_affine(ps1, pq1, g1, be1, N * H * W)
    a1 = y1.astype(jnp.float32) * scale1 + bias1
    a1 = jnp.maximum(a1, NEG_SLOPE * a1).astype(jnp.bfloat16)
    ap = jnp.pad(a1, ((0, 0), (1, 1), (1, 1), (0, 0)))                 # (N,H+2,W+2,Cp)
    xe = ap.reshape(N, Ho2 + 1, 2, Wo2 + 1, 2, Cp)
    xe = xe.transpose(0, 1, 3, 2, 4, 5).reshape(N, Ho2 + 1, Wo2 + 1, 4 * Cp)
    # TODO(synk): the pad + space-to-depth relayout could be folded into the
    # conv1 kernel's out_spec to remove this (bf16) HBM pass entirely.

    # ---- layer 2: conv3x3 stride 2 via 4 merged-K tap matmuls + BN2 partial stats ----
    to2 = _pick_tile(Ho2, 16)
    y2, ps2, pq2 = _conv2(xe, w2m, Cp, to2)                            # y2 f32 (N,Ho2,Wo2,Cp)

    # ---- BN2 affine + LeakyReLU, writing only the real Cout channels ----
    scale2, bias2 = _bn_affine(ps2, pq2, g2, be2, N * Ho2 * Wo2)
    out2d = _bn_act(y2.reshape(N * Ho2 * Wo2, Cp),
                    scale2.reshape(1, Cp), bias2.reshape(1, Cp), Cout)
    return out2d.reshape(N, Ho2, Wo2, Cout)


# ----------------------------- pure-JAX reference ------------------------------ #

def _ref_step(x, w, b, g, be, stride):
    y = lax.conv_general_dilated(
        x, w, (stride, stride), ((1, 1), (1, 1)),
        dimension_numbers=("NHWC", "HWIO", "NHWC"),
        precision=lax.Precision.HIGHEST) + b
    mean = jnp.mean(y, axis=(0, 1, 2))
    var = jnp.var(y, axis=(0, 1, 2))
    yn = (y - mean) / jnp.sqrt(var + EPS) * g + be
    return jnp.where(yn > 0, yn, NEG_SLOPE * yn)


def ref_forward(x_nhwc, p):
    x1 = _ref_step(x_nhwc, p["w1"], p["b1"], p["g1"], p["be1"], 1)
    return _ref_step(x1, p["w2"], p["b2"], p["g2"], p["be2"], 2)


# ------------------------------------ main ------------------------------------- #

if __name__ == "__main__":
    N, Cin, Cout, H, W = 2, 4, 8, 16, 16
    key = jax.random.PRNGKey(0)
    ks = jax.random.split(key, 9)

    # PyTorch-side input is NCHW
    x_nchw = jax.random.normal(ks[0], (N, Cin, H, W), jnp.float32)

    # deterministic synthetic parameters (conv weights stored directly as HWIO)
    params = {
        "w1": 0.1 * jax.random.normal(ks[1], (3, 3, Cin, Cout), jnp.float32),
        "b1": 0.1 * jax.random.normal(ks[2], (Cout,), jnp.float32),
        "g1": 1.0 + 0.1 * jax.random.normal(ks[3], (Cout,), jnp.float32),
        "be1": 0.1 * jax.random.normal(ks[4], (Cout,), jnp.float32),
        "w2": 0.1 * jax.random.normal(ks[5], (3, 3, Cout, Cout), jnp.float32),
        "b2": 0.1 * jax.random.normal(ks[6], (Cout,), jnp.float32),
        "g2": 1.0 + 0.1 * jax.random.normal(ks[7], (Cout,), jnp.float32),
        "be2": 0.1 * jax.random.normal(ks[8], (Cout,), jnp.float32),
    }

    # layout: NCHW -> NHWC for the kernels, back to NCHW at the end
    x_nhwc = jnp.transpose(x_nchw, (0, 2, 3, 1))
    out_nhwc = conv_block_forward(x_nhwc, params)
    out_nchw = jnp.transpose(out_nhwc, (0, 3, 1, 2))
    jax.block_until_ready(out_nchw)

    assert out_nchw.shape == (N, Cout, H // 2, W // 2), out_nchw.shape

    # Reference is f32; tolerance covers bf16 MXU inputs + the bf16 layer-1
    # intermediate (f32 accumulation and f32 BN statistics everywhere).
    ref_nchw = jnp.transpose(ref_forward(x_nhwc, params), (0, 3, 1, 2))
    np.testing.assert_allclose(np.asarray(out_nchw), np.asarray(ref_nchw),
                               atol=4e-2, rtol=4e-2)
    print("KERNEL_OK")
</pallas_src>

<mosaic_0001>
module attributes {stable_mosaic.version = 11 : i64} {
  func.func @_conv1_kernel(%arg0: i32, %arg1: i32, %arg2: memref<1x16x16x36xbf16, #tpu.memory_space<vmem>>, %arg3: memref<36x128xbf16, #tpu.memory_space<vmem>>, %arg4: memref<1x16x16x128xbf16, #tpu.memory_space<vmem>>, %arg5: memref<1x1x128xf32, #tpu.memory_space<vmem>>, %arg6: memref<1x1x128xf32, #tpu.memory_space<vmem>>) attributes {dimension_semantics = [#tpu.dimension_semantics<parallel>, #tpu.dimension_semantics<arbitrary>], iteration_bounds = array<i64: 2, 1>, scalar_prefetch = 0 : i64, scratch_operands = 0 : i64, tpu.core_type = #tpu.core_type<tc>, window_params = [{transform_indices = @transform_0, window_bounds = array<i64: 1, 16, 16, 36>}, {pipeline_mode = #tpu.pipeline_mode<synchronous>, transform_indices = @transform_1, window_bounds = array<i64: 36, 128>}, {transform_indices = @transform_2, window_bounds = array<i64: 1, 16, 16, 128>}, {transform_indices = @transform_3, window_bounds = array<i64: 1, 1, 128>}, {transform_indices = @transform_4, window_bounds = array<i64: 1, 1, 128>}]} {
    %c0 = arith.constant 0 : index
    %c0_0 = arith.constant 0 : index
    %c0_1 = arith.constant 0 : index
    %c0_2 = arith.constant 0 : index
    %0 = vector.load %arg2[%c0, %c0_0, %c0_1, %c0_2] : memref<1x16x16x36xbf16, #tpu.memory_space<vmem>>, vector<1x16x16x36xbf16>
    %1 = vector.shape_cast %0 : vector<1x16x16x36xbf16> to vector<16x16x36xbf16>
    %2 = vector.shape_cast %1 : vector<16x16x36xbf16> to vector<256x36xbf16>
    %c0_3 = arith.constant 0 : index
    %c0_4 = arith.constant 0 : index
    %3 = vector.load %arg3[%c0_3, %c0_4] : memref<36x128xbf16, #tpu.memory_space<vmem>>, vector<36x128xbf16>
    %cst = arith.constant dense<0.000000e+00> : vector<256x128xf32>
    %4 = tpu.matmul %2, %3, %cst {dimension_numbers = #tpu.dot_dimension_numbers<[1], [0], [0], [1], [0, 0, 1, 1], [], []>} : vector<256x36xbf16>, vector<36x128xbf16>, vector<256x128xf32> -> vector<256x128xf32>
    %c0_i32 = arith.constant 0 : i32
    %5 = arith.cmpi eq, %arg1, %c0_i32 : i32
    %6 = arith.extui %5 : i1 to i32
    %c0_i32_5 = arith.constant 0 : i32
    %7 = arith.cmpi ne, %6, %c0_i32_5 : i32
    scf.if %7 {
      %cst_24 = arith.constant 0.000000e+00 : f32
      %22 = vector.broadcast %cst_24 : f32 to vector<1x1x128xf32>
      %c0_25 = arith.constant 0 : index
      %c0_26 = arith.constant 0 : index
      %c0_27 = arith.constant 0 : index
      %23 = vector.load %arg5[%c0_25, %c0_26, %c0_27] : memref<1x1x128xf32, #tpu.memory_space<vmem>>, vector<1x1x128xf32>
      tpu.vector_store %arg5[%c0_25, %c0_26, %c0_27], %22 {strides = array<i32>} : memref<1x1x128xf32, #tpu.memory_space<vmem>>, vector<1x1x128xf32>,
      %cst_28 = arith.constant 0.000000e+00 : f32
      %24 = vector.broadcast %cst_28 : f32 to vector<1x1x128xf32>
      %c0_29 = arith.constant 0 : index
      %c0_30 = arith.constant 0 : index
      %c0_31 = arith.constant 0 : index
      %25 = vector.load %arg6[%c0_29, %c0_30, %c0_31] : memref<1x1x128xf32, #tpu.memory_space<vmem>>, vector<1x1x128xf32>
      tpu.vector_store %arg6[%c0_29, %c0_30, %c0_31], %24 {strides = array<i32>} : memref<1x1x128xf32, #tpu.memory_space<vmem>>, vector<1x1x128xf32>,
    } else {
    }
    %c0_6 = arith.constant 0 : index
    %c0_7 = arith.constant 0 : index
    %c0_8 = arith.constant 0 : index
    %8 = vector.load %arg5[%c0_6, %c0_7, %c0_8] : memref<1x1x128xf32, #tpu.memory_space<vmem>>, vector<1x1x128xf32>
    %cst_9 = arith.constant dense<0.000000e+00> : vector<128xf32>
    %9 = vector.multi_reduction <add>, %4, %cst_9 [0] : vector<256x128xf32> to vector<128xf32>
    %10 = vector.shape_cast %9 : vector<128xf32> to vector<1x1x128xf32>
    %11 = arith.addf %8, %10 : vector<1x1x128xf32>
    %c0_10 = arith.constant 0 : index
    %c0_11 = arith.constant 0 : index
    %c0_12 = arith.constant 0 : index
    %12 = vector.load %arg5[%c0_10, %c0_11, %c0_12] : memref<1x1x128xf32, #tpu.memory_space<vmem>>, vector<1x1x128xf32>
    tpu.vector_store %arg5[%c0_10, %c0_11, %c0_12], %11 {strides = array<i32>} : memref<1x1x128xf32, #tpu.memory_space<vmem>>, vector<1x1x128xf32>,
    %c0_13 = arith.constant 0 : index
    %c0_14 = arith.constant 0 : index
    %c0_15 = arith.constant 0 : index
    %13 = vector.load %arg6[%c0_13, %c0_14, %c0_15] : memref<1x1x128xf32, #tpu.memory_space<vmem>>, vector<1x1x128xf32>
    %14 = arith.mulf %4, %4 : vector<256x128xf32>
    %cst_16 = arith.constant dense<0.000000e+00> : vector<128xf32>
    %15 = vector.multi_reduction <add>, %14, %cst_16 [0] : vector<256x128xf32> to vector<128xf32>
    %16 = vector.shape_cast %15 : vector<128xf32> to vector<1x1x128xf32>
    %17 = arith.addf %13, %16 : vector<1x1x128xf32>
    %c0_17 = arith.constant 0 : index
    %c0_18 = arith.constant 0 : index
    %c0_19 = arith.constant 0 : index
    %18 = vector.load %arg6[%c0_17, %c0_18, %c0_19] : memref<1x1x128xf32, #tpu.memory_space<vmem>>, vector<1x1x128xf32>
    tpu.vector_store %arg6[%c0_17, %c0_18, %c0_19], %17 {strides = array<i32>} : memref<1x1x128xf32, #tpu.memory_space<vmem>>, vector<1x1x128xf32>,
    %19 = vector.shape_cast %4 : vector<256x128xf32> to vector<1x16x16x128xf32>
    %20 = arith.truncf %19 : vector<1x16x16x128xf32> to vector<1x16x16x128xbf16>
    %c0_20 = arith.constant 0 : index
    %c0_21 = arith.constant 0 : index
    %c0_22 = arith.constant 0 : index
    %c0_23 = arith.constant 0 : index
    %21 = vector.load %arg4[%c0_20, %c0_21, %c0_22, %c0_23] : memref<1x16x16x128xbf16, #tpu.memory_space<vmem>>, vector<1x16x16x128xbf16>
    tpu.vector_store %arg4[%c0_20, %c0_21, %c0_22, %c0_23], %20 {strides = array<i32>} : memref<1x16x16x128xbf16, #tpu.memory_space<vmem>>, vector<1x16x16x128xbf16>,
    return
  }
  func.func @transform_0(%arg0: i32, %arg1: i32) -> (i32, i32, i32, i32) {
    %c0_i32 = arith.constant 0 : i32
    %c0_i32_0 = arith.constant 0 : i32
    %c0_i32_1 = arith.constant 0 : i32
    return %arg0, %arg1, %c0_i32, %c0_i32_0 : i32, i32, i32, i32
  }
  func.func @transform_1(%arg0: i32, %arg1: i32) -> (i32, i32) {
    %c0_i32 = arith.constant 0 : i32
    %c0_i32_0 = arith.constant 0 : i32
    %c0_i32_1 = arith.constant 0 : i32
    return %c0_i32, %c0_i32_0 : i32, i32
  }
  func.func @transform_2(%arg0: i32, %arg1: i32) -> (i32, i32, i32, i32) {
    %c0_i32 = arith.constant 0 : i32
    %c0_i32_0 = arith.constant 0 : i32
    %c0_i32_1 = arith.constant 0 : i32
    return %arg0, %arg1, %c0_i32, %c0_i32_0 : i32, i32, i32, i32
  }
  func.func @transform_3(%arg0: i32, %arg1: i32) -> (i32, i32, i32) {
    %c0_i32 = arith.constant 0 : i32
    %c0_i32_0 = arith.constant 0 : i32
    %c0_i32_1 = arith.constant 0 : i32
    return %arg0, %c0_i32, %c0_i32_0 : i32, i32, i32
  }
  func.func @transform_4(%arg0: i32, %arg1: i32) -> (i32, i32, i32) {
    %c0_i32 = arith.constant 0 : i32
    %c0_i32_0 = arith.constant 0 : i32
    %c0_i32_1 = arith.constant 0 : i32
    return %arg0, %c0_i32, %c0_i32_0 : i32, i32, i32
  }
}

module attributes {stable_mosaic.version = 11 : i64} {
  func.func @_bn_act_kernel(%arg0: i32, %arg1: memref<128x128xf32, #tpu.memory_space<vmem>>, %arg2: memref<1x128xf32, #tpu.memory_space<vmem>>, %arg3: memref<1x128xf32, #tpu.memory_space<vmem>>, %arg4: memref<128x8xf32, #tpu.memory_space<vmem>>) attributes {dimension_semantics = [#tpu.dimension_semantics<parallel>], iteration_bounds = array<i64: 1>, scalar_prefetch = 0 : i64, scratch_operands = 0 : i64, tpu.core_type = #tpu.core_type<tc>, window_params = [{transform_indices = @transform_0, window_bounds = array<i64: 128, 128>}, {pipeline_mode = #tpu.pipeline_mode<synchronous>, transform_indices = @transform_1, window_bounds = array<i64: 1, 128>}, {pipeline_mode = #tpu.pipeline_mode<synchronous>, transform_indices = @transform_2, window_bounds = array<i64: 1, 128>}, {transform_indices = @transform_3, window_bounds = array<i64: 128, 8>}]} {
    %c0 = arith.constant 0 : index
    %c0_0 = arith.constant 0 : index
    %0 = vector.load %arg1[%c0, %c0_0] : memref<128x128xf32, #tpu.memory_space<vmem>>, vector<128x128xf32>
    %c0_1 = arith.constant 0 : index
    %c0_2 = arith.constant 0 : index
    %1 = vector.load %arg2[%c0_1, %c0_2] : memref<1x128xf32, #tpu.memory_space<vmem>>, vector<1x128xf32>
    %2 = vector.broadcast %1 : vector<1x128xf32> to vector<128x128xf32>
    %3 = arith.mulf %0, %2 : vector<128x128xf32>
    %c0_3 = arith.constant 0 : index
    %c0_4 = arith.constant 0 : index
    %4 = vector.load %arg3[%c0_3, %c0_4] : memref<1x128xf32, #tpu.memory_space<vmem>>, vector<1x128xf32>
    %5 = vector.broadcast %4 : vector<1x128xf32> to vector<128x128xf32>
    %6 = arith.addf %3, %5 : vector<128x128xf32>
    %cst = arith.constant 2.000000e-01 : f32
    %7 = vector.broadcast %cst : f32 to vector<128x128xf32>
    %8 = arith.mulf %7, %6 : vector<128x128xf32>
    %9 = arith.maximumf %6, %8 : vector<128x128xf32>
    %10 = vector.extract_strided_slice %9 {offsets = [0, 0], sizes = [128, 8], strides = [1, 1]} : vector<128x128xf32> to vector<128x8xf32>
    %c0_5 = arith.constant 0 : index
    %c0_6 = arith.constant 0 : index
    %11 = vector.load %arg4[%c0_5, %c0_6] : memref<128x8xf32, #tpu.memory_space<vmem>>, vector<128x8xf32>
    tpu.vector_store %arg4[%c0_5, %c0_6], %10 {strides = array<i32>} : memref<128x8xf32, #tpu.memory_space<vmem>>, vector<128x8xf32>,
    return
  }
  func.func @transform_0(%arg0: i32) -> (i32, i32) {
    %c0_i32 = arith.constant 0 : i32
    %c0_i32_0 = arith.constant 0 : i32
    return %arg0, %c0_i32 : i32, i32
  }
  func.func @transform_1(%arg0: i32) -> (i32, i32) {
    %c0_i32 = arith.constant 0 : i32
    %c0_i32_0 = arith.constant 0 : i32
    %c0_i32_1 = arith.constant 0 : i32
    return %c0_i32, %c0_i32_0 : i32, i32
  }
  func.func @transform_2(%arg0: i32) -> (i32, i32) {
    %c0_i32 = arith.constant 0 : i32
    %c0_i32_0 = arith.constant 0 : i32
    %c0_i32_1 = arith.constant 0 : i32
    return %c0_i32, %c0_i32_0 : i32, i32
  }
  func.func @transform_3(%arg0: i32) -> (i32, i32) {
    %c0_i32 = arith.constant 0 : i32
    %c0_i32_0 = arith.constant 0 : i32
    return %arg0, %c0_i32 : i32, i32
  }
}

module attributes {stable_mosaic.version = 11 : i64} {
  func.func @_conv2_kernel(%arg0: i32, %arg1: i32, %arg2: memref<1x9x9x512xbf16, #tpu.memory_space<vmem>>, %arg3: memref<1280x128xbf16, #tpu.memory_space<vmem>>, %arg4: memref<1x8x8x128xf32, #tpu.memory_space<vmem>>, %arg5: memref<1x1x128xf32, #tpu.memory_space<vmem>>, %arg6: memref<1x1x128xf32, #tpu.memory_space<vmem>>, %arg7: memref<64x128xf32, #tpu.memory_space<vmem>>) attributes {dimension_semantics = [#tpu.dimension_semantics<parallel>, #tpu.dimension_semantics<arbitrary>], iteration_bounds = array<i64: 2, 1>, scalar_prefetch = 0 : i64, scratch_operands = 1 : i64, tpu.core_type = #tpu.core_type<tc>, window_params = [{transform_indices = @transform_0, window_bounds = array<i64: 1, 9, 9, 512>}, {pipeline_mode = #tpu.pipeline_mode<synchronous>, transform_indices = @transform_1, window_bounds = array<i64: 1280, 128>}, {transform_indices = @transform_2, window_bounds = array<i64: 1, 8, 8, 128>}, {transform_indices = @transform_3, window_bounds = array<i64: 1, 1, 128>}, {transform_indices = @transform_4, window_bounds = array<i64: 1, 1, 128>}]} {
    %c8_i32 = arith.constant 8 : i32
    %0 = arith.muli %arg1, %c8_i32 : i32
    %1 = tpu.assume_multiple %0, 8 : i32
    %c0_i32 = arith.constant 0 : i32
    %2 = arith.addi %1, %c0_i32 : i32
    %c0 = arith.constant 0 : index
    %3 = arith.index_cast %2 : i32 to index
    %c0_0 = arith.constant 0 : index
    %c0_1 = arith.constant 0 : index
    %4 = vector.load %arg2[%c0, %3, %c0_0, %c0_1] : memref<1x9x9x512xbf16, #tpu.memory_space<vmem>>, vector<1x8x8x512xbf16>
    %5 = vector.shape_cast %4 : vector<1x8x8x512xbf16> to vector<8x8x512xbf16>
    %6 = arith.extf %5 : vector<8x8x512xbf16> to vector<8x8x512xf32>
    %7 = vector.shape_cast %6 : vector<8x8x512xf32> to vector<64x512xf32>
    %8 = arith.truncf %7 : vector<64x512xf32> to vector<64x512xbf16>
    %c0_2 = arith.constant 0 : index
    %c0_3 = arith.constant 0 : index
    %9 = vector.load %arg3[%c0_2, %c0_3] : memref<1280x128xbf16, #tpu.memory_space<vmem>>, vector<512x128xbf16>
    %cst = arith.constant dense<0.000000e+00> : vector<64x128xf32>
    %10 = tpu.matmul %8, %9, %cst {dimension_numbers = #tpu.dot_dimension_numbers<[1], [0], [0], [1], [0, 0, 1, 1], [], []>} : vector<64x512xbf16>, vector<512x128xbf16>, vector<64x128xf32> -> vector<64x128xf32>
    %c0_4 = arith.constant 0 : index
    %c0_5 = arith.constant 0 : index
    %11 = vector.load %arg7[%c0_4, %c0_5] : memref<64x128xf32, #tpu.memory_space<vmem>>, vector<64x128xf32>
    tpu.vector_store %arg7[%c0_4, %c0_5], %10 {strides = array<i32>} : memref<64x128xf32, #tpu.memory_space<vmem>>, vector<64x128xf32>,
    %c0_i32_6 = arith.constant 0 : i32
    %12 = arith.addi %1, %c0_i32_6 : i32
    %c0_7 = arith.constant 0 : index
    %13 = arith.index_cast %12 : i32 to index
    %c1 = arith.constant 1 : index
    %c0_8 = arith.constant 0 : index
    %14 = vector.load %arg2[%c0_7, %13, %c1, %c0_8] : memref<1x9x9x512xbf16, #tpu.memory_space<vmem>>, vector<1x8x8x384xbf16>
    %15 = vector.shape_cast %14 : vector<1x8x8x384xbf16> to vector<8x8x384xbf16>
    %16 = arith.extf %15 : vector<8x8x384xbf16> to vector<8x8x384xf32>
    %17 = vector.shape_cast %16 : vector<8x8x384xf32> to vector<64x384xf32>
    %18 = arith.truncf %17 : vector<64x384xf32> to vector<64x384xbf16>
    %c512 = arith.constant 512 : index
    %c0_9 = arith.constant 0 : index
    %19 = vector.load %arg3[%c512, %c0_9] : memref<1280x128xbf16, #tpu.memory_space<vmem>>, vector<384x128xbf16>
    %cst_10 = arith.constant dense<0.000000e+00> : vector<64x128xf32>
    %20 = tpu.matmul %18, %19, %cst_10 {dimension_numbers = #tpu.dot_dimension_numbers<[1], [0], [0], [1], [0, 0, 1, 1], [], []>} : vector<64x384xbf16>, vector<384x128xbf16>, vector<64x128xf32> -> vector<64x128xf32>
    %c0_11 = arith.constant 0 : index
    %c0_12 = arith.constant 0 : index
    %21 = vector.load %arg7[%c0_11, %c0_12] : memref<64x128xf32, #tpu.memory_space<vmem>>, vector<64x128xf32>
    %22 = arith.addf %21, %20 : vector<64x128xf32>
    %c0_13 = arith.constant 0 : index
    %c0_14 = arith.constant 0 : index
    %23 = vector.load %arg7[%c0_13, %c0_14] : memref<64x128xf32, #tpu.memory_space<vmem>>, vector<64x128xf32>
    tpu.vector_store %arg7[%c0_13, %c0_14], %22 {strides = array<i32>} : memref<64x128xf32, #tpu.memory_space<vmem>>, vector<64x128xf32>,
    %c1_i32 = arith.constant 1 : i32
    %24 = arith.addi %1, %c1_i32 : i32
    %c0_15 = arith.constant 0 : index
    %25 = arith.index_cast %24 : i32 to index
    %c0_16 = arith.constant 0 : index
    %c0_17 = arith.constant 0 : index
    %26 = vector.load %arg2[%c0_15, %25, %c0_16, %c0_17] : memref<1x9x9x512xbf16, #tpu.memory_space<vmem>>, vector<1x8x8x256xbf16>
    %27 = vector.shape_cast %26 : vector<1x8x8x256xbf16> to vector<8x8x256xbf16>
    %28 = arith.extf %27 : vector<8x8x256xbf16> to vector<8x8x256xf32>
    %29 = vector.shape_cast %28 : vector<8x8x256xf32> to vector<64x256xf32>
    %30 = arith.truncf %29 : vector<64x256xf32> to vector<64x256xbf16>
    %c896 = arith.constant 896 : index
    %c0_18 = arith.constant 0 : index
    %31 = vector.load %arg3[%c896, %c0_18] : memref<1280x128xbf16, #tpu.memory_space<vmem>>, vector<256x128xbf16>
    %cst_19 = arith.constant dense<0.000000e+00> : vector<64x128xf32>
    %32 = tpu.matmul %30, %31, %cst_19 {dimension_numbers = #tpu.dot_dimension_numbers<[1], [0], [0], [1], [0, 0, 1, 1], [], []>} : vector<64x256xbf16>, vector<256x128xbf16>, vector<64x128xf32> -> vector<64x128xf32>
    %c0_20 = arith.constant 0 : index
    %c0_21 = arith.constant 0 : index
    %33 = vector.load %arg7[%c0_20, %c0_21] : memref<64x128xf32, #tpu.memory_space<vmem>>, vector<64x128xf32>
    %34 = arith.addf %33, %32 : vector<64x128xf32>
    %c0_22 = arith.constant 0 : index
    %c0_23 = arith.constant 0 : index
    %35 = vector.load %arg7[%c0_22, %c0_23] : memref<64x128xf32, #tpu.memory_space<vmem>>, vector<64x128xf32>
    tpu.vector_store %arg7[%c0_22, %c0_23], %34 {strides = array<i32>} : memref<64x128xf32, #tpu.memory_space<vmem>>, vector<64x128xf32>,
    %c1_i32_24 = arith.constant 1 : i32
    %36 = arith.addi %1, %c1_i32_24 : i32
    %c0_25 = arith.constant 0 : index
    %37 = arith.index_cast %36 : i32 to index
    %c1_26 = arith.constant 1 : index
    %c0_27 = arith.constant 0 : index
    %38 = vector.load %arg2[%c0_25, %37, %c1_26, %c0_27] : memref<1x9x9x512xbf16, #tpu.memory_space<vmem>>, vector<1x8x8x128xbf16>
    %39 = vector.shape_cast %38 : vector<1x8x8x128xbf16> to vector<8x8x128xbf16>
    %40 = arith.extf %39 : vector<8x8x128xbf16> to vector<8x8x128xf32>
    %41 = vector.shape_cast %40 : vector<8x8x128xf32> to vector<64x128xf32>
    %42 = arith.truncf %41 : vector<64x128xf32> to vector<64x128xbf16>
    %c1152 = arith.constant 1152 : index
    %c0_28 = arith.constant 0 : index
    %43 = vector.load %arg3[%c1152, %c0_28] : memref<1280x128xbf16, #tpu.memory_space<vmem>>, vector<128x128xbf16>
    %cst_29 = arith.constant dense<0.000000e+00> : vector<64x128xf32>
    %44 = tpu.matmul %42, %43, %cst_29 {dimension_numbers = #tpu.dot_dimension_numbers<[1], [0], [0], [1], [0, 0, 1, 1], [], []>} : vector<64x128xbf16>, vector<128x128xbf16>, vector<64x128xf32> -> vector<64x128xf32>
    %c0_30 = arith.constant 0 : index
    %c0_31 = arith.constant 0 : index
    %45 = vector.load %arg7[%c0_30, %c0_31] : memref<64x128xf32, #tpu.memory_space<vmem>>, vector<64x128xf32>
    %46 = arith.addf %45, %44 : vector<64x128xf32>
    %c0_32 = arith.constant 0 : index
    %c0_33 = arith.constant 0 : index
    %47 = vector.load %arg7[%c0_32, %c0_33] : memref<64x128xf32, #tpu.memory_space<vmem>>, vector<64x128xf32>
    tpu.vector_store %arg7[%c0_32, %c0_33], %46 {strides = array<i32>} : memref<64x128xf32, #tpu.memory_space<vmem>>, vector<64x128xf32>,
    %c0_34 = arith.constant 0 : index
    %c0_35 = arith.constant 0 : index
    %48 = vector.load %arg7[%c0_34, %c0_35] : memref<64x128xf32, #tpu.memory_space<vmem>>, vector<64x128xf32>
    %c0_i32_36 = arith.constant 0 : i32
    %49 = arith.cmpi eq, %arg1, %c0_i32_36 : i32
    %50 = arith.extui %49 : i1 to i32
    %c0_i32_37 = arith.constant 0 : i32
    %51 = arith.cmpi ne, %50, %c0_i32_37 : i32
    scf.if %51 {
      %cst_56 = arith.constant 0.000000e+00 : f32
      %65 = vector.broadcast %cst_56 : f32 to vector<1x1x128xf32>
      %c0_57 = arith.constant 0 : index
      %c0_58 = arith.constant 0 : index
      %c0_59 = arith.constant 0 : index
      %66 = vector.load %arg5[%c0_57, %c0_58, %c0_59] : memref<1x1x128xf32, #tpu.memory_space<vmem>>, vector<1x1x128xf32>
      tpu.vector_store %arg5[%c0_57, %c0_58, %c0_59], %65 {strides = array<i32>} : memref<1x1x128xf32, #tpu.memory_space<vmem>>, vector<1x1x128xf32>,
      %cst_60 = arith.constant 0.000000e+00 : f32
      %67 = vector.broadcast %cst_60 : f32 to vector<1x1x128xf32>
      %c0_61 = arith.constant 0 : index
      %c0_62 = arith.constant 0 : index
      %c0_63 = arith.constant 0 : index
      %68 = vector.load %arg6[%c0_61, %c0_62, %c0_63] : memref<1x1x128xf32, #tpu.memory_space<vmem>>, vector<1x1x128xf32>
      tpu.vector_store %arg6[%c0_61, %c0_62, %c0_63], %67 {strides = array<i32>} : memref<1x1x128xf32, #tpu.memory_space<vmem>>, vector<1x1x128xf32>,
    } else {
    }
    %c0_38 = arith.constant 0 : index
    %c0_39 = arith.constant 0 : index
    %c0_40 = arith.constant 0 : index
    %52 = vector.load %arg5[%c0_38, %c0_39, %c0_40] : memref<1x1x128xf32, #tpu.memory_space<vmem>>, vector<1x1x128xf32>
    %cst_41 = arith.constant dense<0.000000e+00> : vector<128xf32>
    %53 = vector.multi_reduction <add>, %48, %cst_41 [0] : vector<64x128xf32> to vector<128xf32>
    %54 = vector.shape_cast %53 : vector<128xf32> to vector<1x1x128xf32>
    %55 = arith.addf %52, %54 : vector<1x1x128xf32>
    %c0_42 = arith.constant 0 : index
    %c0_43 = arith.constant 0 : index
    %c0_44 = arith.constant 0 : index
    %56 = vector.load %arg5[%c0_42, %c0_43, %c0_44] : memref<1x1x128xf32, #tpu.memory_space<vmem>>, vector<1x1x128xf32>
    tpu.vector_store %arg5[%c0_42, %c0_43, %c0_44], %55 {strides = array<i32>} : memref<1x1x128xf32, #tpu.memory_space<vmem>>, vector<1x1x128xf32>,
    %c0_45 = arith.constant 0 : index
    %c0_46 = arith.constant 0 : index
    %c0_47 = arith.constant 0 : index
    %57 = vector.load %arg6[%c0_45, %c0_46, %c0_47] : memref<1x1x128xf32, #tpu.memory_space<vmem>>, vector<1x1x128xf32>
    %58 = arith.mulf %48, %48 : vector<64x128xf32>
    %cst_48 = arith.constant dense<0.000000e+00> : vector<128xf32>
    %59 = vector.multi_reduction <add>, %58, %cst_48 [0] : vector<64x128xf32> to vector<128xf32>
    %60 = vector.shape_cast %59 : vector<128xf32> to vector<1x1x128xf32>
    %61 = arith.addf %57, %60 : vector<1x1x128xf32>
    %c0_49 = arith.constant 0 : index
    %c0_50 = arith.constant 0 : index
    %c0_51 = arith.constant 0 : index
    %62 = vector.load %arg6[%c0_49, %c0_50, %c0_51] : memref<1x1x128xf32, #tpu.memory_space<vmem>>, vector<1x1x128xf32>
    tpu.vector_store %arg6[%c0_49, %c0_50, %c0_51], %61 {strides = array<i32>} : memref<1x1x128xf32, #tpu.memory_space<vmem>>, vector<1x1x128xf32>,
    %63 = vector.shape_cast %48 : vector<64x128xf32> to vector<1x8x8x128xf32>
    %c0_52 = arith.constant 0 : index
    %c0_53 = arith.constant 0 : index
    %c0_54 = arith.constant 0 : index
    %c0_55 = arith.constant 0 : index
    %64 = vector.load %arg4[%c0_52, %c0_53, %c0_54, %c0_55] : memref<1x8x8x128xf32, #tpu.memory_space<vmem>>, vector<1x8x8x128xf32>
    tpu.vector_store %arg4[%c0_52, %c0_53, %c0_54, %c0_55], %63 {strides = array<i32>} : memref<1x8x8x128xf32, #tpu.memory_space<vmem>>, vector<1x8x8x128xf32>,
    return
  }
  func.func @transform_0(%arg0: i32, %arg1: i32) -> (i32, i32, i32, i32) {
    %c0_i32 = arith.constant 0 : i32
    %c0_i32_0 = arith.constant 0 : i32
    %c0_i32_1 = arith.constant 0 : i32
    %c0_i32_2 = arith.constant 0 : i32
    return %arg0, %c0_i32, %c0_i32_0, %c0_i32_1 : i32, i32, i32, i32
  }
  func.func @transform_1(%arg0: i32, %arg1: i32) -> (i32, i32) {
    %c0_i32 = arith.constant 0 : i32
    %c0_i32_0 = arith.constant 0 : i32
    %c0_i32_1 = arith.constant 0 : i32
    return %c0_i32, %c0_i32_0 : i32, i32
  }
  func.func @transform_2(%arg0: i32, %arg1: i32) -> (i32, i32, i32, i32) {
    %c0_i32 = arith.constant 0 : i32
    %c0_i32_0 = arith.constant 0 : i32
    %c0_i32_1 = arith.constant 0 : i32
    return %arg0, %arg1, %c0_i32, %c0_i32_0 : i32, i32, i32, i32
  }
  func.func @transform_3(%arg0: i32, %arg1: i32) -> (i32, i32, i32) {
    %c0_i32 = arith.constant 0 : i32
    %c0_i32_0 = arith.constant 0 : i32
    %c0_i32_1 = arith.constant 0 : i32
    return %arg0, %c0_i32, %c0_i32_0 : i32, i32, i32
  }
  func.func @transform_4(%arg0: i32, %arg1: i32) -> (i32, i32, i32) {
    %c0_i32 = arith.constant 0 : i32
    %c0_i32_0 = arith.constant 0 : i32
    %c0_i32_1 = arith.constant 0 : i32
    return %arg0, %c0_i32, %c0_i32_0 : i32, i32, i32
  }
}

</mosaic_0001>

<llo_original>
// kernel: conv_block_forward.3
$region0: #{conv_block_forward.3}
  #allocation0 [shape = 'u32[]', space=smem, size = 0x4, offset = 0x4, fixed_abs, tag = 'smem constant byte address 0x4 - core index']
  #allocation1 [shape = 'u32[144,128]{1,0:T(1,128)}', space=vmem, size = 0x12000, scoped, tag = 'internal scratch']
  %s0 = inlined_call_operand.vmem [shape: bf16[2,16,16,36], index: 0, kind: input, shape index: {}]
  %s1 = inlined_call_operand.vmem [shape: bf16[36,128], index: 1, kind: input, shape index: {}]
  %s2 = inlined_call_operand.vmem [shape: bf16[2,16,16,128], index: 2, kind: output, shape index: {0}]
  %s3 = inlined_call_operand.vmem [shape: f32[2,1,128], index: 3, kind: output, shape index: {1}]
  %s4 = inlined_call_operand.vmem [shape: f32[2,1,128], index: 4, kind: output, shape index: {2}]
  %5 = xla_tuple %s2, %s3, %s4
  %s6 = sld [smem:[#allocation0]]
  $region61: #{conv_block_forward.3} parent=0
    _
  %s8 = ssub.s32 1, %s6
  %s9 = scalar_select 0, %s8, %s6
  loop: start=0, step=1, limit=4
  $region2: #{conv_block_forward.3} parent=0 // loop_pre_header
    _
  $region3: #{conv_block_forward.3} parent=0 // loop_header
    %s11 = sphi 0, %s15
    %p12 = scmp.ge.s32.totalorder %s11, 4
    %s18 = sphi 0, %s30
    %s19 = sphi 0, %s26
    %s20 = sphi 0, %s18
    %s21 = sphi 0, %s19
    %s22 = sphi 0, %s20
    %s23 = sphi 0, %s21
    %s35 = sphi 0, %s37
    %s38 = sphi 0, %s35
    %s39 = sphi 0, %s38
    %s55 = sphi 0, %s39
    %s59 = sphi 0, %s59
    %s61 = sphi 0, %s59
    %s62 = sphi 0, %s61
    %s76 = sphi 0, %s62
    %s84 = sphi 0, %s86
    %s87 = sphi 0, %s84
    %s88 = sphi 0, %s87
    %s104 = sphi 0, %s88
    %s110 = sphi 0, %s112
    %s113 = sphi 0, %s110
    %s114 = sphi 0, %s113
    %s130 = sphi 0, %s114
    %s136 = sphi 0, %s138
    %s139 = sphi 0, %s136
    %s140 = sphi 0, %s139
    %s156 = sphi 0, %s140
  $region4: #{conv_block_forward.3} parent=0 // loop_header_branch
    %14 = sbr.rel (%p12) target = $region8
  $region5: #{conv_block_forward.3} parent=0 // loop_body
    %s16 = ssub.s32 %s11, 1
    %s17 = ssub.s32 %s11, 2
    %s24 = sadd.s32 1, %s19
    %p25 = scmp.ge.s32.totalorder %s24, 1
    %s26 = scalar_select %p25, 0, %s24
    %s27 = sadd.s32 1, %s18
    %s28 = scalar_select %p25, %s27, %s18
    %p29 = scmp.ge.s32.totalorder %s28, 2
    %s30 = scalar_select %p29, 0, %s28
    %s31 = ssub.s32 %s18, %s30
    %s32 = ssub.s32 %s19, %s26
    %s33 = sor.u32 %s31, %s32
    %p34 = scmp.eq.s32.totalorder %s33, 0
    %s36 = sadd.s32 %s35, 1
    %s37 = scalar_select %p34, %s35, %s36
    %p40 = pneg %p34
    %p41 = scmp.eq.s32.totalorder %s11, 1
    %p42 = por %p40, %p41
    %p43 = scmp.ne.s32.totalorder %s35, %s38
    %p44 = scmp.eq.s32.totalorder %s11, 0
    %p45 = por %p43, %p44
    %p46 = scmp.ne.s32.totalorder %s35, %s38
    %p47 = scmp.eq.s32.totalorder %s16, 1
    %p48 = por %p46, %p47
    %p49 = scmp.ne.s32.totalorder %s38, %s39
    %p50 = scmp.eq.s32.totalorder %s16, 0
    %p51 = por %p49, %p50
    %p52 = scmp.ne.s32.totalorder %s38, %s39
    %p53 = scmp.eq.s32.totalorder %s17, 1
    %p54 = por %p52, %p53
    %p56 = scmp.ne.s32.totalorder %s39, %s55
    %p57 = scmp.eq.s32.totalorder %s17, 0
    %p58 = por %p56, %p57
    %s60 = sadd.s32 %s59, 1
    %p63 = scmp.eq.s32.totalorder %s11, 1
    %p64 = scmp.ne.s32.totalorder %s59, %s61
    %p65 = scmp.eq.s32.totalorder %s11, 0
    %p66 = por %p64, %p65
    %p67 = scmp.ne.s32.totalorder %s59, %s61
    %p68 = scmp.eq.s32.totalorder %s16, 1
    %p69 = por %p67, %p68
    %p70 = scmp.ne.s32.totalorder %s61, %s62
    %p71 = scmp.eq.s32.totalorder %s16, 0
    %p72 = por %p70, %p71
    %p73 = scmp.ne.s32.totalorder %s61, %s62
    %p74 = scmp.eq.s32.totalorder %s17, 1
    %p75 = por %p73, %p74
    %p77 = scmp.ne.s32.totalorder %s62, %s76
    %p78 = scmp.eq.s32.totalorder %s17, 0
    %p79 = por %p77, %p78
    %s80 = ssub.s32 %s18, %s30
    %s81 = ssub.s32 %s19, %s26
    %s82 = sor.u32 %s80, %s81
    %p83 = scmp.eq.s32.totalorder %s82, 0
    %s85 = sadd.s32 %s84, 1
    %s86 = scalar_select %p83, %s84, %s85
    %p89 = pneg %p83
    %p90 = scmp.eq.s32.totalorder %s11, 1
    %p91 = por %p89, %p90
    %p92 = scmp.ne.s32.totalorder %s84, %s87
    %p93 = scmp.eq.s32.totalorder %s11, 0
    %p94 = por %p92, %p93
    %p95 = scmp.ne.s32.totalorder %s84, %s87
    %p96 = scmp.eq.s32.totalorder %s16, 1
    %p97 = por %p95, %p96
    %p98 = scmp.ne.s32.totalorder %s87, %s88
    %p99 = scmp.eq.s32.totalorder %s16, 0
    %p100 = por %p98, %p99
    %p101 = scmp.ne.s32.totalorder %s87, %s88
    %p102 = scmp.eq.s32.totalorder %s17, 1
    %p103 = por %p101, %p102
    %p105 = scmp.ne.s32.totalorder %s88, %s104
    %p106 = scmp.eq.s32.totalorder %s17, 0
    %p107 = por %p105, %p106
    %s108 = ssub.s32 %s18, %s30
    %p109 = scmp.eq.s32.totalorder %s108, 0
    %s111 = sadd.s32 %s110, 1
    %s112 = scalar_select %p109, %s110, %s111
    %p115 = pneg %p109
    %p116 = scmp.eq.s32.totalorder %s11, 1
    %p117 = por %p115, %p116
    %p118 = scmp.ne.s32.totalorder %s110, %s113
    %p119 = scmp.eq.s32.totalorder %s11, 0
    %p120 = por %p118, %p119
    %p121 = scmp.ne.s32.totalorder %s110, %s113
    %p122 = scmp.eq.s32.totalorder %s16, 1
    %p123 = por %p121, %p122
    %p124 = scmp.ne.s32.totalorder %s113, %s114
    %p125 = scmp.eq.s32.totalorder %s16, 0
    %p126 = por %p124, %p125
    %p127 = scmp.ne.s32.totalorder %s113, %s114
    %p128 = scmp.eq.s32.totalorder %s17, 1
    %p129 = por %p127, %p128
    %p131 = scmp.ne.s32.totalorder %s114, %s130
    %p132 = scmp.eq.s32.totalorder %s17, 0
    %p133 = por %p131, %p132
    %s134 = ssub.s32 %s18, %s30
    %p135 = scmp.eq.s32.totalorder %s134, 0
    %s137 = sadd.s32 %s136, 1
    %s138 = scalar_select %p135, %s136, %s137
    %p141 = pneg %p135
    %p142 = scmp.eq.s32.totalorder %s11, 1
    %p143 = por %p141, %p142
    %p144 = scmp.ne.s32.totalorder %s136, %s139
    %p145 = scmp.eq.s32.totalorder %s11, 0
    %p146 = por %p144, %p145
    %p147 = scmp.ne.s32.totalorder %s136, %s139
    %p148 = scmp.eq.s32.totalorder %s16, 1
    %p149 = por %p147, %p148
    %p150 = scmp.ne.s32.totalorder %s139, %s140
    %p151 = scmp.eq.s32.totalorder %s16, 0
    %p152 = por %p150, %p151
    %p153 = scmp.ne.s32.totalorder %s139, %s140
    %p154 = scmp.eq.s32.totalorder %s17, 1
    %p155 = por %p153, %p154
    %p157 = scmp.ne.s32.totalorder %s140, %s156
    %p158 = scmp.eq.s32.totalorder %s17, 0
    %p159 = por %p157, %p158
    %p160 = scmp.le.s32.totalorder 1, %s11
    %p161 = scmp.lt.s32.totalorder %s11, 3
    %p162 = pnand %p160, %p161
    %p163 = pneg %p162
    // Predicated region
    $region9: #{conv_block_forward.3} parent=5 // pred_check
      _
    $region10: #{conv_block_forward.3} parent=5 // pred_check_branch
      %165 = sbr.rel (%p162) target = $region12
    $region11: #{conv_block_forward.3} parent=5 // pred_region
      %s166 = ssub.s32 %s11, 1
      // Predicated region
      $region13: #{conv_block_forward.3} parent=11 // pred_check
        %p167 = pneg %p72
      $region14: #{conv_block_forward.3} parent=11 // pred_check_branch
        %169 = sbr.rel (%p167) target = $region16
      $region15: #{conv_block_forward.3} parent=11 // pred_region
        _
      $region16: #{conv_block_forward.3} parent=11 // pred_fallthru
        _
    $region12: #{conv_block_forward.3} parent=5 // pred_fallthru
      _
    %p170 = scmp.lt.s32.totalorder %s11, 2
    // Predicated region
    $region17: #{conv_block_forward.3} parent=5 // pred_check
      %p171 = pneg %p170
    $region18: #{conv_block_forward.3} parent=5 // pred_check_branch
      %173 = sbr.rel (%p171) target = $region20
    $region19: #{conv_block_forward.3} parent=5 // pred_region
      // Predicated region
      $region21: #{conv_block_forward.3} parent=19 // pred_check
        %p174 = pneg %p45
      $region22: #{conv_block_forward.3} parent=19 // pred_check_branch
        %176 = sbr.rel (%p174) target = $region24
      $region23: #{conv_block_forward.3} parent=19 // pred_region
        %s177 = smul.u32 16, %s19
        %p178 = scmp.lt.s32.totalorder %s18, 1
        %s179 = scalar_select %p178, %s18, 1
        %p180 = scmp.lt.s32.totalorder %s177, 15
        %s181 = scalar_select %p180, %s177, 15
        %s182 = smul.addr %s181, 2
        %s183 = smul.addr %s179, 32
        %s184 = sadd.s32 %s182, %s183
        %s185 = smul.addr %s184, 4
        %s186 = scalar_lea.vmem %s0, %s185
        %s187 = smul.u32 16, %s19
      $region24: #{conv_block_forward.3} parent=19 // pred_fallthru
        _
    $region20: #{conv_block_forward.3} parent=5 // pred_fallthru
      _
    %p188 = scmp.le.s32.totalorder 1, %s11
    %p189 = scmp.lt.s32.totalorder %s11, 3
    %p190 = pnand %p188, %p189
    %p191 = pneg %p190
    // Predicated region
    $region25: #{conv_block_forward.3} parent=5 // pred_check
      _
    $region26: #{conv_block_forward.3} parent=5 // pred_check_branch
      %193 = sbr.rel (%p190) target = $region28
    $region27: #{conv_block_forward.3} parent=5 // pred_region
      %s194 = ssub.s32 %s11, 1
      %s195 = smul.u32 16, %s21
      %p196 = scmp.lt.s32.totalorder %s20, 1
      %s197 = scalar_select %p196, %s20, 1
      %p198 = scmp.lt.s32.totalorder %s195, 15
      %s199 = scalar_select %p198, %s195, 15
      %s200 = smul.addr %s199, 2
      %s201 = smul.addr %s197, 32
      %s202 = sadd.s32 %s200, %s201
      %s203 = smul.addr %s202, 4
      %s204 = scalar_lea.vmem %s0, %s203
      %p205 = pneg %p51
      %p206 = pneg %p48
      %p207 = pneg %p72
      %p208 = pneg %p69
      %p209 = pneg %p100
      %p210 = pneg %p97
      %s211 = smul.u32 16, %s21
      %p212 = scmp.lt.s32.totalorder %s20, 1
      %s213 = scalar_select %p212, %s20, 1
      %p214 = scmp.lt.s32.totalorder %s211, 15
      %s215 = scalar_select %p214, %s211, 15
      %s216 = smul.addr %s215, 2
      %s217 = smul.addr %s213, 32
      %s218 = sadd.s32 %s216, %s217
      %s219 = smul.addr %s218, 4
      %s220 = scalar_lea.vmem %s2, %s219
      %p221 = pneg %p126
      %p222 = pneg %p123
      %p223 = scmp.lt.s32.totalorder %s20, 1
      %s224 = scalar_select %p223, %s20, 1
      %s225 = scalar_lea.vmem %s3, %s224
      %p226 = pneg %p152
      %p227 = pneg %p149
      %p228 = scmp.lt.s32.totalorder %s20, 1
      %s229 = scalar_select %p228, %s20, 1
      %s230 = scalar_lea.vmem %s4, %s229
      %s231 = smul.u32 16, %s21
      %p232 = scmp.lt.s32.totalorder %s20, 1
      %s233 = scalar_select %p232, %s20, 1
      %p234 = scmp.lt.s32.totalorder %s231, 15
      %s235 = scalar_select %p234, %s231, 15
      %s236 = smul.addr %s235, 2
      %s237 = smul.addr %s233, 32
      %s238 = sadd.s32 %s236, %s237
      %s239 = smul.addr %s238, 4
      %s240 = scalar_lea.vmem %s0, %s239
      %s241 = smul.u32 16, %s21
      %s242 = smul.u32 16, %s21
      %p243 = scmp.lt.s32.totalorder %s20, 1
      %s244 = scalar_select %p243, %s20, 1
      %p245 = scmp.lt.s32.totalorder %s242, 15
      %s246 = scalar_select %p245, %s242, 15
      %s247 = smul.addr %s246, 2
      %s248 = smul.addr %s244, 32
      %s249 = sadd.s32 %s247, %s248
      %s250 = smul.addr %s249, 4
      %s251 = scalar_lea.vmem %s2, %s250
      %s252 = smul.u32 16, %s21
      %p253 = scmp.lt.s32.totalorder %s20, 1
      %s254 = scalar_select %p253, %s20, 1
      %s255 = scalar_lea.vmem %s3, %s254
      %p256 = scmp.lt.s32.totalorder %s20, 1
      %s257 = scalar_select %p256, %s20, 1
      %s258 = scalar_lea.vmem %s4, %s257
      %v260 = vld [vmem:[%s240] sm:$0xf]
      %v261 = vld [vmem:[%s240 + $0x4] sm:$0xf]
      %v262 = vld [vmem:[%s240 + $0x8] sm:$0xf]
      %v263 = vld [vmem:[%s240 + $0xc] sm:$0xf]
      %v264 = vld [vmem:[%s240 + $0x10] sm:$0xf]
      %v265 = vld [vmem:[%s240 + $0x14] sm:$0xf]
      %v266 = vld [vmem:[%s240 + $0x18] sm:$0xf]
      %v267 = vld [vmem:[%s240 + $0x1c] sm:$0xf]
      %v268 = vld [vmem:[%s240 + $0x20] sm:$0xf]
      %v269 = vld [vmem:[%s240 + $0x24] sm:$0xf]
      %v270 = vld [vmem:[%s240 + $0x28] sm:$0xf]
      %v271 = vld [vmem:[%s240 + $0x2c] sm:$0xf]
      %v272 = vld [vmem:[%s240 + $0x30] sm:$0xf]
      %v273 = vld [vmem:[%s240 + $0x34] sm:$0xf]
      %v274 = vld [vmem:[%s240 + $0x38] sm:$0xf]
      %v275 = vld [vmem:[%s240 + $0x3c] sm:$0xf]
      %v276 = vld [vmem:[%s240 + $0x40] sm:$0xf]
      %v277 = vld [vmem:[%s240 + $0x44] sm:$0xf]
      %v278 = vld [vmem:[%s240 + $0x48] sm:$0xf]
      %v279 = vld [vmem:[%s240 + $0x4c] sm:$0xf]
      %v280 = vld [vmem:[%s240 + $0x50] sm:$0xf]
      %v281 = vld [vmem:[%s240 + $0x54] sm:$0xf]
      %v282 = vld [vmem:[%s240 + $0x58] sm:$0xf]
      %v283 = vld [vmem:[%s240 + $0x5c] sm:$0xf]
      %v284 = vld [vmem:[%s240 + $0x60] sm:$0xf]
      %v285 = vld [vmem:[%s240 + $0x64] sm:$0xf]
      %v286 = vld [vmem:[%s240 + $0x68] sm:$0xf]
      %v287 = vld [vmem:[%s240 + $0x6c] sm:$0xf]
      %v288 = vld [vmem:[%s240 + $0x70] sm:$0xf]
      %v289 = vld [vmem:[%s240 + $0x74] sm:$0xf]
      %v290 = vld [vmem:[%s240 + $0x78] sm:$0xf]
      %v291 = vld [vmem:[%s240 + $0x7c] sm:$0xf]
      %v292 = vld [vmem:[%s1] sm:$0xf]
      %v293 = vld [vmem:[%s1 + $0x4] sm:$0xf]
      %v294 = vld [vmem:[%s1 + $0x8] sm:$0xf]
      %v295 = vld [vmem:[%s1 + $0xc] sm:$0xf]
      %v296 = vld [vmem:[%s1 + $0x10] sm:$0x3]
      %v329 = vunpack.c.l.b16 %v260
      %v330 = vunpack.c.l.b16 %v261
      %v331 = vunpack.c.l.b16 %v262
      %v332 = vunpack.c.l.b16 %v263
      %v333 = vunpack.c.l.b16 %v264
      %v334 = vunpack.c.l.b16 %v265
      %v335 = vunpack.c.l.b16 %v266
      %v336 = vunpack.c.l.b16 %v267
      %v337 = vunpack.c.l.b16 %v268
      %v338 = vunpack.c.l.b16 %v269
      %v339 = vunpack.c.l.b16 %v270
      %v340 = vunpack.c.l.b16 %v271
      %v341 = vunpack.c.l.b16 %v272
      %v342 = vunpack.c.l.b16 %v273
      %v343 = vunpack.c.l.b16 %v274
      %v344 = vunpack.c.l.b16 %v275
      %v345 = vunpack.c.l.b16 %v276
      %v346 = vunpack.c.l.b16 %v277
      %v347 = vunpack.c.l.b16 %v278
      %v348 = vunpack.c.l.b16 %v279
      %v349 = vunpack.c.l.b16 %v280
      %v350 = vunpack.c.l.b16 %v281
      %v351 = vunpack.c.l.b16 %v282
      %v352 = vunpack.c.l.b16 %v283
      %v353 = vunpack.c.l.b16 %v284
      %v354 = vunpack.c.l.b16 %v285
      %v355 = vunpack.c.l.b16 %v286
      %v356 = vunpack.c.l.b16 %v287
      %v357 = vunpack.c.l.b16 %v288
      %v358 = vunpack.c.l.b16 %v289
      %v359 = vunpack.c.l.b16 %v290
      %v360 = vunpack.c.l.b16 %v291
      %v361 = vpack.c.b16 %v330, %v329
      %v362 = vpack.c.b16 %v332, %v331
      %v363 = vpack.c.b16 %v334, %v333
      %v364 = vpack.c.b16 %v336, %v335
      %v365 = vpack.c.b16 %v338, %v337
      %v366 = vpack.c.b16 %v340, %v339
      %v367 = vpack.c.b16 %v342, %v341
      %v368 = vpack.c.b16 %v344, %v343
      %v369 = vpack.c.b16 %v346, %v345
      %v370 = vpack.c.b16 %v348, %v347
      %v371 = vpack.c.b16 %v350, %v349
      %v372 = vpack.c.b16 %v352, %v351
      %v373 = vpack.c.b16 %v354, %v353
      %v374 = vpack.c.b16 %v356, %v355
      %v375 = vpack.c.b16 %v358, %v357
      %v376 = vpack.c.b16 %v360, %v359
      %v382 = vunpack.c.l.b16 %v292
      %v383 = vunpack.c.l.b16 %v293
      %v384 = vunpack.c.l.b16 %v294
      %v385 = vunpack.c.l.b16 %v295
      %v386 = vunpack.c.l.b16 %v296
      %v387 = vpack.c.b16 %v383, %v382
      %v388 = vpack.c.b16 %v385, %v384
      %v389 = vpack.c.b16 %v386, %v386
      %vm392 = vcmask 293888
      %v394 = vsel %vm392, %v361, 0
      %v397 = vsel %vm392, %v362, 0
      %v400 = vsel %vm392, %v363, 0
      %v403 = vsel %vm392, %v364, 0
      %v406 = vsel %vm392, %v365, 0
      %v409 = vsel %vm392, %v366, 0
      %v412 = vsel %vm392, %v367, 0
      %v415 = vsel %vm392, %v368, 0
      %v418 = vsel %vm392, %v369, 0
      %v421 = vsel %vm392, %v370, 0
      %v424 = vsel %vm392, %v371, 0
      %v427 = vsel %vm392, %v372, 0
      %v430 = vsel %vm392, %v373, 0
      %v433 = vsel %vm392, %v374, 0
      %v436 = vsel %vm392, %v375, 0
      %v439 = vsel %vm392, %v376, 0
      %vm441 = vcmask 1041408
      %v443 = vsel %vm441, %v389, 0
      %445 = vmatprep.subr.bf16.mxu0 0
      %446 = vmatpush1.bf16.msra.mxu0 %v387
      %447 = vmatprep.subr.bf16.mxu0 0
      %448 = vmatpush1.bf16.msra.mxu0 %v388
      %449 = vmatprep.subr.bf16.mxu0 0
      %450 = vmatpush1.bf16.msra.mxu0 %v443
      %451 = vmatprep.subr.bf16.mxu0 0
      %452 = vmatpush1.bf16.msra.mxu0 0
      %453 = vmatprep.subr.bf16.mxu0 0
      %454 = vmatpush1.bf16.msra.mxu0 0
      %455 = vmatprep.subr.bf16.mxu0 0
      %456 = vmatpush1.bf16.msra.mxu0 0
      %457 = vmatprep.subr.bf16.mxu0 0
      %458 = vmatpush1.bf16.msra.mxu0 0
      %459 = vmatprep.subr.bf16.mxu0 0
      %460 = vmatpush1.bf16.msra.mxu0 0
      %461 = vmatprep.subr.bf16.mxu0 0
      %462 = vmatpush1.bf16.msra.mxu0 0
      %463 = vmatprep.subr.bf16.mxu0 0
      %464 = vmatpush1.bf16.msra.mxu0 0
      %465 = vmatprep.subr.bf16.mxu0 0
      %466 = vmatpush1.bf16.msra.mxu0 0
      %467 = vmatprep.subr.bf16.mxu0 0
      %468 = vmatpush1.bf16.msra.mxu0 0
      %469 = vmatprep.subr.bf16.mxu0 0
      %470 = vmatpush1.bf16.msra.mxu0 0
      %471 = vmatprep.subr.bf16.mxu0 0
      %472 = vmatpush1.bf16.msra.mxu0 0
      %473 = vmatprep.subr.bf16.mxu0 0
      %474 = vmatpush1.bf16.msra.mxu0 0
      %475 = vmatprep.subr.bf16.mxu0 0
      %476 = vmatpush1.bf16.msra.mxu0 0
      %477 = vmatprep.mubr.bf16.mxu0 0
      %478 = vmatmul.mubr.bf16.gmra.mrb[0].mxu0 %v394
      %v479 = vpop.f32.mrb[0].mxu0
      %v480 = vadd.f32 0.0, %v479
      %v481 = vpop.f32.mrb[0].mxu0
      %v482 = vpop.f32.mrb[0].mxu0
      %v483 = vadd.f32 0.0, %v482
      %v484 = vpop.f32.mrb[0].mxu0
      %485 = vmatprep.mubr.bf16.mxu0 0
      %486 = vmatmul.mubr.bf16.gmra.mrb[0].mxu0 %v397
      %v487 = vpop.f32.mrb[0].mxu0
      %v488 = vadd.f32 0.0, %v487
      %v489 = vpop.f32.mrb[0].mxu0
      %v490 = vpop.f32.mrb[0].mxu0
      %v491 = vadd.f32 0.0, %v490
      %v492 = vpop.f32.mrb[0].mxu0
      %493 = vmatprep.mubr.bf16.mxu0 0
      %494 = vmatmul.mubr.bf16.gmra.mrb[0].mxu0 %v400
      %v495 = vpop.f32.mrb[0].mxu0
      %v496 = vadd.f32 0.0, %v495
      %v497 = vpop.f32.mrb[0].mxu0
      %v498 = vpop.f32.mrb[0].mxu0
      %v499 = vadd.f32 0.0, %v498
      %v500 = vpop.f32.mrb[0].mxu0
      %501 = vmatprep.mubr.bf16.mxu0 0
      %502 = vmatmul.mubr.bf16.gmra.mrb[0].mxu0 %v403
      %v503 = vpop.f32.mrb[0].mxu0
      %v504 = vadd.f32 0.0, %v503
      %v505 = vpop.f32.mrb[0].mxu0
      %v506 = vpop.f32.mrb[0].mxu0
      %v507 = vadd.f32 0.0, %v506
      %v508 = vpop.f32.mrb[0].mxu0
      %509 = vmatprep.mubr.bf16.mxu0 0
      %510 = vmatmul.mubr.bf16.gmra.mrb[0].mxu0 %v406
      %v511 = vpop.f32.mrb[0].mxu0
      %v512 = vadd.f32 0.0, %v511
      %v513 = vpop.f32.mrb[0].mxu0
      %v514 = vpop.f32.mrb[0].mxu0
      %v515 = vadd.f32 0.0, %v514
      %v516 = vpop.f32.mrb[0].mxu0
      %517 = vmatprep.mubr.bf16.mxu0 0
      %518 = vmatmul.mubr.bf16.gmra.mrb[0].mxu0 %v409
      %v519 = vpop.f32.mrb[0].mxu0
      %v520 = vadd.f32 0.0, %v519
      %v521 = vpop.f32.mrb[0].mxu0
      %v522 = vpop.f32.mrb[0].mxu0
      %v523 = vadd.f32 0.0, %v522
      %v524 = vpop.f32.mrb[0].mxu0
      %525 = vmatprep.mubr.bf16.mxu0 0
      %526 = vmatmul.mubr.bf16.gmra.mrb[0].mxu0 %v412
      %v527 = vpop.f32.mrb[0].mxu0
      %v528 = vadd.f32 0.0, %v527
      %v529 = vpop.f32.mrb[0].mxu0
      %v530 = vpop.f32.mrb[0].mxu0
      %v531 = vadd.f32 0.0, %v530
      %v532 = vpop.f32.mrb[0].mxu0
      %533 = vmatprep.mubr.bf16.mxu0 0
      %534 = vmatmul.mubr.bf16.gmra.mrb[0].mxu0 %v415
      %v535 = vpop.f32.mrb[0].mxu0
      %v536 = vadd.f32 0.0, %v535
      %v537 = vpop.f32.mrb[0].mxu0
      %v538 = vpop.f32.mrb[0].mxu0
      %v539 = vadd.f32 0.0, %v538
      %v540 = vpop.f32.mrb[0].mxu0
      %541 = vmatprep.mubr.bf16.mxu0 0
      %542 = vmatmul.mubr.bf16.gmra.mrb[0].mxu0 %v418
      %v543 = vpop.f32.mrb[0].mxu0
      %v544 = vadd.f32 0.0, %v543
      %v545 = vpop.f32.mrb[0].mxu0
      %v546 = vpop.f32.mrb[0].mxu0
      %v547 = vadd.f32 0.0, %v546
      %v548 = vpop.f32.mrb[0].mxu0
      %549 = vmatprep.mubr.bf16.mxu0 0
      %550 = vmatmul.mubr.bf16.gmra.mrb[0].mxu0 %v421
      %v551 = vpop.f32.mrb[0].mxu0
      %v552 = vadd.f32 0.0, %v551
      %v553 = vpop.f32.mrb[0].mxu0
      %v554 = vpop.f32.mrb[0].mxu0
      %v555 = vadd.f32 0.0, %v554
      %v556 = vpop.f32.mrb[0].mxu0
      %557 = vmatprep.mubr.bf16.mxu0 0
      %558 = vmatmul.mubr.bf16.gmra.mrb[0].mxu0 %v424
      %v559 = vpop.f32.mrb[0].mxu0
      %v560 = vadd.f32 0.0, %v559
      %v561 = vpop.f32.mrb[0].mxu0
      %v562 = vpop.f32.mrb[0].mxu0
      %v563 = vadd.f32 0.0, %v562
      %v564 = vpop.f32.mrb[0].mxu0
      %565 = vmatprep.mubr.bf16.mxu0 0
      %566 = vmatmul.mubr.bf16.gmra.mrb[0].mxu0 %v427
      %v567 = vpop.f32.mrb[0].mxu0
      %v568 = vadd.f32 0.0, %v567
      %v569 = vpop.f32.mrb[0].mxu0
      %v570 = vpop.f32.mrb[0].mxu0
      %v571 = vadd.f32 0.0, %v570
      %v572 = vpop.f32.mrb[0].mxu0
      %573 = vmatprep.mubr.bf16.mxu0 0
      %574 = vmatmul.mubr.bf16.gmra.mrb[0].mxu0 %v430
      %v575 = vpop.f32.mrb[0].mxu0
      %v576 = vadd.f32 0.0, %v575
      %v577 = vpop.f32.mrb[0].mxu0
      %v578 = vpop.f32.mrb[0].mxu0
      %v579 = vadd.f32 0.0, %v578
      %v580 = vpop.f32.mrb[0].mxu0
      %581 = vmatprep.mubr.bf16.mxu0 0
      %582 = vmatmul.mubr.bf16.gmra.mrb[0].mxu0 %v433
      %v583 = vpop.f32.mrb[0].mxu0
      %v584 = vadd.f32 0.0, %v583
      %v585 = vpop.f32.mrb[0].mxu0
      %v586 = vpop.f32.mrb[0].mxu0
      %v587 = vadd.f32 0.0, %v586
      %v588 = vpop.f32.mrb[0].mxu0
      %589 = vmatprep.mubr.bf16.mxu0 0
      %590 = vmatmul.mubr.bf16.gmra.mrb[0].mxu0 %v436
      %v591 = vpop.f32.mrb[0].mxu0
      %v592 = vadd.f32 0.0, %v591
      %v593 = vpop.f32.mrb[0].mxu0
      %v594 = vpop.f32.mrb[0].mxu0
      %v595 = vadd.f32 0.0, %v594
      %v596 = vpop.f32.mrb[0].mxu0
      %597 = vmatprep.mubr.bf16.mxu0 0
      %598 = vmatmul.mubr.bf16.gmra.mrb[0].mxu0 %v439
      %v599 = vpop.f32.mrb[0].mxu0
      %v600 = vadd.f32 0.0, %v599
      %v601 = vpop.f32.mrb[0].mxu0
      %v602 = vpop.f32.mrb[0].mxu0
      %v603 = vadd.f32 0.0, %v602
      %v604 = vpop.f32.mrb[0].mxu0
      %605 = vdwg.mxu0
      %p606 = scmp.eq.s32.totalorder %s21, 0
      // Predicated region
      $region29: #{conv_block_forward.3} parent=27 // pred_check
        %p607 = pneg %p606
      $region30: #{conv_block_forward.3} parent=27 // pred_check_branch
        %609 = sbr.rel (%p607) target = $region32
      $region31: #{conv_block_forward.3} parent=27 // pred_region
        %610 = vst [vmem:[%s255] sm:$0x1] 0.0
        %611 = vst [vmem:[%s258] sm:$0x1] 0.0
      $region32: #{conv_block_forward.3} parent=27 // pred_fallthru
        _
      %v612 = vld [vmem:[%s255] sm:$0x1]
      %v613 = vadd.f32 %v480, %v483
      %v614 = vadd.f32 %v613, %v488
      %v615 = vadd.f32 %v614, %v491
      %v616 = vadd.f32 %v615, %v496
      %v617 = vadd.f32 %v616, %v499
      %v618 = vadd.f32 %v617, %v504
      %v619 = vadd.f32 %v618, %v507
      %v620 = vadd.f32 %v619, %v512
      %v621 = vadd.f32 %v620, %v515
      %v622 = vadd.f32 %v621, %v520
      %v623 = vadd.f32 %v622, %v523
      %v624 = vadd.f32 %v623, %v528
      %v625 = vadd.f32 %v624, %v531
      %v626 = vadd.f32 %v625, %v536
      %v627 = vadd.f32 %v626, %v539
      %v628 = vadd.f32 %v627, %v544
      %v629 = vadd.f32 %v628, %v547
      %v630 = vadd.f32 %v629, %v552
      %v631 = vadd.f32 %v630, %v555
      %v632 = vadd.f32 %v631, %v560
      %v633 = vadd.f32 %v632, %v563
      %v634 = vadd.f32 %v633, %v568
      %v635 = vadd.f32 %v634, %v571
      %v636 = vadd.f32 %v635, %v576
      %v637 = vadd.f32 %v636, %v579
      %v638 = vadd.f32 %v637, %v584
      %v639 = vadd.f32 %v638, %v587
      %v640 = vadd.f32 %v639, %v592
      %v641 = vadd.f32 %v640, %v595
      %v642 = vadd.f32 %v641, %v600
      %v643 = vadd.f32 %v642, %v603
      %v644 = vrot.slane %v643, 4
      %v645 = vadd.f32 %v643, %v644
      %v646 = vrot.slane %v645, 2
      %v647 = vadd.f32 %v645, %v646
      %v648 = vrot.slane %v647, 1
      %v649 = vadd.f32 %v647, %v648
      %v650 = vadd.f32 %v612, %v649
      %651 = vst [vmem:[%s255] sm:$0x1] %v650
      %v652 = vld [vmem:[%s258] sm:$0x1]
      %v653 = vmul.f32 %v480, %v480
      %v654 = vmul.f32 %v483, %v483
      %v655 = vmul.f32 %v488, %v488
      %v656 = vmul.f32 %v491, %v491
      %v657 = vmul.f32 %v496, %v496
      %v658 = vmul.f32 %v499, %v499
      %v659 = vmul.f32 %v504, %v504
      %v660 = vmul.f32 %v507, %v507
      %v661 = vmul.f32 %v512, %v512
      %v662 = vmul.f32 %v515, %v515
      %v663 = vmul.f32 %v520, %v520
      %v664 = vmul.f32 %v523, %v523
      %v665 = vmul.f32 %v528, %v528
      %v666 = vmul.f32 %v531, %v531
      %v667 = vmul.f32 %v536, %v536
      %v668 = vmul.f32 %v539, %v539
      %v669 = vmul.f32 %v544, %v544
      %v670 = vmul.f32 %v547, %v547
      %v671 = vmul.f32 %v552, %v552
      %v672 = vmul.f32 %v555, %v555
      %v673 = vmul.f32 %v560, %v560
      %v674 = vmul.f32 %v563, %v563
      %v675 = vmul.f32 %v568, %v568
      %v676 = vmul.f32 %v571, %v571
      %v677 = vmul.f32 %v576, %v576
      %v678 = vmul.f32 %v579, %v579
      %v679 = vmul.f32 %v584, %v584
      %v680 = vmul.f32 %v587, %v587
      %v681 = vmul.f32 %v592, %v592
      %v682 = vmul.f32 %v595, %v595
      %v683 = vmul.f32 %v600, %v600
      %v684 = vmul.f32 %v603, %v603
      %v685 = vadd.f32 %v653, %v654
      %v686 = vadd.f32 %v685, %v655
      %v687 = vadd.f32 %v686, %v656
      %v688 = vadd.f32 %v687, %v657
      %v689 = vadd.f32 %v688, %v658
      %v690 = vadd.f32 %v689, %v659
      %v691 = vadd.f32 %v690, %v660
      %v692 = vadd.f32 %v691, %v661
      %v693 = vadd.f32 %v692, %v662
      %v694 = vadd.f32 %v693, %v663
      %v695 = vadd.f32 %v694, %v664
      %v696 = vadd.f32 %v695, %v665
      %v697 = vadd.f32 %v696, %v666
      %v698 = vadd.f32 %v697, %v667
      %v699 = vadd.f32 %v698, %v668
      %v700 = vadd.f32 %v699, %v669
      %v701 = vadd.f32 %v700, %v670
      %v702 = vadd.f32 %v701, %v671
      %v703 = vadd.f32 %v702, %v672
      %v704 = vadd.f32 %v703, %v673
      %v705 = vadd.f32 %v704, %v674
      %v706 = vadd.f32 %v705, %v675
      %v707 = vadd.f32 %v706, %v676
      %v708 = vadd.f32 %v707, %v677
      %v709 = vadd.f32 %v708, %v678
      %v710 = vadd.f32 %v709, %v679
      %v711 = vadd.f32 %v710, %v680
      %v712 = vadd.f32 %v711, %v681
      %v713 = vadd.f32 %v712, %v682
      %v714 = vadd.f32 %v713, %v683
      %v715 = vadd.f32 %v714, %v684
      %v716 = vrot.slane %v715, 4
      %v717 = vadd.f32 %v715, %v716
      %v718 = vrot.slane %v717, 2
      %v719 = vadd.f32 %v717, %v718
      %v720 = vrot.slane %v719, 1
      %v721 = vadd.f32 %v719, %v720
      %v722 = vadd.f32 %v652, %v721
      %723 = vst [vmem:[%s258] sm:$0x1] %v722
      %v724 = vpack.c.bf16 %v483, %v480
      %v725 = vpack.c.bf16 %v491, %v488
      %v726 = vpack.c.bf16 %v499, %v496
      %v727 = vpack.c.bf16 %v507, %v504
      %v728 = vpack.c.bf16 %v515, %v512
      %v729 = vpack.c.bf16 %v523, %v520
      %v730 = vpack.c.bf16 %v531, %v528
      %v731 = vpack.c.bf16 %v539, %v536
      %v732 = vpack.c.bf16 %v547, %v544
      %v733 = vpack.c.bf16 %v555, %v552
      %v734 = vpack.c.bf16 %v563, %v560
      %v735 = vpack.c.bf16 %v571, %v568
      %v736 = vpack.c.bf16 %v579, %v576
      %v737 = vpack.c.bf16 %v587, %v584
      %v738 = vpack.c.bf16 %v595, %v592
      %v739 = vpack.c.bf16 %v603, %v600
      %v756 = vunpack.c.l.b16 %v724
      %v757 = vunpack.c.h.b16 %v724
      %v758 = vunpack.c.l.b16 %v725
      %v759 = vunpack.c.h.b16 %v725
      %v760 = vunpack.c.l.b16 %v726
      %v761 = vunpack.c.h.b16 %v726
      %v762 = vunpack.c.l.b16 %v727
      %v763 = vunpack.c.h.b16 %v727
      %v764 = vunpack.c.l.b16 %v728
      %v765 = vunpack.c.h.b16 %v728
      %v766 = vunpack.c.l.b16 %v729
      %v767 = vunpack.c.h.b16 %v729
      %v768 = vunpack.c.l.b16 %v730
      %v769 = vunpack.c.h.b16 %v730
      %v770 = vunpack.c.l.b16 %v731
      %v771 = vunpack.c.h.b16 %v731
      %v772 = vunpack.c.l.b16 %v732
      %v773 = vunpack.c.h.b16 %v732
      %v774 = vunpack.c.l.b16 %v733
      %v775 = vunpack.c.h.b16 %v733
      %v776 = vunpack.c.l.b16 %v734
      %v777 = vunpack.c.h.b16 %v734
      %v778 = vunpack.c.l.b16 %v735
      %v779 = vunpack.c.h.b16 %v735
      %v780 = vunpack.c.l.b16 %v736
      %v781 = vunpack.c.h.b16 %v736
      %v782 = vunpack.c.l.b16 %v737
      %v783 = vunpack.c.h.b16 %v737
      %v784 = vunpack.c.l.b16 %v738
      %v785 = vunpack.c.h.b16 %v738
      %v786 = vunpack.c.l.b16 %v739
      %v787 = vunpack.c.h.b16 %v739
      %v788 = vpack.c.b16 %v756, %v756
      %v789 = vpack.c.b16 %v757, %v757
      %v790 = vpack.c.b16 %v758, %v758
      %v791 = vpack.c.b16 %v759, %v759
      %v792 = vpack.c.b16 %v760, %v760
      %v793 = vpack.c.b16 %v761, %v761
      %v794 = vpack.c.b16 %v762, %v762
      %v795 = vpack.c.b16 %v763, %v763
      %v796 = vpack.c.b16 %v764, %v764
      %v797 = vpack.c.b16 %v765, %v765
      %v798 = vpack.c.b16 %v766, %v766
      %v799 = vpack.c.b16 %v767, %v767
      %v800 = vpack.c.b16 %v768, %v768
      %v801 = vpack.c.b16 %v769, %v769
      %v802 = vpack.c.b16 %v770, %v770
      %v803 = vpack.c.b16 %v771, %v771
      %v804 = vpack.c.b16 %v772, %v772
      %v805 = vpack.c.b16 %v773, %v773
      %v806 = vpack.c.b16 %v774, %v774
      %v807 = vpack.c.b16 %v775, %v775
      %v808 = vpack.c.b16 %v776, %v776
      %v809 = vpack.c.b16 %v777, %v777
      %v810 = vpack.c.b16 %v778, %v778
      %v811 = vpack.c.b16 %v779, %v779
      %v812 = vpack.c.b16 %v780, %v780
      %v813 = vpack.c.b16 %v781, %v781
      %v814 = vpack.c.b16 %v782, %v782
      %v815 = vpack.c.b16 %v783, %v783
      %v816 = vpack.c.b16 %v784, %v784
      %v817 = vpack.c.b16 %v785, %v785
      %v818 = vpack.c.b16 %v786, %v786
      %v819 = vpack.c.b16 %v787, %v787
      %852 = vst [vmem:[%s251] sm:$0xf] %v788
      %853 = vst [vmem:[%s251 + $0x4] sm:$0xf] %v789
      %854 = vst [vmem:[%s251 + $0x8] sm:$0xf] %v790
      %855 = vst [vmem:[%s251 + $0xc] sm:$0xf] %v791
      %856 = vst [vmem:[%s251 + $0x10] sm:$0xf] %v792
      %857 = vst [vmem:[%s251 + $0x14] sm:$0xf] %v793
      %858 = vst [vmem:[%s251 + $0x18] sm:$0xf] %v794
      %859 = vst [vmem:[%s251 + $0x1c] sm:$0xf] %v795
      %860 = vst [vmem:[%s251 + $0x20] sm:$0xf] %v796
      %861 = vst [vmem:[%s251 + $0x24] sm:$0xf] %v797
      %862 = vst [vmem:[%s251 + $0x28] sm:$0xf] %v798
      %863 = vst [vmem:[%s251 + $0x2c] sm:$0xf] %v799
      %864 = vst [vmem:[%s251 + $0x30] sm:$0xf] %v800
      %865 = vst [vmem:[%s251 + $0x34] sm:$0xf] %v801
      %866 = vst [vmem:[%s251 + $0x38] sm:$0xf] %v802
      %867 = vst [vmem:[%s251 + $0x3c] sm:$0xf] %v803
      %868 = vst [vmem:[%s251 + $0x40] sm:$0xf] %v804
      %869 = vst [vmem:[%s251 + $0x44] sm:$0xf] %v805
      %870 = vst [vmem:[%s251 + $0x48] sm:$0xf] %v806
      %871 = vst [vmem:[%s251 + $0x4c] sm:$0xf] %v807
      %872 = vst [vmem:[%s251 + $0x50] sm:$0xf] %v808
      %873 = vst [vmem:[%s251 + $0x54] sm:$0xf] %v809
      %874 = vst [vmem:[%s251 + $0x58] sm:$0xf] %v810
      %875 = vst [vmem:[%s251 + $0x5c] sm:$0xf] %v811
      %876 = vst [vmem:[%s251 + $0x60] sm:$0xf] %v812
      %877 = vst [vmem:[%s251 + $0x64] sm:$0xf] %v813
      %878 = vst [vmem:[%s251 + $0x68] sm:$0xf] %v814
      %879 = vst [vmem:[%s251 + $0x6c] sm:$0xf] %v815
      %880 = vst [vmem:[%s251 + $0x70] sm:$0xf] %v816
      %881 = vst [vmem:[%s251 + $0x74] sm:$0xf] %v817
      %882 = vst [vmem:[%s251 + $0x78] sm:$0xf] %v818
      %883 = vst [vmem:[%s251 + $0x7c] sm:$0xf] %v819
      %s884 = smul.u32 16, %s21
      %p885 = scmp.lt.s32.totalorder %s20, 1
      %s886 = scalar_select %p885, %s20, 1
      %p887 = scmp.lt.s32.totalorder %s884, 15
      %s888 = scalar_select %p887, %s884, 15
      %s889 = smul.addr %s888, 2
      %s890 = smul.addr %s886, 32
      %s891 = sadd.s32 %s889, %s890
      %s892 = smul.addr %s891, 4
      %s893 = scalar_lea.vmem %s2, %s892
      %p894 = scmp.lt.s32.totalorder %s20, 1
      %s895 = scalar_select %p894, %s20, 1
      %s896 = scalar_lea.vmem %s3, %s895
      %p897 = scmp.lt.s32.totalorder %s20, 1
      %s898 = scalar_select %p897, %s20, 1
      %s899 = scalar_lea.vmem %s4, %s898
      // Predicated region
      $region33: #{conv_block_forward.3} parent=27 // pred_check
        %p900 = pneg %p97
      $region34: #{conv_block_forward.3} parent=27 // pred_check_branch
        %902 = sbr.rel (%p900) target = $region36
      $region35: #{conv_block_forward.3} parent=27 // pred_region
        %s903 = smul.u32 16, %s21
      $region36: #{conv_block_forward.3} parent=27 // pred_fallthru
        _
      // Predicated region
      $region37: #{conv_block_forward.3} parent=27 // pred_check
        %p904 = pneg %p123
      $region38: #{conv_block_forward.3} parent=27 // pred_check_branch
        %906 = sbr.rel (%p904) target = $region40
      $region39: #{conv_block_forward.3} parent=27 // pred_region
        _
      $region40: #{conv_block_forward.3} parent=27 // pred_fallthru
        _
      // Predicated region
      $region41: #{conv_block_forward.3} parent=27 // pred_check
        %p907 = pneg %p149
      $region42: #{conv_block_forward.3} parent=27 // pred_check_branch
        %909 = sbr.rel (%p907) target = $region44
      $region43: #{conv_block_forward.3} parent=27 // pred_region
        _
      $region44: #{conv_block_forward.3} parent=27 // pred_fallthru
        _
    $region28: #{conv_block_forward.3} parent=5 // pred_fallthru
      _
    %p910 = scmp.le.s32.totalorder 2, %s11
    // Predicated region
    $region45: #{conv_block_forward.3} parent=5 // pred_check
      %p911 = pneg %p910
    $region46: #{conv_block_forward.3} parent=5 // pred_check_branch
      %913 = sbr.rel (%p911) target = $region48
    $region47: #{conv_block_forward.3} parent=5 // pred_region
      %s914 = ssub.s32 %s11, 2
      // Predicated region
      $region49: #{conv_block_forward.3} parent=47 // pred_check
        %p915 = pneg %p103
      $region50: #{conv_block_forward.3} parent=47 // pred_check_branch
        %917 = sbr.rel (%p915) target = $region52
      $region51: #{conv_block_forward.3} parent=47 // pred_region
        %s918 = smul.u32 16, %s23
        %p919 = scmp.lt.s32.totalorder %s22, 1
        %s920 = scalar_select %p919, %s22, 1
        %p921 = scmp.lt.s32.totalorder %s918, 15
        %s922 = scalar_select %p921, %s918, 15
        %s923 = smul.addr %s922, 2
        %s924 = smul.addr %s920, 32
        %s925 = sadd.s32 %s923, %s924
        %s926 = smul.addr %s925, 4
        %s927 = scalar_lea.vmem %s2, %s926
      $region52: #{conv_block_forward.3} parent=47 // pred_fallthru
        _
      // Predicated region
      $region53: #{conv_block_forward.3} parent=47 // pred_check
        %p928 = pneg %p129
      $region54: #{conv_block_forward.3} parent=47 // pred_check_branch
        %930 = sbr.rel (%p928) target = $region56
      $region55: #{conv_block_forward.3} parent=47 // pred_region
        %p931 = scmp.lt.s32.totalorder %s22, 1
        %s932 = scalar_select %p931, %s22, 1
        %s933 = scalar_lea.vmem %s3, %s932
      $region56: #{conv_block_forward.3} parent=47 // pred_fallthru
        _
      // Predicated region
      $region57: #{conv_block_forward.3} parent=47 // pred_check
        %p934 = pneg %p155
      $region58: #{conv_block_forward.3} parent=47 // pred_check_branch
        %936 = sbr.rel (%p934) target = $region60
      $region59: #{conv_block_forward.3} parent=47 // pred_region
        %p937 = scmp.lt.s32.totalorder %s22, 1
        %s938 = scalar_select %p937, %s22, 1
        %s939 = scalar_lea.vmem %s4, %s938
      $region60: #{conv_block_forward.3} parent=47 // pred_fallthru
        _
    $region48: #{conv_block_forward.3} parent=5 // pred_fallthru
      _
  $region6: #{conv_block_forward.3} parent=0 // loop_footer
    %s15 = sadd.s32 1, %s11
  $region7: #{conv_block_forward.3} parent=0 // loop_footer_branch
    %10 = sbr.rel target = $region3
  $region8: #{conv_block_forward.3} parent=0 // loop_exit
    _

// kernel: conv_block_forward.5
$region0: #{conv_block_forward.5}
  #allocation0 [shape = 'u32[]', space=smem, size = 0x4, offset = 0x4, fixed_abs, tag = 'smem constant byte address 0x4 - core index']
  #allocation1 [shape = 'u32[144,128]{1,0:T(1,128)}', space=vmem, size = 0x12000, scoped, tag = 'internal scratch']
  %s0 = inlined_call_operand.vmem [shape: f32[128,128], index: 0, kind: input, shape index: {}]
  %s1 = inlined_call_operand.vmem [shape: f32[1,128], index: 1, kind: input, shape index: {}]
  %s2 = inlined_call_operand.vmem [shape: f32[1,128], index: 2, kind: input, shape index: {}]
  %s3 = inlined_call_operand.hbm [shape: f32[128,8], index: 3, kind: output, shape index: {}]
  %s4 = sld [smem:[#allocation0]]
  $region22: #{conv_block_forward.5} parent=0
    _
  %s6 = ssub.s32 1, %s4
  %s7 = scalar_select 0, %s6, %s4
  $region1: #{conv_block_forward.5} parent=0
    #allocation2 [shape = 'u8[65536]{0}', space=vmem, size = 0x10000, scoped, tag = 'output window, operand 0, single buffered']
    #allocation3 [shape = 's32[1]{0}', space=sflag, size = 0x4, scoped, tag = 'scoped memory for conv_block_forward.5']
    %8 = vsyncpa [#allocation3], 0
    // Predicated region
    $region2: #{conv_block_forward.5} parent=1 // pred_check
      _
    $region3: #{conv_block_forward.5} parent=1 // pred_check_branch
      %10 = sbr.rel (0) target = $region5
    $region4: #{conv_block_forward.5} parent=1 // pred_region
      _
    $region5: #{conv_block_forward.5} parent=1 // pred_fallthru
      _
    // Predicated region
    $region6: #{conv_block_forward.5} parent=1 // pred_check
      _
    $region7: #{conv_block_forward.5} parent=1 // pred_check_branch
      %12 = sbr.rel (0) target = $region9
    $region8: #{conv_block_forward.5} parent=1 // pred_region
      _
    $region9: #{conv_block_forward.5} parent=1 // pred_fallthru
      _
    // Predicated region
    $region10: #{conv_block_forward.5} parent=1 // pred_check
      _
    $region11: #{conv_block_forward.5} parent=1 // pred_check_branch
      %14 = sbr.rel (0) target = $region13
    $region12: #{conv_block_forward.5} parent=1 // pred_region
      _
    $region13: #{conv_block_forward.5} parent=1 // pred_fallthru
      _
    %v15 = vld [vmem:[%s0] sm:$0xff]
    %v16 = vld [vmem:[%s0 + $0x8] sm:$0xff]
    %v17 = vld [vmem:[%s0 + $0x10] sm:$0xff]
    %v18 = vld [vmem:[%s0 + $0x18] sm:$0xff]
    %v19 = vld [vmem:[%s0 + $0x20] sm:$0xff]
    %v20 = vld [vmem:[%s0 + $0x28] sm:$0xff]
    %v21 = vld [vmem:[%s0 + $0x30] sm:$0xff]
    %v22 = vld [vmem:[%s0 + $0x38] sm:$0xff]
    %v23 = vld [vmem:[%s0 + $0x40] sm:$0xff]
    %v24 = vld [vmem:[%s0 + $0x48] sm:$0xff]
    %v25 = vld [vmem:[%s0 + $0x50] sm:$0xff]
    %v26 = vld [vmem:[%s0 + $0x58] sm:$0xff]
    %v27 = vld [vmem:[%s0 + $0x60] sm:$0xff]
    %v28 = vld [vmem:[%s0 + $0x68] sm:$0xff]
    %v29 = vld [vmem:[%s0 + $0x70] sm:$0xff]
    %v30 = vld [vmem:[%s0 + $0x78] sm:$0xff]
    %v31 = vld [vmem:[%s1] sm:$0x1]
    %v33 = vlaneseq
    %v34 = vshrl.u32 %v33, 7
    %v35 = vsub.s32 0, %v34
    %v36 = vrot.slane %v31, %v35
    %v38 = vmul.f32 %v15, %v36
    %v39 = vmul.f32 %v16, %v36
    %v40 = vmul.f32 %v17, %v36
    %v41 = vmul.f32 %v18, %v36
    %v42 = vmul.f32 %v19, %v36
    %v43 = vmul.f32 %v20, %v36
    %v44 = vmul.f32 %v21, %v36
    %v45 = vmul.f32 %v22, %v36
    %v46 = vmul.f32 %v23, %v36
    %v47 = vmul.f32 %v24, %v36
    %v48 = vmul.f32 %v25, %v36
    %v49 = vmul.f32 %v26, %v36
    %v50 = vmul.f32 %v27, %v36
    %v51 = vmul.f32 %v28, %v36
    %v52 = vmul.f32 %v29, %v36
    %v53 = vmul.f32 %v30, %v36
    %v54 = vld [vmem:[%s2] sm:$0x1]
    %v56 = vlaneseq
    %v57 = vshrl.u32 %v56, 7
    %v58 = vsub.s32 0, %v57
    %v59 = vrot.slane %v54, %v58
    %v61 = vadd.f32 %v38, %v59
    %v62 = vadd.f32 %v39, %v59
    %v63 = vadd.f32 %v40, %v59
    %v64 = vadd.f32 %v41, %v59
    %v65 = vadd.f32 %v42, %v59
    %v66 = vadd.f32 %v43, %v59
    %v67 = vadd.f32 %v44, %v59
    %v68 = vadd.f32 %v45, %v59
    %v69 = vadd.f32 %v46, %v59
    %v70 = vadd.f32 %v47, %v59
    %v71 = vadd.f32 %v48, %v59
    %v72 = vadd.f32 %v49, %v59
    %v73 = vadd.f32 %v50, %v59
    %v74 = vadd.f32 %v51, %v59
    %v75 = vadd.f32 %v52, %v59
    %v76 = vadd.f32 %v53, %v59
    %v77 = vmul.f32 %v61, 0.2
    %v78 = vmul.f32 %v62, 0.2
    %v79 = vmul.f32 %v63, 0.2
    %v80 = vmul.f32 %v64, 0.2
    %v81 = vmul.f32 %v65, 0.2
    %v82 = vmul.f32 %v66, 0.2
    %v83 = vmul.f32 %v67, 0.2
    %v84 = vmul.f32 %v68, 0.2
    %v85 = vmul.f32 %v69, 0.2
    %v86 = vmul.f32 %v70, 0.2
    %v87 = vmul.f32 %v71, 0.2
    %v88 = vmul.f32 %v72, 0.2
    %v89 = vmul.f32 %v73, 0.2
    %v90 = vmul.f32 %v74, 0.2
    %v91 = vmul.f32 %v75, 0.2
    %v92 = vmul.f32 %v76, 0.2
    %v93 = vmax.f32 %v61, %v77
    %v94 = vmax.f32 %v62, %v78
    %v95 = vmax.f32 %v63, %v79
    %v96 = vmax.f32 %v64, %v80
    %v97 = vmax.f32 %v65, %v81
    %v98 = vmax.f32 %v66, %v82
    %v99 = vmax.f32 %v67, %v83
    %v100 = vmax.f32 %v68, %v84
    %v101 = vmax.f32 %v69, %v85
    %v102 = vmax.f32 %v70, %v86
    %v103 = vmax.f32 %v71, %v87
    %v104 = vmax.f32 %v72, %v88
    %v105 = vmax.f32 %v73, %v89
    %v106 = vmax.f32 %v74, %v90
    %v107 = vmax.f32 %v75, %v91
    %v108 = vmax.f32 %v76, %v92
    %vm109 = vcmask 64512
    %110 = vst.msk [vmem:[#allocation2] sm:$0xff] %vm109, %v93
    %111 = vst.msk [vmem:[#allocation2 + $0x8] sm:$0xff] %vm109, %v94
    %112 = vst.msk [vmem:[#allocation2 + $0x10] sm:$0xff] %vm109, %v95
    %113 = vst.msk [vmem:[#allocation2 + $0x18] sm:$0xff] %vm109, %v96
    %114 = vst.msk [vmem:[#allocation2 + $0x20] sm:$0xff] %vm109, %v97
    %115 = vst.msk [vmem:[#allocation2 + $0x28] sm:$0xff] %vm109, %v98
    %116 = vst.msk [vmem:[#allocation2 + $0x30] sm:$0xff] %vm109, %v99
    %117 = vst.msk [vmem:[#allocation2 + $0x38] sm:$0xff] %vm109, %v100
    %118 = vst.msk [vmem:[#allocation2 + $0x40] sm:$0xff] %vm109, %v101
    %119 = vst.msk [vmem:[#allocation2 + $0x48] sm:$0xff] %vm109, %v102
    %120 = vst.msk [vmem:[#allocation2 + $0x50] sm:$0xff] %vm109, %v103
    %121 = vst.msk [vmem:[#allocation2 + $0x58] sm:$0xff] %vm109, %v104
    %122 = vst.msk [vmem:[#allocation2 + $0x60] sm:$0xff] %vm109, %v105
    %123 = vst.msk [vmem:[#allocation2 + $0x68] sm:$0xff] %vm109, %v106
    %124 = vst.msk [vmem:[#allocation2 + $0x70] sm:$0xff] %vm109, %v107
    %125 = vst.msk [vmem:[#allocation2 + $0x78] sm:$0xff] %vm109, %v108
    // Predicated region
    $region14: #{conv_block_forward.5} parent=1 // pred_check
      _
    $region15: #{conv_block_forward.5} parent=1 // pred_check_branch
      %127 = sbr.rel (0) target = $region17
    $region16: #{conv_block_forward.5} parent=1 // pred_region
      %s129 = ssub.s32 2048, 2048
      %130 = vsyncadd [#allocation3], %s129
      %s131 = sshll.u32 [#allocation2], 4
      %s132 = int_to_ptr.vmem [resolvable:$true] %s131
      %137 = dma.vmem_to_hbm [thread:$0]  %s132, 2048, %s3, [#allocation3], 128, 128, 8
    $region17: #{conv_block_forward.5} parent=1 // pred_fallthru
      _
    // Predicated region
    $region18: #{conv_block_forward.5} parent=1 // pred_check
      _
    $region19: #{conv_block_forward.5} parent=1 // pred_check_branch
      %139 = sbr.rel (0) target = $region21
    $region20: #{conv_block_forward.5} parent=1 // pred_region
      %140 = dma.done [#allocation3], 2048
    $region21: #{conv_block_forward.5} parent=1 // pred_fallthru
      _
    %141 = vsyncpa [#allocation3], 1

// kernel: conv_block_forward.4
$region0: #{conv_block_forward.4}
  #allocation0 [shape = 'u32[]', space=smem, size = 0x4, offset = 0x4, fixed_abs, tag = 'smem constant byte address 0x4 - core index']
  #allocation1 [shape = 'u32[144,128]{1,0:T(1,128)}', space=vmem, size = 0x12000, scoped, tag = 'internal scratch']
  #allocation2 [shape = 'f32[64,128]{1,0:T(8,128)}', space=vmem, size = 0x8000, scoped, tag = 'scratch operand']
  %s0 = inlined_call_operand.vmem [shape: bf16[2,9,9,512], index: 0, kind: input, shape index: {}]
  %s1 = inlined_call_operand.vmem [shape: bf16[1280,128], index: 1, kind: input, shape index: {}]
  %s2 = inlined_call_operand.vmem [shape: f32[2,8,8,128], index: 2, kind: output, shape index: {0}]
  %s3 = inlined_call_operand.vmem [shape: f32[2,1,128], index: 3, kind: output, shape index: {1}]
  %s4 = inlined_call_operand.vmem [shape: f32[2,1,128], index: 4, kind: output, shape index: {2}]
  %5 = xla_tuple %s2, %s3, %s4
  %s6 = sld [smem:[#allocation0]]
  $region61: #{conv_block_forward.4} parent=0
    _
  %s8 = ssub.s32 1, %s6
  %s9 = scalar_select 0, %s8, %s6
  loop: start=0, step=1, limit=4
  $region2: #{conv_block_forward.4} parent=0 // loop_pre_header
    _
  $region3: #{conv_block_forward.4} parent=0 // loop_header
    %s11 = sphi 0, %s15
    %p12 = scmp.ge.s32.totalorder %s11, 4
    %s18 = sphi 0, %s30
    %s19 = sphi 0, %s26
    %s20 = sphi 0, %s18
    %s21 = sphi 0, %s19
    %s22 = sphi 0, %s20
    %s23 = sphi 0, %s21
    %s33 = sphi 0, %s35
    %s36 = sphi 0, %s33
    %s37 = sphi 0, %s36
    %s53 = sphi 0, %s37
    %s57 = sphi 0, %s57
    %s59 = sphi 0, %s57
    %s60 = sphi 0, %s59
    %s74 = sphi 0, %s60
    %s82 = sphi 0, %s84
    %s85 = sphi 0, %s82
    %s86 = sphi 0, %s85
    %s102 = sphi 0, %s86
    %s108 = sphi 0, %s110
    %s111 = sphi 0, %s108
    %s112 = sphi 0, %s111
    %s128 = sphi 0, %s112
    %s134 = sphi 0, %s136
    %s137 = sphi 0, %s134
    %s138 = sphi 0, %s137
    %s154 = sphi 0, %s138
  $region4: #{conv_block_forward.4} parent=0 // loop_header_branch
    %14 = sbr.rel (%p12) target = $region8
  $region5: #{conv_block_forward.4} parent=0 // loop_body
    %s16 = ssub.s32 %s11, 1
    %s17 = ssub.s32 %s11, 2
    %s24 = sadd.s32 1, %s19
    %p25 = scmp.ge.s32.totalorder %s24, 1
    %s26 = scalar_select %p25, 0, %s24
    %s27 = sadd.s32 1, %s18
    %s28 = scalar_select %p25, %s27, %s18
    %p29 = scmp.ge.s32.totalorder %s28, 2
    %s30 = scalar_select %p29, 0, %s28
    %s31 = ssub.s32 %s18, %s30
    %p32 = scmp.eq.s32.totalorder %s31, 0
    %s34 = sadd.s32 %s33, 1
    %s35 = scalar_select %p32, %s33, %s34
    %p38 = pneg %p32
    %p39 = scmp.eq.s32.totalorder %s11, 1
    %p40 = por %p38, %p39
    %p41 = scmp.ne.s32.totalorder %s33, %s36
    %p42 = scmp.eq.s32.totalorder %s11, 0
    %p43 = por %p41, %p42
    %p44 = scmp.ne.s32.totalorder %s33, %s36
    %p45 = scmp.eq.s32.totalorder %s16, 1
    %p46 = por %p44, %p45
    %p47 = scmp.ne.s32.totalorder %s36, %s37
    %p48 = scmp.eq.s32.totalorder %s16, 0
    %p49 = por %p47, %p48
    %p50 = scmp.ne.s32.totalorder %s36, %s37
    %p51 = scmp.eq.s32.totalorder %s17, 1
    %p52 = por %p50, %p51
    %p54 = scmp.ne.s32.totalorder %s37, %s53
    %p55 = scmp.eq.s32.totalorder %s17, 0
    %p56 = por %p54, %p55
    %s58 = sadd.s32 %s57, 1
    %p61 = scmp.eq.s32.totalorder %s11, 1
    %p62 = scmp.ne.s32.totalorder %s57, %s59
    %p63 = scmp.eq.s32.totalorder %s11, 0
    %p64 = por %p62, %p63
    %p65 = scmp.ne.s32.totalorder %s57, %s59
    %p66 = scmp.eq.s32.totalorder %s16, 1
    %p67 = por %p65, %p66
    %p68 = scmp.ne.s32.totalorder %s59, %s60
    %p69 = scmp.eq.s32.totalorder %s16, 0
    %p70 = por %p68, %p69
    %p71 = scmp.ne.s32.totalorder %s59, %s60
    %p72 = scmp.eq.s32.totalorder %s17, 1
    %p73 = por %p71, %p72
    %p75 = scmp.ne.s32.totalorder %s60, %s74
    %p76 = scmp.eq.s32.totalorder %s17, 0
    %p77 = por %p75, %p76
    %s78 = ssub.s32 %s18, %s30
    %s79 = ssub.s32 %s19, %s26
    %s80 = sor.u32 %s78, %s79
    %p81 = scmp.eq.s32.totalorder %s80, 0
    %s83 = sadd.s32 %s82, 1
    %s84 = scalar_select %p81, %s82, %s83
    %p87 = pneg %p81
    %p88 = scmp.eq.s32.totalorder %s11, 1
    %p89 = por %p87, %p88
    %p90 = scmp.ne.s32.totalorder %s82, %s85
    %p91 = scmp.eq.s32.totalorder %s11, 0
    %p92 = por %p90, %p91
    %p93 = scmp.ne.s32.totalorder %s82, %s85
    %p94 = scmp.eq.s32.totalorder %s16, 1
    %p95 = por %p93, %p94
    %p96 = scmp.ne.s32.totalorder %s85, %s86
    %p97 = scmp.eq.s32.totalorder %s16, 0
    %p98 = por %p96, %p97
    %p99 = scmp.ne.s32.totalorder %s85, %s86
    %p100 = scmp.eq.s32.totalorder %s17, 1
    %p101 = por %p99, %p100
    %p103 = scmp.ne.s32.totalorder %s86, %s102
    %p104 = scmp.eq.s32.totalorder %s17, 0
    %p105 = por %p103, %p104
    %s106 = ssub.s32 %s18, %s30
    %p107 = scmp.eq.s32.totalorder %s106, 0
    %s109 = sadd.s32 %s108, 1
    %s110 = scalar_select %p107, %s108, %s109
    %p113 = pneg %p107
    %p114 = scmp.eq.s32.totalorder %s11, 1
    %p115 = por %p113, %p114
    %p116 = scmp.ne.s32.totalorder %s108, %s111
    %p117 = scmp.eq.s32.totalorder %s11, 0
    %p118 = por %p116, %p117
    %p119 = scmp.ne.s32.totalorder %s108, %s111
    %p120 = scmp.eq.s32.totalorder %s16, 1
    %p121 = por %p119, %p120
    %p122 = scmp.ne.s32.totalorder %s111, %s112
    %p123 = scmp.eq.s32.totalorder %s16, 0
    %p124 = por %p122, %p123
    %p125 = scmp.ne.s32.totalorder %s111, %s112
    %p126 = scmp.eq.s32.totalorder %s17, 1
    %p127 = por %p125, %p126
    %p129 = scmp.ne.s32.totalorder %s112, %s128
    %p130 = scmp.eq.s32.totalorder %s17, 0
    %p131 = por %p129, %p130
    %s132 = ssub.s32 %s18, %s30
    %p133 = scmp.eq.s32.totalorder %s132, 0
    %s135 = sadd.s32 %s134, 1
    %s136 = scalar_select %p133, %s134, %s135
    %p139 = pneg %p133
    %p140 = scmp.eq.s32.totalorder %s11, 1
    %p141 = por %p139, %p140
    %p142 = scmp.ne.s32.totalorder %s134, %s137
    %p143 = scmp.eq.s32.totalorder %s11, 0
    %p144 = por %p142, %p143
    %p145 = scmp.ne.s32.totalorder %s134, %s137
    %p146 = scmp.eq.s32.totalorder %s16, 1
    %p147 = por %p145, %p146
    %p148 = scmp.ne.s32.totalorder %s137, %s138
    %p149 = scmp.eq.s32.totalorder %s16, 0
    %p150 = por %p148, %p149
    %p151 = scmp.ne.s32.totalorder %s137, %s138
    %p152 = scmp.eq.s32.totalorder %s17, 1
    %p153 = por %p151, %p152
    %p155 = scmp.ne.s32.totalorder %s138, %s154
    %p156 = scmp.eq.s32.totalorder %s17, 0
    %p157 = por %p155, %p156
    %p158 = scmp.le.s32.totalorder 1, %s11
    %p159 = scmp.lt.s32.totalorder %s11, 3
    %p160 = pnand %p158, %p159
    %p161 = pneg %p160
    // Predicated region
    $region9: #{conv_block_forward.4} parent=5 // pred_check
      _
    $region10: #{conv_block_forward.4} parent=5 // pred_check_branch
      %163 = sbr.rel (%p160) target = $region12
    $region11: #{conv_block_forward.4} parent=5 // pred_region
      %s164 = ssub.s32 %s11, 1
      // Predicated region
      $region13: #{conv_block_forward.4} parent=11 // pred_check
        %p165 = pneg %p70
      $region14: #{conv_block_forward.4} parent=11 // pred_check_branch
        %167 = sbr.rel (%p165) target = $region16
      $region15: #{conv_block_forward.4} parent=11 // pred_region
        _
      $region16: #{conv_block_forward.4} parent=11 // pred_fallthru
        _
    $region12: #{conv_block_forward.4} parent=5 // pred_fallthru
      _
    %p168 = scmp.lt.s32.totalorder %s11, 2
    // Predicated region
    $region17: #{conv_block_forward.4} parent=5 // pred_check
      %p169 = pneg %p168
    $region18: #{conv_block_forward.4} parent=5 // pred_check_branch
      %171 = sbr.rel (%p169) target = $region20
    $region19: #{conv_block_forward.4} parent=5 // pred_region
      // Predicated region
      $region21: #{conv_block_forward.4} parent=19 // pred_check
        %p172 = pneg %p43
      $region22: #{conv_block_forward.4} parent=19 // pred_check_branch
        %174 = sbr.rel (%p172) target = $region24
      $region23: #{conv_block_forward.4} parent=19 // pred_region
        %p175 = scmp.lt.s32.totalorder %s18, 1
        %s176 = scalar_select %p175, %s18, 1
        %s177 = smul.addr %s176, 72
        %s178 = smul.addr %s177, 4
        %s179 = scalar_lea.vmem %s0, %s178
      $region24: #{conv_block_forward.4} parent=19 // pred_fallthru
        _
    $region20: #{conv_block_forward.4} parent=5 // pred_fallthru
      _
    %p180 = scmp.le.s32.totalorder 1, %s11
    %p181 = scmp.lt.s32.totalorder %s11, 3
    %p182 = pnand %p180, %p181
    %p183 = pneg %p182
    // Predicated region
    $region25: #{conv_block_forward.4} parent=5 // pred_check
      _
    $region26: #{conv_block_forward.4} parent=5 // pred_check_branch
      %185 = sbr.rel (%p182) target = $region28
    $region27: #{conv_block_forward.4} parent=5 // pred_region
      %s186 = ssub.s32 %s11, 1
      %p187 = scmp.lt.s32.totalorder %s20, 1
      %s188 = scalar_select %p187, %s20, 1
      %s189 = smul.addr %s188, 72
      %s190 = smul.addr %s189, 4
      %s191 = scalar_lea.vmem %s0, %s190
      %p192 = pneg %p49
      %p193 = pneg %p46
      %p194 = pneg %p70
      %p195 = pneg %p67
      %p196 = pneg %p98
      %p197 = pneg %p95
      %s198 = smul.u32 8, %s21
      %p199 = scmp.lt.s32.totalorder %s20, 1
      %s200 = scalar_select %p199, %s20, 1
      %p201 = scmp.lt.s32.totalorder %s198, 7
      %s202 = scalar_select %p201, %s198, 7
      %s203 = smul.addr %s200, 8
      %s204 = sadd.s32 %s202, %s203
      %s205 = smul.addr %s204, 8
      %s206 = scalar_lea.vmem %s2, %s205
      %p207 = pneg %p124
      %p208 = pneg %p121
      %p209 = scmp.lt.s32.totalorder %s20, 1
      %s210 = scalar_select %p209, %s20, 1
      %s211 = scalar_lea.vmem %s3, %s210
      %p212 = pneg %p150
      %p213 = pneg %p147
      %p214 = scmp.lt.s32.totalorder %s20, 1
      %s215 = scalar_select %p214, %s20, 1
      %s216 = scalar_lea.vmem %s4, %s215
      %p217 = scmp.lt.s32.totalorder %s20, 1
      %s218 = scalar_select %p217, %s20, 1
      %s219 = smul.addr %s218, 72
      %s220 = smul.addr %s219, 4
      %s221 = scalar_lea.vmem %s0, %s220
      %s222 = smul.u32 8, %s21
      %p223 = scmp.lt.s32.totalorder %s20, 1
      %s224 = scalar_select %p223, %s20, 1
      %p225 = scmp.lt.s32.totalorder %s222, 7
      %s226 = scalar_select %p225, %s222, 7
      %s227 = smul.addr %s224, 8
      %s228 = sadd.s32 %s226, %s227
      %s229 = smul.addr %s228, 8
      %s230 = scalar_lea.vmem %s2, %s229
      %s231 = smul.u32 8, %s21
      %p232 = scmp.lt.s32.totalorder %s20, 1
      %s233 = scalar_select %p232, %s20, 1
      %s234 = scalar_lea.vmem %s3, %s233
      %p235 = scmp.lt.s32.totalorder %s20, 1
      %s236 = scalar_select %p235, %s20, 1
      %s237 = scalar_lea.vmem %s4, %s236
      %s239 = smul.u32 %s21, 8
      %s240 = smul.u32 %s239, 8
      %s241 = smul.addr %s240, 4
      %s242 = scalar_lea.vmem %s221, %s241
      %v243 = vld [vmem:[%s242] sm:$0xff]
      %v244 = vld [vmem:[%s242 + $0x8] sm:$0xff]
      %v245 = vld [vmem:[%s242 + $0x20] sm:$0xff]
      %v246 = vld [vmem:[%s242 + $0x28] sm:$0xff]
      %v247 = vld [vmem:[%s242 + $0x40] sm:$0xff]
      %v248 = vld [vmem:[%s242 + $0x48] sm:$0xff]
      %v249 = vld [vmem:[%s242 + $0x60] sm:$0xff]
      %v250 = vld [vmem:[%s242 + $0x68] sm:$0xff]
      %v251 = vld [vmem:[%s242 + $0x80] sm:$0xff]
      %v252 = vld [vmem:[%s242 + $0x88] sm:$0xff]
      %v253 = vld [vmem:[%s242 + $0xa0] sm:$0xff]
      %v254 = vld [vmem:[%s242 + $0xa8] sm:$0xff]
      %v255 = vld [vmem:[%s242 + $0xc0] sm:$0xff]
      %v256 = vld [vmem:[%s242 + $0xc8] sm:$0xff]
      %v257 = vld [vmem:[%s242 + $0xe0] sm:$0xff]
      %v258 = vld [vmem:[%s242 + $0xe8] sm:$0xff]
      %v259 = vunpack.c.l.bf16 %v243
      %v260 = vunpack.c.h.bf16 %v243
      %v261 = vunpack.c.l.bf16 %v244
      %v262 = vunpack.c.h.bf16 %v244
      %v263 = vunpack.c.l.bf16 %v245
      %v264 = vunpack.c.h.bf16 %v245
      %v265 = vunpack.c.l.bf16 %v246
      %v266 = vunpack.c.h.bf16 %v246
      %v267 = vunpack.c.l.bf16 %v247
      %v268 = vunpack.c.h.bf16 %v247
      %v269 = vunpack.c.l.bf16 %v248
      %v270 = vunpack.c.h.bf16 %v248
      %v271 = vunpack.c.l.bf16 %v249
      %v272 = vunpack.c.h.bf16 %v249
      %v273 = vunpack.c.l.bf16 %v250
      %v274 = vunpack.c.h.bf16 %v250
      %v275 = vunpack.c.l.bf16 %v251
      %v276 = vunpack.c.h.bf16 %v251
      %v277 = vunpack.c.l.bf16 %v252
      %v278 = vunpack.c.h.bf16 %v252
      %v279 = vunpack.c.l.bf16 %v253
      %v280 = vunpack.c.h.bf16 %v253
      %v281 = vunpack.c.l.bf16 %v254
      %v282 = vunpack.c.h.bf16 %v254
      %v283 = vunpack.c.l.bf16 %v255
      %v284 = vunpack.c.h.bf16 %v255
      %v285 = vunpack.c.l.bf16 %v256
      %v286 = vunpack.c.h.bf16 %v256
      %v287 = vunpack.c.l.bf16 %v257
      %v288 = vunpack.c.h.bf16 %v257
      %v289 = vunpack.c.l.bf16 %v258
      %v290 = vunpack.c.h.bf16 %v258
      %v291 = vpack.c.bf16 %v263, %v259
      %v292 = vpack.c.bf16 %v264, %v260
      %v293 = vpack.c.bf16 %v265, %v261
      %v294 = vpack.c.bf16 %v266, %v262
      %v295 = vpack.c.bf16 %v271, %v267
      %v296 = vpack.c.bf16 %v272, %v268
      %v297 = vpack.c.bf16 %v273, %v269
      %v298 = vpack.c.bf16 %v274, %v270
      %v299 = vpack.c.bf16 %v279, %v275
      %v300 = vpack.c.bf16 %v280, %v276
      %v301 = vpack.c.bf16 %v281, %v277
      %v302 = vpack.c.bf16 %v282, %v278
      %v303 = vpack.c.bf16 %v287, %v283
      %v304 = vpack.c.bf16 %v288, %v284
      %v305 = vpack.c.bf16 %v289, %v285
      %v306 = vpack.c.bf16 %v290, %v286
      %v307 = vld [vmem:[%s1] sm:$0xf]
      %v308 = vld [vmem:[%s1 + $0x4] sm:$0xf]
      %v309 = vld [vmem:[%s1 + $0x8] sm:$0xf]
      %v310 = vld [vmem:[%s1 + $0xc] sm:$0xf]
      %v311 = vld [vmem:[%s1 + $0x10] sm:$0xf]
      %v312 = vld [vmem:[%s1 + $0x14] sm:$0xf]
      %v313 = vld [vmem:[%s1 + $0x18] sm:$0xf]
      %v314 = vld [vmem:[%s1 + $0x1c] sm:$0xf]
      %v315 = vld [vmem:[%s1 + $0x20] sm:$0xf]
      %v316 = vld [vmem:[%s1 + $0x24] sm:$0xf]
      %v317 = vld [vmem:[%s1 + $0x28] sm:$0xf]
      %v318 = vld [vmem:[%s1 + $0x2c] sm:$0xf]
      %v319 = vld [vmem:[%s1 + $0x30] sm:$0xf]
      %v320 = vld [vmem:[%s1 + $0x34] sm:$0xf]
      %v321 = vld [vmem:[%s1 + $0x38] sm:$0xf]
      %v322 = vld [vmem:[%s1 + $0x3c] sm:$0xf]
      %v323 = vld [vmem:[%s1 + $0x40] sm:$0xf]
      %v324 = vld [vmem:[%s1 + $0x44] sm:$0xf]
      %v325 = vld [vmem:[%s1 + $0x48] sm:$0xf]
      %v326 = vld [vmem:[%s1 + $0x4c] sm:$0xf]
      %v327 = vld [vmem:[%s1 + $0x50] sm:$0xf]
      %v328 = vld [vmem:[%s1 + $0x54] sm:$0xf]
      %v329 = vld [vmem:[%s1 + $0x58] sm:$0xf]
      %v330 = vld [vmem:[%s1 + $0x5c] sm:$0xf]
      %v331 = vld [vmem:[%s1 + $0x60] sm:$0xf]
      %v332 = vld [vmem:[%s1 + $0x64] sm:$0xf]
      %v333 = vld [vmem:[%s1 + $0x68] sm:$0xf]
      %v334 = vld [vmem:[%s1 + $0x6c] sm:$0xf]
      %v335 = vld [vmem:[%s1 + $0x70] sm:$0xf]
      %v336 = vld [vmem:[%s1 + $0x74] sm:$0xf]
      %v337 = vld [vmem:[%s1 + $0x78] sm:$0xf]
      %v338 = vld [vmem:[%s1 + $0x7c] sm:$0xf]
      %v339 = vld [vmem:[%s1 + $0x80] sm:$0xf]
      %v340 = vld [vmem:[%s1 + $0x84] sm:$0xf]
      %v341 = vld [vmem:[%s1 + $0x88] sm:$0xf]
      %v342 = vld [vmem:[%s1 + $0x8c] sm:$0xf]
      %v343 = vld [vmem:[%s1 + $0x90] sm:$0xf]
      %v344 = vld [vmem:[%s1 + $0x94] sm:$0xf]
      %v345 = vld [vmem:[%s1 + $0x98] sm:$0xf]
      %v346 = vld [vmem:[%s1 + $0x9c] sm:$0xf]
      %v347 = vld [vmem:[%s1 + $0xa0] sm:$0xf]
      %v348 = vld [vmem:[%s1 + $0xa4] sm:$0xf]
      %v349 = vld [vmem:[%s1 + $0xa8] sm:$0xf]
      %v350 = vld [vmem:[%s1 + $0xac] sm:$0xf]
      %v351 = vld [vmem:[%s1 + $0xb0] sm:$0xf]
      %v352 = vld [vmem:[%s1 + $0xb4] sm:$0xf]
      %v353 = vld [vmem:[%s1 + $0xb8] sm:$0xf]
      %v354 = vld [vmem:[%s1 + $0xbc] sm:$0xf]
      %v355 = vld [vmem:[%s1 + $0xc0] sm:$0xf]
      %v356 = vld [vmem:[%s1 + $0xc4] sm:$0xf]
      %v357 = vld [vmem:[%s1 + $0xc8] sm:$0xf]
      %v358 = vld [vmem:[%s1 + $0xcc] sm:$0xf]
      %v359 = vld [vmem:[%s1 + $0xd0] sm:$0xf]
      %v360 = vld [vmem:[%s1 + $0xd4] sm:$0xf]
      %v361 = vld [vmem:[%s1 + $0xd8] sm:$0xf]
      %v362 = vld [vmem:[%s1 + $0xdc] sm:$0xf]
      %v363 = vld [vmem:[%s1 + $0xe0] sm:$0xf]
      %v364 = vld [vmem:[%s1 + $0xe4] sm:$0xf]
      %v365 = vld [vmem:[%s1 + $0xe8] sm:$0xf]
      %v366 = vld [vmem:[%s1 + $0xec] sm:$0xf]
      %v367 = vld [vmem:[%s1 + $0xf0] sm:$0xf]
      %v368 = vld [vmem:[%s1 + $0xf4] sm:$0xf]
      %v369 = vld [vmem:[%s1 + $0xf8] sm:$0xf]
      %v370 = vld [vmem:[%s1 + $0xfc] sm:$0xf]
      %v435 = vunpack.c.l.b16 %v307
      %v436 = vunpack.c.l.b16 %v308
      %v437 = vunpack.c.l.b16 %v309
      %v438 = vunpack.c.l.b16 %v310
      %v439 = vunpack.c.l.b16 %v311
      %v440 = vunpack.c.l.b16 %v312
      %v441 = vunpack.c.l.b16 %v313
      %v442 = vunpack.c.l.b16 %v314
      %v443 = vunpack.c.l.b16 %v315
      %v444 = vunpack.c.l.b16 %v316
      %v445 = vunpack.c.l.b16 %v317
      %v446 = vunpack.c.l.b16 %v318
      %v447 = vunpack.c.l.b16 %v319
      %v448 = vunpack.c.l.b16 %v320
      %v449 = vunpack.c.l.b16 %v321
      %v450 = vunpack.c.l.b16 %v322
      %v451 = vunpack.c.l.b16 %v323
      %v452 = vunpack.c.l.b16 %v324
      %v453 = vunpack.c.l.b16 %v325
      %v454 = vunpack.c.l.b16 %v326
      %v455 = vunpack.c.l.b16 %v327
      %v456 = vunpack.c.l.b16 %v328
      %v457 = vunpack.c.l.b16 %v329
      %v458 = vunpack.c.l.b16 %v330
      %v459 = vunpack.c.l.b16 %v331
      %v460 = vunpack.c.l.b16 %v332
      %v461 = vunpack.c.l.b16 %v333
      %v462 = vunpack.c.l.b16 %v334
      %v463 = vunpack.c.l.b16 %v335
      %v464 = vunpack.c.l.b16 %v336
      %v465 = vunpack.c.l.b16 %v337
      %v466 = vunpack.c.l.b16 %v338
      %v467 = vunpack.c.l.b16 %v339
      %v468 = vunpack.c.l.b16 %v340
      %v469 = vunpack.c.l.b16 %v341
      %v470 = vunpack.c.l.b16 %v342
      %v471 = vunpack.c.l.b16 %v343
      %v472 = vunpack.c.l.b16 %v344
      %v473 = vunpack.c.l.b16 %v345
      %v474 = vunpack.c.l.b16 %v346
      %v475 = vunpack.c.l.b16 %v347
      %v476 = vunpack.c.l.b16 %v348
      %v477 = vunpack.c.l.b16 %v349
      %v478 = vunpack.c.l.b16 %v350
      %v479 = vunpack.c.l.b16 %v351
      %v480 = vunpack.c.l.b16 %v352
      %v481 = vunpack.c.l.b16 %v353
      %v482 = vunpack.c.l.b16 %v354
      %v483 = vunpack.c.l.b16 %v355
      %v484 = vunpack.c.l.b16 %v356
      %v485 = vunpack.c.l.b16 %v357
      %v486 = vunpack.c.l.b16 %v358
      %v487 = vunpack.c.l.b16 %v359
      %v488 = vunpack.c.l.b16 %v360
      %v489 = vunpack.c.l.b16 %v361
      %v490 = vunpack.c.l.b16 %v362
      %v491 = vunpack.c.l.b16 %v363
      %v492 = vunpack.c.l.b16 %v364
      %v493 = vunpack.c.l.b16 %v365
      %v494 = vunpack.c.l.b16 %v366
      %v495 = vunpack.c.l.b16 %v367
      %v496 = vunpack.c.l.b16 %v368
      %v497 = vunpack.c.l.b16 %v369
      %v498 = vunpack.c.l.b16 %v370
      %v499 = vpack.c.b16 %v436, %v435
      %v500 = vpack.c.b16 %v438, %v437
      %v501 = vpack.c.b16 %v440, %v439
      %v502 = vpack.c.b16 %v442, %v441
      %v503 = vpack.c.b16 %v444, %v443
      %v504 = vpack.c.b16 %v446, %v445
      %v505 = vpack.c.b16 %v448, %v447
      %v506 = vpack.c.b16 %v450, %v449
      %v507 = vpack.c.b16 %v452, %v451
      %v508 = vpack.c.b16 %v454, %v453
      %v509 = vpack.c.b16 %v456, %v455
      %v510 = vpack.c.b16 %v458, %v457
      %v511 = vpack.c.b16 %v460, %v459
      %v512 = vpack.c.b16 %v462, %v461
      %v513 = vpack.c.b16 %v464, %v463
      %v514 = vpack.c.b16 %v466, %v465
      %v515 = vpack.c.b16 %v468, %v467
      %v516 = vpack.c.b16 %v470, %v469
      %v517 = vpack.c.b16 %v472, %v471
      %v518 = vpack.c.b16 %v474, %v473
      %v519 = vpack.c.b16 %v476, %v475
      %v520 = vpack.c.b16 %v478, %v477
      %v521 = vpack.c.b16 %v480, %v479
      %v522 = vpack.c.b16 %v482, %v481
      %v523 = vpack.c.b16 %v484, %v483
      %v524 = vpack.c.b16 %v486, %v485
      %v525 = vpack.c.b16 %v488, %v487
      %v526 = vpack.c.b16 %v490, %v489
      %v527 = vpack.c.b16 %v492, %v491
      %v528 = vpack.c.b16 %v494, %v493
      %v529 = vpack.c.b16 %v496, %v495
      %v530 = vpack.c.b16 %v498, %v497
      %563 = vmatprep.subr.bf16.mxu0 0
      %564 = vmatpush1.bf16.msra.mxu0 %v499
      %565 = vmatprep.subr.bf16.mxu0 0
      %566 = vmatpush1.bf16.msra.mxu0 %v500
      %567 = vmatprep.subr.bf16.mxu0 0
      %568 = vmatpush1.bf16.msra.mxu0 %v501
      %569 = vmatprep.subr.bf16.mxu0 0
      %570 = vmatpush1.bf16.msra.mxu0 %v502
      %571 = vmatprep.subr.bf16.mxu0 0
      %572 = vmatpush1.bf16.msra.mxu0 %v503
      %573 = vmatprep.subr.bf16.mxu0 0
      %574 = vmatpush1.bf16.msra.mxu0 %v504
      %575 = vmatprep.subr.bf16.mxu0 0
      %576 = vmatpush1.bf16.msra.mxu0 %v505
      %577 = vmatprep.subr.bf16.mxu0 0
      %578 = vmatpush1.bf16.msra.mxu0 %v506
      %579 = vmatprep.subr.bf16.mxu0 0
      %580 = vmatpush1.bf16.msra.mxu0 %v507
      %581 = vmatprep.subr.bf16.mxu0 0
      %582 = vmatpush1.bf16.msra.mxu0 %v508
      %583 = vmatprep.subr.bf16.mxu0 0
      %584 = vmatpush1.bf16.msra.mxu0 %v509
      %585 = vmatprep.subr.bf16.mxu0 0
      %586 = vmatpush1.bf16.msra.mxu0 %v510
      %587 = vmatprep.subr.bf16.mxu0 0
      %588 = vmatpush1.bf16.msra.mxu0 %v511
      %589 = vmatprep.subr.bf16.mxu0 0
      %590 = vmatpush1.bf16.msra.mxu0 %v512
      %591 = vmatprep.subr.bf16.mxu0 0
      %592 = vmatpush1.bf16.msra.mxu0 %v513
      %593 = vmatprep.subr.bf16.mxu0 0
      %594 = vmatpush1.bf16.msra.mxu0 %v514
      %595 = vmatprep.mubr.bf16.mxu0 %v292
      %596 = vmatmul.mubr.bf16.gmra.mrb[0].mxu0 %v291
      %v597 = vpop.f32.mrb[0].mxu0
      %v598 = vadd.f32 0.0, %v597
      %v599 = vpop.f32.mrb[0].mxu0
      %v600 = vpop.f32.mrb[0].mxu0
      %v601 = vadd.f32 0.0, %v600
      %v602 = vpop.f32.mrb[0].mxu0
      %603 = vmatprep.mubr.bf16.mxu0 %v296
      %604 = vmatmul.mubr.bf16.gmra.mrb[0].mxu0 %v295
      %v605 = vpop.f32.mrb[0].mxu0
      %v606 = vadd.f32 0.0, %v605
      %v607 = vpop.f32.mrb[0].mxu0
      %v608 = vpop.f32.mrb[0].mxu0
      %v609 = vadd.f32 0.0, %v608
      %v610 = vpop.f32.mrb[0].mxu0
      %611 = vmatprep.mubr.bf16.mxu0 %v300
      %612 = vmatmul.mubr.bf16.gmra.mrb[0].mxu0 %v299
      %v613 = vpop.f32.mrb[0].mxu0
      %v614 = vadd.f32 0.0, %v613
      %v615 = vpop.f32.mrb[0].mxu0
      %v616 = vpop.f32.mrb[0].mxu0
      %v617 = vadd.f32 0.0, %v616
      %v618 = vpop.f32.mrb[0].mxu0
      %619 = vmatprep.mubr.bf16.mxu0 %v304
      %620 = vmatmul.mubr.bf16.gmra.mrb[0].mxu0 %v303
      %v621 = vpop.f32.mrb[0].mxu0
      %v622 = vadd.f32 0.0, %v621
      %v623 = vpop.f32.mrb[0].mxu0
      %v624 = vpop.f32.mrb[0].mxu0
      %v625 = vadd.f32 0.0, %v624
      %v626 = vpop.f32.mrb[0].mxu0
      %627 = vdwg.mxu0
      %628 = vmatprep.subr.bf16.mxu0 0
      %629 = vmatpush1.bf16.msra.mxu0 %v515
      %630 = vmatprep.subr.bf16.mxu0 0
      %631 = vmatpush1.bf16.msra.mxu0 %v516
      %632 = vmatprep.subr.bf16.mxu0 0
      %633 = vmatpush1.bf16.msra.mxu0 %v517
      %634 = vmatprep.subr.bf16.mxu0 0
      %635 = vmatpush1.bf16.msra.mxu0 %v518
      %636 = vmatprep.subr.bf16.mxu0 0
      %637 = vmatpush1.bf16.msra.mxu0 %v519
      %638 = vmatprep.subr.bf16.mxu0 0
      %639 = vmatpush1.bf16.msra.mxu0 %v520
      %640 = vmatprep.subr.bf16.mxu0 0
      %641 = vmatpush1.bf16.msra.mxu0 %v521
      %642 = vmatprep.subr.bf16.mxu0 0
      %643 = vmatpush1.bf16.msra.mxu0 %v522
      %644 = vmatprep.subr.bf16.mxu0 0
      %645 = vmatpush1.bf16.msra.mxu0 %v523
      %646 = vmatprep.subr.bf16.mxu0 0
      %647 = vmatpush1.bf16.msra.mxu0 %v524
      %648 = vmatprep.subr.bf16.mxu0 0
      %649 = vmatpush1.bf16.msra.mxu0 %v525
      %650 = vmatprep.subr.bf16.mxu0 0
      %651 = vmatpush1.bf16.msra.mxu0 %v526
      %652 = vmatprep.subr.bf16.mxu0 0
      %653 = vmatpush1.bf16.msra.mxu0 %v527
      %654 = vmatprep.subr.bf16.mxu0 0
      %655 = vmatpush1.bf16.msra.mxu0 %v528
      %656 = vmatprep.subr.bf16.mxu0 0
      %657 = vmatpush1.bf16.msra.mxu0 %v529
      %658 = vmatprep.subr.bf16.mxu0 0
      %659 = vmatpush1.bf16.msra.mxu0 %v530
      %660 = vmatprep.mubr.bf16.mxu0 %v294
      %661 = vmatmul.mubr.bf16.gmra.mrb[0].mxu0 %v293
      %v662 = vpop.f32.mrb[0].mxu0
      %v663 = vadd.f32 %v598, %v662
      %v664 = vpop.f32.mrb[0].mxu0
      %v665 = vpop.f32.mrb[0].mxu0
      %v666 = vadd.f32 %v601, %v665
      %v667 = vpop.f32.mrb[0].mxu0
      %668 = vmatprep.mubr.bf16.mxu0 %v298
      %669 = vmatmul.mubr.bf16.gmra.mrb[0].mxu0 %v297
      %v670 = vpop.f32.mrb[0].mxu0
      %v671 = vadd.f32 %v606, %v670
      %v672 = vpop.f32.mrb[0].mxu0
      %v673 = vpop.f32.mrb[0].mxu0
      %v674 = vadd.f32 %v609, %v673
      %v675 = vpop.f32.mrb[0].mxu0
      %676 = vmatprep.mubr.bf16.mxu0 %v302
      %677 = vmatmul.mubr.bf16.gmra.mrb[0].mxu0 %v301
      %v678 = vpop.f32.mrb[0].mxu0
      %v679 = vadd.f32 %v614, %v678
      %v680 = vpop.f32.mrb[0].mxu0
      %v681 = vpop.f32.mrb[0].mxu0
      %v682 = vadd.f32 %v617, %v681
      %v683 = vpop.f32.mrb[0].mxu0
      %684 = vmatprep.mubr.bf16.mxu0 %v306
      %685 = vmatmul.mubr.bf16.gmra.mrb[0].mxu0 %v305
      %v686 = vpop.f32.mrb[0].mxu0
      %v687 = vadd.f32 %v622, %v686
      %v688 = vpop.f32.mrb[0].mxu0
      %v689 = vpop.f32.mrb[0].mxu0
      %v690 = vadd.f32 %v625, %v689
      %v691 = vpop.f32.mrb[0].mxu0
      %692 = vdwg.mxu0
      %693 = vst [vmem:[#allocation2] sm:$0xff] %v663
      %694 = vst [vmem:[#allocation2 + $0x8] sm:$0xff] %v666
      %695 = vst [vmem:[#allocation2 + $0x10] sm:$0xff] %v671
      %696 = vst [vmem:[#allocation2 + $0x18] sm:$0xff] %v674
      %697 = vst [vmem:[#allocation2 + $0x20] sm:$0xff] %v679
      %698 = vst [vmem:[#allocation2 + $0x28] sm:$0xff] %v682
      %699 = vst [vmem:[#allocation2 + $0x30] sm:$0xff] %v687
      %700 = vst [vmem:[#allocation2 + $0x38] sm:$0xff] %v690
      %v701 = vld [vmem:[%s242] sm:$0xff]
      %v702 = vld [vmem:[%s242 + $0x8] sm:$0xf]
      %v703 = vld [vmem:[%s242 + $0x10] sm:$0x11]
      %v704 = vld [vmem:[%s242 + $0x18] sm:$0x1]
      %v705 = vld [vmem:[%s242 + $0x20] sm:$0xff]
      %v706 = vld [vmem:[%s242 + $0x28] sm:$0xf]
      %v707 = vld [vmem:[%s242 + $0x30] sm:$0x11]
      %v708 = vld [vmem:[%s242 + $0x38] sm:$0x1]
      %v709 = vld [vmem:[%s242 + $0x40] sm:$0xff]
      %v710 = vld [vmem:[%s242 + $0x48] sm:$0xf]
      %v711 = vld [vmem:[%s242 + $0x50] sm:$0x11]
      %v712 = vld [vmem:[%s242 + $0x58] sm:$0x1]
      %v713 = vld [vmem:[%s242 + $0x60] sm:$0xff]
      %v714 = vld [vmem:[%s242 + $0x68] sm:$0xf]
      %v715 = vld [vmem:[%s242 + $0x70] sm:$0x11]
      %v716 = vld [vmem:[%s242 + $0x78] sm:$0x1]
      %v717 = vld [vmem:[%s242 + $0x80] sm:$0xff]
      %v718 = vld [vmem:[%s242 + $0x88] sm:$0xf]
      %v719 = vld [vmem:[%s242 + $0x90] sm:$0x11]
      %v720 = vld [vmem:[%s242 + $0x98] sm:$0x1]
      %v721 = vld [vmem:[%s242 + $0xa0] sm:$0xff]
      %v722 = vld [vmem:[%s242 + $0xa8] sm:$0xf]
      %v723 = vld [vmem:[%s242 + $0xb0] sm:$0x11]
      %v724 = vld [vmem:[%s242 + $0xb8] sm:$0x1]
      %v725 = vld [vmem:[%s242 + $0xc0] sm:$0xff]
      %v726 = vld [vmem:[%s242 + $0xc8] sm:$0xf]
      %v727 = vld [vmem:[%s242 + $0xd0] sm:$0x11]
      %v728 = vld [vmem:[%s242 + $0xd8] sm:$0x1]
      %v729 = vld [vmem:[%s242 + $0xe0] sm:$0xff]
      %v730 = vld [vmem:[%s242 + $0xe8] sm:$0xf]
      %v731 = vld [vmem:[%s242 + $0xf0] sm:$0x11]
      %v732 = vld [vmem:[%s242 + $0xf8] sm:$0x1]
      %v733 = vunpack.c.l.bf16 %v701
      %v734 = vunpack.c.h.bf16 %v701
      %v735 = vunpack.c.l.bf16 %v702
      %v736 = vunpack.c.l.bf16 %v703
      %v737 = vunpack.c.h.bf16 %v703
      %v738 = vunpack.c.l.bf16 %v704
      %v739 = vunpack.c.l.bf16 %v705
      %v740 = vunpack.c.h.bf16 %v705
      %v741 = vunpack.c.l.bf16 %v706
      %v742 = vunpack.c.l.bf16 %v707
      %v743 = vunpack.c.h.bf16 %v707
      %v744 = vunpack.c.l.bf16 %v708
      %v745 = vunpack.c.l.bf16 %v709
      %v746 = vunpack.c.h.bf16 %v709
      %v747 = vunpack.c.l.bf16 %v710
      %v748 = vunpack.c.l.bf16 %v711
      %v749 = vunpack.c.h.bf16 %v711
      %v750 = vunpack.c.l.bf16 %v712
      %v751 = vunpack.c.l.bf16 %v713
      %v752 = vunpack.c.h.bf16 %v713
      %v753 = vunpack.c.l.bf16 %v714
      %v754 = vunpack.c.l.bf16 %v715
      %v755 = vunpack.c.h.bf16 %v715
      %v756 = vunpack.c.l.bf16 %v716
      %v757 = vunpack.c.l.bf16 %v717
      %v758 = vunpack.c.h.bf16 %v717
      %v759 = vunpack.c.l.bf16 %v718
      %v760 = vunpack.c.l.bf16 %v719
      %v761 = vunpack.c.h.bf16 %v719
      %v762 = vunpack.c.l.bf16 %v720
      %v763 = vunpack.c.l.bf16 %v721
      %v764 = vunpack.c.h.bf16 %v721
      %v765 = vunpack.c.l.bf16 %v722
      %v766 = vunpack.c.l.bf16 %v723
      %v767 = vunpack.c.h.bf16 %v723
      %v768 = vunpack.c.l.bf16 %v724
      %v769 = vunpack.c.l.bf16 %v725
      %v770 = vunpack.c.h.bf16 %v725
      %v771 = vunpack.c.l.bf16 %v726
      %v772 = vunpack.c.l.bf16 %v727
      %v773 = vunpack.c.h.bf16 %v727
      %v774 = vunpack.c.l.bf16 %v728
      %v775 = vunpack.c.l.bf16 %v729
      %v776 = vunpack.c.h.bf16 %v729
      %v777 = vunpack.c.l.bf16 %v730
      %v778 = vunpack.c.l.bf16 %v731
      %v779 = vunpack.c.h.bf16 %v731
      %v780 = vunpack.c.l.bf16 %v732
      %vm829 = vcmask 1046528
      %v830 = vrot.slane %v733, 1
      %v831 = vrot.slane %v736, 1
      %v832 = vsel %vm829, %v830, %v831
      %v833 = vrot.slane %v734, 1
      %v834 = vrot.slane %v737, 1
      %v835 = vsel %vm829, %v833, %v834
      %v836 = vrot.slane %v735, 1
      %v837 = vrot.slane %v738, 1
      %v838 = vsel %vm829, %v836, %v837
      %v839 = vrot.slane %v739, 1
      %v840 = vrot.slane %v742, 1
      %v841 = vsel %vm829, %v839, %v840
      %v842 = vrot.slane %v740, 1
      %v843 = vrot.slane %v743, 1
      %v844 = vsel %vm829, %v842, %v843
      %v845 = vrot.slane %v741, 1
      %v846 = vrot.slane %v744, 1
      %v847 = vsel %vm829, %v845, %v846
      %v848 = vrot.slane %v745, 1
      %v849 = vrot.slane %v748, 1
      %v850 = vsel %vm829, %v848, %v849
      %v851 = vrot.slane %v746, 1
      %v852 = vrot.slane %v749, 1
      %v853 = vsel %vm829, %v851, %v852
      %v854 = vrot.slane %v747, 1
      %v855 = vrot.slane %v750, 1
      %v856 = vsel %vm829, %v854, %v855
      %v857 = vrot.slane %v751, 1
      %v858 = vrot.slane %v754, 1
      %v859 = vsel %vm829, %v857, %v858
      %v860 = vrot.slane %v752, 1
      %v861 = vrot.slane %v755, 1
      %v862 = vsel %vm829, %v860, %v861
      %v863 = vrot.slane %v753, 1
      %v864 = vrot.slane %v756, 1
      %v865 = vsel %vm829, %v863, %v864
      %v866 = vrot.slane %v757, 1
      %v867 = vrot.slane %v760, 1
      %v868 = vsel %vm829, %v866, %v867
      %v869 = vrot.slane %v758, 1
      %v870 = vrot.slane %v761, 1
      %v871 = vsel %vm829, %v869, %v870
      %v872 = vrot.slane %v759, 1
      %v873 = vrot.slane %v762, 1
      %v874 = vsel %vm829, %v872, %v873
      %v875 = vrot.slane %v763, 1
      %v876 = vrot.slane %v766, 1
      %v877 = vsel %vm829, %v875, %v876
      %v878 = vrot.slane %v764, 1
      %v879 = vrot.slane %v767, 1
      %v880 = vsel %vm829, %v878, %v879
      %v881 = vrot.slane %v765, 1
      %v882 = vrot.slane %v768, 1
      %v883 = vsel %vm829, %v881, %v882
      %v884 = vrot.slane %v769, 1
      %v885 = vrot.slane %v772, 1
      %v886 = vsel %vm829, %v884, %v885
      %v887 = vrot.slane %v770, 1
      %v888 = vrot.slane %v773, 1
      %v889 = vsel %vm829, %v887, %v888
      %v890 = vrot.slane %v771, 1
      %v891 = vrot.slane %v774, 1
      %v892 = vsel %vm829, %v890, %v891
      %v893 = vrot.slane %v775, 1
      %v894 = vrot.slane %v778, 1
      %v895 = vsel %vm829, %v893, %v894
      %v896 = vrot.slane %v776, 1
      %v897 = vrot.slane %v779, 1
      %v898 = vsel %vm829, %v896, %v897
      %v899 = vrot.slane %v777, 1
      %v900 = vrot.slane %v780, 1
      %v901 = vsel %vm829, %v899, %v900
      %v926 = vpack.c.bf16 %v841, %v832
      %v927 = vpack.c.bf16 %v844, %v835
      %v928 = vpack.c.bf16 %v847, %v838
      %v929 = vpack.c.bf16 %v859, %v850
      %v930 = vpack.c.bf16 %v862, %v853
      %v931 = vpack.c.bf16 %v865, %v856
      %v932 = vpack.c.bf16 %v877, %v868
      %v933 = vpack.c.bf16 %v880, %v871
      %v934 = vpack.c.bf16 %v883, %v874
      %v935 = vpack.c.bf16 %v895, %v886
      %v936 = vpack.c.bf16 %v898, %v889
      %v937 = vpack.c.bf16 %v901, %v892
      %v938 = vld [vmem:[%s1 + $0x100] sm:$0xf]
      %v939 = vld [vmem:[%s1 + $0x104] sm:$0xf]
      %v940 = vld [vmem:[%s1 + $0x108] sm:$0xf]
      %v941 = vld [vmem:[%s1 + $0x10c] sm:$0xf]
      %v942 = vld [vmem:[%s1 + $0x110] sm:$0xf]
      %v943 = vld [vmem:[%s1 + $0x114] sm:$0xf]
      %v944 = vld [vmem:[%s1 + $0x118] sm:$0xf]
      %v945 = vld [vmem:[%s1 + $0x11c] sm:$0xf]
      %v946 = vld [vmem:[%s1 + $0x120] sm:$0xf]
      %v947 = vld [vmem:[%s1 + $0x124] sm:$0xf]
      %v948 = vld [vmem:[%s1 + $0x128] sm:$0xf]
      %v949 = vld [vmem:[%s1 + $0x12c] sm:$0xf]
      %v950 = vld [vmem:[%s1 + $0x130] sm:$0xf]
      %v951 = vld [vmem:[%s1 + $0x134] sm:$0xf]
      %v952 = vld [vmem:[%s1 + $0x138] sm:$0xf]
      %v953 = vld [vmem:[%s1 + $0x13c] sm:$0xf]
      %v954 = vld [vmem:[%s1 + $0x140] sm:$0xf]
      %v955 = vld [vmem:[%s1 + $0x144] sm:$0xf]
      %v956 = vld [vmem:[%s1 + $0x148] sm:$0xf]
      %v957 = vld [vmem:[%s1 + $0x14c] sm:$0xf]
      %v958 = vld [vmem:[%s1 + $0x150] sm:$0xf]
      %v959 = vld [vmem:[%s1 + $0x154] sm:$0xf]
      %v960 = vld [vmem:[%s1 + $0x158] sm:$0xf]
      %v961 = vld [vmem:[%s1 + $0x15c] sm:$0xf]
      %v962 = vld [vmem:[%s1 + $0x160] sm:$0xf]
      %v963 = vld [vmem:[%s1 + $0x164] sm:$0xf]
      %v964 = vld [vmem:[%s1 + $0x168] sm:$0xf]
      %v965 = vld [vmem:[%s1 + $0x16c] sm:$0xf]
      %v966 = vld [vmem:[%s1 + $0x170] sm:$0xf]
      %v967 = vld [vmem:[%s1 + $0x174] sm:$0xf]
      %v968 = vld [vmem:[%s1 + $0x178] sm:$0xf]
      %v969 = vld [vmem:[%s1 + $0x17c] sm:$0xf]
      %v970 = vld [vmem:[%s1 + $0x180] sm:$0xf]
      %v971 = vld [vmem:[%s1 + $0x184] sm:$0xf]
      %v972 = vld [vmem:[%s1 + $0x188] sm:$0xf]
      %v973 = vld [vmem:[%s1 + $0x18c] sm:$0xf]
      %v974 = vld [vmem:[%s1 + $0x190] sm:$0xf]
      %v975 = vld [vmem:[%s1 + $0x194] sm:$0xf]
      %v976 = vld [vmem:[%s1 + $0x198] sm:$0xf]
      %v977 = vld [vmem:[%s1 + $0x19c] sm:$0xf]
      %v978 = vld [vmem:[%s1 + $0x1a0] sm:$0xf]
      %v979 = vld [vmem:[%s1 + $0x1a4] sm:$0xf]
      %v980 = vld [vmem:[%s1 + $0x1a8] sm:$0xf]
      %v981 = vld [vmem:[%s1 + $0x1ac] sm:$0xf]
      %v982 = vld [vmem:[%s1 + $0x1b0] sm:$0xf]
      %v983 = vld [vmem:[%s1 + $0x1b4] sm:$0xf]
      %v984 = vld [vmem:[%s1 + $0x1b8] sm:$0xf]
      %v985 = vld [vmem:[%s1 + $0x1bc] sm:$0xf]
      %v1034 = vunpack.c.l.b16 %v938
      %v1035 = vunpack.c.l.b16 %v939
      %v1036 = vunpack.c.l.b16 %v940
      %v1037 = vunpack.c.l.b16 %v941
      %v1038 = vunpack.c.l.b16 %v942
      %v1039 = vunpack.c.l.b16 %v943
      %v1040 = vunpack.c.l.b16 %v944
      %v1041 = vunpack.c.l.b16 %v945
      %v1042 = vunpack.c.l.b16 %v946
      %v1043 = vunpack.c.l.b16 %v947
      %v1044 = vunpack.c.l.b16 %v948
      %v1045 = vunpack.c.l.b16 %v949
      %v1046 = vunpack.c.l.b16 %v950
      %v1047 = vunpack.c.l.b16 %v951
      %v1048 = vunpack.c.l.b16 %v952
      %v1049 = vunpack.c.l.b16 %v953
      %v1050 = vunpack.c.l.b16 %v954
      %v1051 = vunpack.c.l.b16 %v955
      %v1052 = vunpack.c.l.b16 %v956
      %v1053 = vunpack.c.l.b16 %v957
      %v1054 = vunpack.c.l.b16 %v958
      %v1055 = vunpack.c.l.b16 %v959
      %v1056 = vunpack.c.l.b16 %v960
      %v1057 = vunpack.c.l.b16 %v961
      %v1058 = vunpack.c.l.b16 %v962
      %v1059 = vunpack.c.l.b16 %v963
      %v1060 = vunpack.c.l.b16 %v964
      %v1061 = vunpack.c.l.b16 %v965
      %v1062 = vunpack.c.l.b16 %v966
      %v1063 = vunpack.c.l.b16 %v967
      %v1064 = vunpack.c.l.b16 %v968
      %v1065 = vunpack.c.l.b16 %v969
      %v1066 = vunpack.c.l.b16 %v970
      %v1067 = vunpack.c.l.b16 %v971
      %v1068 = vunpack.c.l.b16 %v972
      %v1069 = vunpack.c.l.b16 %v973
      %v1070 = vunpack.c.l.b16 %v974
      %v1071 = vunpack.c.l.b16 %v975
      %v1072 = vunpack.c.l.b16 %v976
      %v1073 = vunpack.c.l.b16 %v977
      %v1074 = vunpack.c.l.b16 %v978
      %v1075 = vunpack.c.l.b16 %v979
      %v1076 = vunpack.c.l.b16 %v980
      %v1077 = vunpack.c.l.b16 %v981
      %v1078 = vunpack.c.l.b16 %v982
      %v1079 = vunpack.c.l.b16 %v983
      %v1080 = vunpack.c.l.b16 %v984
      %v1081 = vunpack.c.l.b16 %v985
      %v1082 = vpack.c.b16 %v1035, %v1034
      %v1083 = vpack.c.b16 %v1037, %v1036
      %v1084 = vpack.c.b16 %v1039, %v1038
      %v1085 = vpack.c.b16 %v1041, %v1040
      %v1086 = vpack.c.b16 %v1043, %v1042
      %v1087 = vpack.c.b16 %v1045, %v1044
      %v1088 = vpack.c.b16 %v1047, %v1046
      %v1089 = vpack.c.b16 %v1049, %v1048
      %v1090 = vpack.c.b16 %v1051, %v1050
      %v1091 = vpack.c.b16 %v1053, %v1052
      %v1092 = vpack.c.b16 %v1055, %v1054
      %v1093 = vpack.c.b16 %v1057, %v1056
      %v1094 = vpack.c.b16 %v1059, %v1058
      %v1095 = vpack.c.b16 %v1061, %v1060
      %v1096 = vpack.c.b16 %v1063, %v1062
      %v1097 = vpack.c.b16 %v1065, %v1064
      %v1098 = vpack.c.b16 %v1067, %v1066
      %v1099 = vpack.c.b16 %v1069, %v1068
      %v1100 = vpack.c.b16 %v1071, %v1070
      %v1101 = vpack.c.b16 %v1073, %v1072
      %v1102 = vpack.c.b16 %v1075, %v1074
      %v1103 = vpack.c.b16 %v1077, %v1076
      %v1104 = vpack.c.b16 %v1079, %v1078
      %v1105 = vpack.c.b16 %v1081, %v1080
      %1130 = vmatprep.subr.bf16.mxu0 0
      %1131 = vmatpush1.bf16.msra.mxu0 %v1082
      %1132 = vmatprep.subr.bf16.mxu0 0
      %1133 = vmatpush1.bf16.msra.mxu0 %v1083
      %1134 = vmatprep.subr.bf16.mxu0 0
      %1135 = vmatpush1.bf16.msra.mxu0 %v1084
      %1136 = vmatprep.subr.bf16.mxu0 0
      %1137 = vmatpush1.bf16.msra.mxu0 %v1085
      %1138 = vmatprep.subr.bf16.mxu0 0
      %1139 = vmatpush1.bf16.msra.mxu0 %v1086
      %1140 = vmatprep.subr.bf16.mxu0 0
      %1141 = vmatpush1.bf16.msra.mxu0 %v1087
      %1142 = vmatprep.subr.bf16.mxu0 0
      %1143 = vmatpush1.bf16.msra.mxu0 %v1088
      %1144 = vmatprep.subr.bf16.mxu0 0
      %1145 = vmatpush1.bf16.msra.mxu0 %v1089
      %1146 = vmatprep.subr.bf16.mxu0 0
      %1147 = vmatpush1.bf16.msra.mxu0 %v1090
      %1148 = vmatprep.subr.bf16.mxu0 0
      %1149 = vmatpush1.bf16.msra.mxu0 %v1091
      %1150 = vmatprep.subr.bf16.mxu0 0
      %1151 = vmatpush1.bf16.msra.mxu0 %v1092
      %1152 = vmatprep.subr.bf16.mxu0 0
      %1153 = vmatpush1.bf16.msra.mxu0 %v1093
      %1154 = vmatprep.subr.bf16.mxu0 0
      %1155 = vmatpush1.bf16.msra.mxu0 %v1094
      %1156 = vmatprep.subr.bf16.mxu0 0
      %1157 = vmatpush1.bf16.msra.mxu0 %v1095
      %1158 = vmatprep.subr.bf16.mxu0 0
      %1159 = vmatpush1.bf16.msra.mxu0 %v1096
      %1160 = vmatprep.subr.bf16.mxu0 0
      %1161 = vmatpush1.bf16.msra.mxu0 %v1097
      %1162 = vmatprep.mubr.bf16.mxu0 %v927
      %1163 = vmatmul.mubr.bf16.gmra.mrb[0].mxu0 %v926
      %v1164 = vpop.f32.mrb[0].mxu0
      %v1165 = vadd.f32 0.0, %v1164
      %v1166 = vpop.f32.mrb[0].mxu0
      %v1167 = vpop.f32.mrb[0].mxu0
      %v1168 = vadd.f32 0.0, %v1167
      %v1169 = vpop.f32.mrb[0].mxu0
      %1170 = vmatprep.mubr.bf16.mxu0 %v930
      %1171 = vmatmul.mubr.bf16.gmra.mrb[0].mxu0 %v929
      %v1172 = vpop.f32.mrb[0].mxu0
      %v1173 = vadd.f32 0.0, %v1172
      %v1174 = vpop.f32.mrb[0].mxu0
      %v1175 = vpop.f32.mrb[0].mxu0
      %v1176 = vadd.f32 0.0, %v1175
      %v1177 = vpop.f32.mrb[0].mxu0
      %1178 = vmatprep.mubr.bf16.mxu0 %v933
      %1179 = vmatmul.mubr.bf16.gmra.mrb[0].mxu0 %v932
      %v1180 = vpop.f32.mrb[0].mxu0
      %v1181 = vadd.f32 0.0, %v1180
      %v1182 = vpop.f32.mrb[0].mxu0
      %v1183 = vpop.f32.mrb[0].mxu0
      %v1184 = vadd.f32 0.0, %v1183
      %v1185 = vpop.f32.mrb[0].mxu0
      %1186 = vmatprep.mubr.bf16.mxu0 %v936
      %1187 = vmatmul.mubr.bf16.gmra.mrb[0].mxu0 %v935
      %v1188 = vpop.f32.mrb[0].mxu0
      %v1189 = vadd.f32 0.0, %v1188
      %v1190 = vpop.f32.mrb[0].mxu0
      %v1191 = vpop.f32.mrb[0].mxu0
      %v1192 = vadd.f32 0.0, %v1191
      %v1193 = vpop.f32.mrb[0].mxu0
      %1194 = vdwg.mxu0
      %1195 = vmatprep.subr.bf16.mxu0 0
      %1196 = vmatpush1.bf16.msra.mxu0 %v1098
      %1197 = vmatprep.subr.bf16.mxu0 0
      %1198 = vmatpush1.bf16.msra.mxu0 %v1099
      %1199 = vmatprep.subr.bf16.mxu0 0
      %1200 = vmatpush1.bf16.msra.mxu0 %v1100
      %1201 = vmatprep.subr.bf16.mxu0 0
      %1202 = vmatpush1.bf16.msra.mxu0 %v1101
      %1203 = vmatprep.subr.bf16.mxu0 0
      %1204 = vmatpush1.bf16.msra.mxu0 %v1102
      %1205 = vmatprep.subr.bf16.mxu0 0
      %1206 = vmatpush1.bf16.msra.mxu0 %v1103
      %1207 = vmatprep.subr.bf16.mxu0 0
      %1208 = vmatpush1.bf16.msra.mxu0 %v1104
      %1209 = vmatprep.subr.bf16.mxu0 0
      %1210 = vmatpush1.bf16.msra.mxu0 %v1105
      %1211 = vmatprep.subr.bf16.mxu0 0
      %1212 = vmatpush1.bf16.msra.mxu0 0
      %1213 = vmatprep.subr.bf16.mxu0 0
      %1214 = vmatpush1.bf16.msra.mxu0 0
      %1215 = vmatprep.subr.bf16.mxu0 0
      %1216 = vmatpush1.bf16.msra.mxu0 0
      %1217 = vmatprep.subr.bf16.mxu0 0
      %1218 = vmatpush1.bf16.msra.mxu0 0
      %1219 = vmatprep.subr.bf16.mxu0 0
      %1220 = vmatpush1.bf16.msra.mxu0 0
      %1221 = vmatprep.subr.bf16.mxu0 0
      %1222 = vmatpush1.bf16.msra.mxu0 0
      %1223 = vmatprep.subr.bf16.mxu0 0
      %1224 = vmatpush1.bf16.msra.mxu0 0
      %1225 = vmatprep.subr.bf16.mxu0 0
      %1226 = vmatpush1.bf16.msra.mxu0 0
      %1227 = vmatprep.mubr.bf16.mxu0 0
      %1228 = vmatmul.mubr.bf16.gmra.mrb[0].mxu0 %v928
      %v1229 = vpop.f32.mrb[0].mxu0
      %v1230 = vadd.f32 %v1165, %v1229
      %v1231 = vpop.f32.mrb[0].mxu0
      %v1232 = vpop.f32.mrb[0].mxu0
      %v1233 = vadd.f32 %v1168, %v1232
      %v1234 = vpop.f32.mrb[0].mxu0
      %1235 = vmatprep.mubr.bf16.mxu0 0
      %1236 = vmatmul.mubr.bf16.gmra.mrb[0].mxu0 %v931
      %v1237 = vpop.f32.mrb[0].mxu0
      %v1238 = vadd.f32 %v1173, %v1237
      %v1239 = vpop.f32.mrb[0].mxu0
      %v1240 = vpop.f32.mrb[0].mxu0
      %v1241 = vadd.f32 %v1176, %v1240
      %v1242 = vpop.f32.mrb[0].mxu0
      %1243 = vmatprep.mubr.bf16.mxu0 0
      %1244 = vmatmul.mubr.bf16.gmra.mrb[0].mxu0 %v934
      %v1245 = vpop.f32.mrb[0].mxu0
      %v1246 = vadd.f32 %v1181, %v1245
      %v1247 = vpop.f32.mrb[0].mxu0
      %v1248 = vpop.f32.mrb[0].mxu0
      %v1249 = vadd.f32 %v1184, %v1248
      %v1250 = vpop.f32.mrb[0].mxu0
      %1251 = vmatprep.mubr.bf16.mxu0 0
      %1252 = vmatmul.mubr.bf16.gmra.mrb[0].mxu0 %v937
      %v1253 = vpop.f32.mrb[0].mxu0
      %v1254 = vadd.f32 %v1189, %v1253
      %v1255 = vpop.f32.mrb[0].mxu0
      %v1256 = vpop.f32.mrb[0].mxu0
      %v1257 = vadd.f32 %v1192, %v1256
      %v1258 = vpop.f32.mrb[0].mxu0
      %1259 = vdwg.mxu0
      %v1260 = vld [vmem:[#allocation2] sm:$0xff]
      %v1261 = vld [vmem:[#allocation2 + $0x8] sm:$0xff]
      %v1262 = vld [vmem:[#allocation2 + $0x10] sm:$0xff]
      %v1263 = vld [vmem:[#allocation2 + $0x18] sm:$0xff]
      %v1264 = vld [vmem:[#allocation2 + $0x20] sm:$0xff]
      %v1265 = vld [vmem:[#allocation2 + $0x28] sm:$0xff]
      %v1266 = vld [vmem:[#allocation2 + $0x30] sm:$0xff]
      %v1267 = vld [vmem:[#allocation2 + $0x38] sm:$0xff]
      %v1268 = vadd.f32 %v1260, %v1230
      %v1269 = vadd.f32 %v1261, %v1233
      %v1270 = vadd.f32 %v1262, %v1238
      %v1271 = vadd.f32 %v1263, %v1241
      %v1272 = vadd.f32 %v1264, %v1246
      %v1273 = vadd.f32 %v1265, %v1249
      %v1274 = vadd.f32 %v1266, %v1254
      %v1275 = vadd.f32 %v1267, %v1257
      %1276 = vst [vmem:[#allocation2] sm:$0xff] %v1268
      %1277 = vst [vmem:[#allocation2 + $0x8] sm:$0xff] %v1269
      %1278 = vst [vmem:[#allocation2 + $0x10] sm:$0xff] %v1270
      %1279 = vst [vmem:[#allocation2 + $0x18] sm:$0xff] %v1271
      %1280 = vst [vmem:[#allocation2 + $0x20] sm:$0xff] %v1272
      %1281 = vst [vmem:[#allocation2 + $0x28] sm:$0xff] %v1273
      %1282 = vst [vmem:[#allocation2 + $0x30] sm:$0xff] %v1274
      %1283 = vst [vmem:[#allocation2 + $0x38] sm:$0xff] %v1275
      %s1284 = sadd.s32 %s239, 1
      %s1285 = smul.u32 %s1284, 8
      %s1286 = smul.addr %s1285, 4
      %s1287 = scalar_lea.vmem %s221, %s1286
      %v1288 = vld [vmem:[%s1287] sm:$0xff]
      %v1289 = vld [vmem:[%s1287 + $0x20] sm:$0xff]
      %v1290 = vld [vmem:[%s1287 + $0x40] sm:$0xff]
      %v1291 = vld [vmem:[%s1287 + $0x60] sm:$0xff]
      %v1292 = vld [vmem:[%s1287 + $0x80] sm:$0xff]
      %v1293 = vld [vmem:[%s1287 + $0xa0] sm:$0xff]
      %v1294 = vld [vmem:[%s1287 + $0xc0] sm:$0xff]
      %v1295 = vld [vmem:[%s1287 + $0xe0] sm:$0xff]
      %v1296 = vunpack.c.l.bf16 %v1288
      %v1297 = vunpack.c.h.bf16 %v1288
      %v1298 = vunpack.c.l.bf16 %v1289
      %v1299 = vunpack.c.h.bf16 %v1289
      %v1300 = vunpack.c.l.bf16 %v1290
      %v1301 = vunpack.c.h.bf16 %v1290
      %v1302 = vunpack.c.l.bf16 %v1291
      %v1303 = vunpack.c.h.bf16 %v1291
      %v1304 = vunpack.c.l.bf16 %v1292
      %v1305 = vunpack.c.h.bf16 %v1292
      %v1306 = vunpack.c.l.bf16 %v1293
      %v1307 = vunpack.c.h.bf16 %v1293
      %v1308 = vunpack.c.l.bf16 %v1294
      %v1309 = vunpack.c.h.bf16 %v1294
      %v1310 = vunpack.c.l.bf16 %v1295
      %v1311 = vunpack.c.h.bf16 %v1295
      %v1312 = vpack.c.bf16 %v1298, %v1296
      %v1313 = vpack.c.bf16 %v1299, %v1297
      %v1314 = vpack.c.bf16 %v1302, %v1300
      %v1315 = vpack.c.bf16 %v1303, %v1301
      %v1316 = vpack.c.bf16 %v1306, %v1304
      %v1317 = vpack.c.bf16 %v1307, %v1305
      %v1318 = vpack.c.bf16 %v1310, %v1308
      %v1319 = vpack.c.bf16 %v1311, %v1309
      %v1320 = vld [vmem:[%s1 + $0x1c0] sm:$0xf]
      %v1321 = vld [vmem:[%s1 + $0x1c4] sm:$0xf]
      %v1322 = vld [vmem:[%s1 + $0x1c8] sm:$0xf]
      %v1323 = vld [vmem:[%s1 + $0x1cc] sm:$0xf]
      %v1324 = vld [vmem:[%s1 + $0x1d0] sm:$0xf]
      %v1325 = vld [vmem:[%s1 + $0x1d4] sm:$0xf]
      %v1326 = vld [vmem:[%s1 + $0x1d8] sm:$0xf]
      %v1327 = vld [vmem:[%s1 + $0x1dc] sm:$0xf]
      %v1328 = vld [vmem:[%s1 + $0x1e0] sm:$0xf]
      %v1329 = vld [vmem:[%s1 + $0x1e4] sm:$0xf]
      %v1330 = vld [vmem:[%s1 + $0x1e8] sm:$0xf]
      %v1331 = vld [vmem:[%s1 + $0x1ec] sm:$0xf]
      %v1332 = vld [vmem:[%s1 + $0x1f0] sm:$0xf]
      %v1333 = vld [vmem:[%s1 + $0x1f4] sm:$0xf]
      %v1334 = vld [vmem:[%s1 + $0x1f8] sm:$0xf]
      %v1335 = vld [vmem:[%s1 + $0x1fc] sm:$0xf]
      %v1336 = vld [vmem:[%s1 + $0x200] sm:$0xf]
      %v1337 = vld [vmem:[%s1 + $0x204] sm:$0xf]
      %v1338 = vld [vmem:[%s1 + $0x208] sm:$0xf]
      %v1339 = vld [vmem:[%s1 + $0x20c] sm:$0xf]
      %v1340 = vld [vmem:[%s1 + $0x210] sm:$0xf]
      %v1341 = vld [vmem:[%s1 + $0x214] sm:$0xf]
      %v1342 = vld [vmem:[%s1 + $0x218] sm:$0xf]
      %v1343 = vld [vmem:[%s1 + $0x21c] sm:$0xf]
      %v1344 = vld [vmem:[%s1 + $0x220] sm:$0xf]
      %v1345 = vld [vmem:[%s1 + $0x224] sm:$0xf]
      %v1346 = vld [vmem:[%s1 + $0x228] sm:$0xf]
      %v1347 = vld [vmem:[%s1 + $0x22c] sm:$0xf]
      %v1348 = vld [vmem:[%s1 + $0x230] sm:$0xf]
      %v1349 = vld [vmem:[%s1 + $0x234] sm:$0xf]
      %v1350 = vld [vmem:[%s1 + $0x238] sm:$0xf]
      %v1351 = vld [vmem:[%s1 + $0x23c] sm:$0xf]
      %v1384 = vunpack.c.l.b16 %v1320
      %v1385 = vunpack.c.l.b16 %v1321
      %v1386 = vunpack.c.l.b16 %v1322
      %v1387 = vunpack.c.l.b16 %v1323
      %v1388 = vunpack.c.l.b16 %v1324
      %v1389 = vunpack.c.l.b16 %v1325
      %v1390 = vunpack.c.l.b16 %v1326
      %v1391 = vunpack.c.l.b16 %v1327
      %v1392 = vunpack.c.l.b16 %v1328
      %v1393 = vunpack.c.l.b16 %v1329
      %v1394 = vunpack.c.l.b16 %v1330
      %v1395 = vunpack.c.l.b16 %v1331
      %v1396 = vunpack.c.l.b16 %v1332
      %v1397 = vunpack.c.l.b16 %v1333
      %v1398 = vunpack.c.l.b16 %v1334
      %v1399 = vunpack.c.l.b16 %v1335
      %v1400 = vunpack.c.l.b16 %v1336
      %v1401 = vunpack.c.l.b16 %v1337
      %v1402 = vunpack.c.l.b16 %v1338
      %v1403 = vunpack.c.l.b16 %v1339
      %v1404 = vunpack.c.l.b16 %v1340
      %v1405 = vunpack.c.l.b16 %v1341
      %v1406 = vunpack.c.l.b16 %v1342
      %v1407 = vunpack.c.l.b16 %v1343
      %v1408 = vunpack.c.l.b16 %v1344
      %v1409 = vunpack.c.l.b16 %v1345
      %v1410 = vunpack.c.l.b16 %v1346
      %v1411 = vunpack.c.l.b16 %v1347
      %v1412 = vunpack.c.l.b16 %v1348
      %v1413 = vunpack.c.l.b16 %v1349
      %v1414 = vunpack.c.l.b16 %v1350
      %v1415 = vunpack.c.l.b16 %v1351
      %v1416 = vpack.c.b16 %v1385, %v1384
      %v1417 = vpack.c.b16 %v1387, %v1386
      %v1418 = vpack.c.b16 %v1389, %v1388
      %v1419 = vpack.c.b16 %v1391, %v1390
      %v1420 = vpack.c.b16 %v1393, %v1392
      %v1421 = vpack.c.b16 %v1395, %v1394
      %v1422 = vpack.c.b16 %v1397, %v1396
      %v1423 = vpack.c.b16 %v1399, %v1398
      %v1424 = vpack.c.b16 %v1401, %v1400
      %v1425 = vpack.c.b16 %v1403, %v1402
      %v1426 = vpack.c.b16 %v1405, %v1404
      %v1427 = vpack.c.b16 %v1407, %v1406
      %v1428 = vpack.c.b16 %v1409, %v1408
      %v1429 = vpack.c.b16 %v1411, %v1410
      %v1430 = vpack.c.b16 %v1413, %v1412
      %v1431 = vpack.c.b16 %v1415, %v1414
      %1448 = vmatprep.subr.bf16.mxu0 0
      %1449 = vmatpush1.bf16.msra.mxu0 %v1416
      %1450 = vmatprep.subr.bf16.mxu0 0
      %1451 = vmatpush1.bf16.msra.mxu0 %v1417
      %1452 = vmatprep.subr.bf16.mxu0 0
      %1453 = vmatpush1.bf16.msra.mxu0 %v1418
      %1454 = vmatprep.subr.bf16.mxu0 0
      %1455 = vmatpush1.bf16.msra.mxu0 %v1419
      %1456 = vmatprep.subr.bf16.mxu0 0
      %1457 = vmatpush1.bf16.msra.mxu0 %v1420
      %1458 = vmatprep.subr.bf16.mxu0 0
      %1459 = vmatpush1.bf16.msra.mxu0 %v1421
      %1460 = vmatprep.subr.bf16.mxu0 0
      %1461 = vmatpush1.bf16.msra.mxu0 %v1422
      %1462 = vmatprep.subr.bf16.mxu0 0
      %1463 = vmatpush1.bf16.msra.mxu0 %v1423
      %1464 = vmatprep.subr.bf16.mxu0 0
      %1465 = vmatpush1.bf16.msra.mxu0 %v1424
      %1466 = vmatprep.subr.bf16.mxu0 0
      %1467 = vmatpush1.bf16.msra.mxu0 %v1425
      %1468 = vmatprep.subr.bf16.mxu0 0
      %1469 = vmatpush1.bf16.msra.mxu0 %v1426
      %1470 = vmatprep.subr.bf16.mxu0 0
      %1471 = vmatpush1.bf16.msra.mxu0 %v1427
      %1472 = vmatprep.subr.bf16.mxu0 0
      %1473 = vmatpush1.bf16.msra.mxu0 %v1428
      %1474 = vmatprep.subr.bf16.mxu0 0
      %1475 = vmatpush1.bf16.msra.mxu0 %v1429
      %1476 = vmatprep.subr.bf16.mxu0 0
      %1477 = vmatpush1.bf16.msra.mxu0 %v1430
      %1478 = vmatprep.subr.bf16.mxu0 0
      %1479 = vmatpush1.bf16.msra.mxu0 %v1431
      %1480 = vmatprep.mubr.bf16.mxu0 %v1313
      %1481 = vmatmul.mubr.bf16.gmra.mrb[0].mxu0 %v1312
      %v1482 = vpop.f32.mrb[0].mxu0
      %v1483 = vadd.f32 0.0, %v1482
      %v1484 = vpop.f32.mrb[0].mxu0
      %v1485 = vpop.f32.mrb[0].mxu0
      %v1486 = vadd.f32 0.0, %v1485
      %v1487 = vpop.f32.mrb[0].mxu0
      %1488 = vmatprep.mubr.bf16.mxu0 %v1315
      %1489 = vmatmul.mubr.bf16.gmra.mrb[0].mxu0 %v1314
      %v1490 = vpop.f32.mrb[0].mxu0
      %v1491 = vadd.f32 0.0, %v1490
      %v1492 = vpop.f32.mrb[0].mxu0
      %v1493 = vpop.f32.mrb[0].mxu0
      %v1494 = vadd.f32 0.0, %v1493
      %v1495 = vpop.f32.mrb[0].mxu0
      %1496 = vmatprep.mubr.bf16.mxu0 %v1317
      %1497 = vmatmul.mubr.bf16.gmra.mrb[0].mxu0 %v1316
      %v1498 = vpop.f32.mrb[0].mxu0
      %v1499 = vadd.f32 0.0, %v1498
      %v1500 = vpop.f32.mrb[0].mxu0
      %v1501 = vpop.f32.mrb[0].mxu0
      %v1502 = vadd.f32 0.0, %v1501
      %v1503 = vpop.f32.mrb[0].mxu0
      %1504 = vmatprep.mubr.bf16.mxu0 %v1319
      %1505 = vmatmul.mubr.bf16.gmra.mrb[0].mxu0 %v1318
      %v1506 = vpop.f32.mrb[0].mxu0
      %v1507 = vadd.f32 0.0, %v1506
      %v1508 = vpop.f32.mrb[0].mxu0
      %v1509 = vpop.f32.mrb[0].mxu0
      %v1510 = vadd.f32 0.0, %v1509
      %v1511 = vpop.f32.mrb[0].mxu0
      %1512 = vdwg.mxu0
      %v1513 = vld [vmem:[#allocation2] sm:$0xff]
      %v1514 = vld [vmem:[#allocation2 + $0x8] sm:$0xff]
      %v1515 = vld [vmem:[#allocation2 + $0x10] sm:$0xff]
      %v1516 = vld [vmem:[#allocation2 + $0x18] sm:$0xff]
      %v1517 = vld [vmem:[#allocation2 + $0x20] sm:$0xff]
      %v1518 = vld [vmem:[#allocation2 + $0x28] sm:$0xff]
      %v1519 = vld [vmem:[#allocation2 + $0x30] sm:$0xff]
      %v1520 = vld [vmem:[#allocation2 + $0x38] sm:$0xff]
      %v1521 = vadd.f32 %v1513, %v1483
      %v1522 = vadd.f32 %v1514, %v1486
      %v1523 = vadd.f32 %v1515, %v1491
      %v1524 = vadd.f32 %v1516, %v1494
      %v1525 = vadd.f32 %v1517, %v1499
      %v1526 = vadd.f32 %v1518, %v1502
      %v1527 = vadd.f32 %v1519, %v1507
      %v1528 = vadd.f32 %v1520, %v1510
      %1529 = vst [vmem:[#allocation2] sm:$0xff] %v1521
      %1530 = vst [vmem:[#allocation2 + $0x8] sm:$0xff] %v1522
      %1531 = vst [vmem:[#allocation2 + $0x10] sm:$0xff] %v1523
      %1532 = vst [vmem:[#allocation2 + $0x18] sm:$0xff] %v1524
      %1533 = vst [vmem:[#allocation2 + $0x20] sm:$0xff] %v1525
      %1534 = vst [vmem:[#allocation2 + $0x28] sm:$0xff] %v1526
      %1535 = vst [vmem:[#allocation2 + $0x30] sm:$0xff] %v1527
      %1536 = vst [vmem:[#allocation2 + $0x38] sm:$0xff] %v1528
      %v1537 = vld [vmem:[%s1287] sm:$0xf]
      %v1538 = vld [vmem:[%s1287 + $0x10] sm:$0x1]
      %v1539 = vld [vmem:[%s1287 + $0x20] sm:$0xf]
      %v1540 = vld [vmem:[%s1287 + $0x30] sm:$0x1]
      %v1541 = vld [vmem:[%s1287 + $0x40] sm:$0xf]
      %v1542 = vld [vmem:[%s1287 + $0x50] sm:$0x1]
      %v1543 = vld [vmem:[%s1287 + $0x60] sm:$0xf]
      %v1544 = vld [vmem:[%s1287 + $0x70] sm:$0x1]
      %v1545 = vld [vmem:[%s1287 + $0x80] sm:$0xf]
      %v1546 = vld [vmem:[%s1287 + $0x90] sm:$0x1]
      %v1547 = vld [vmem:[%s1287 + $0xa0] sm:$0xf]
      %v1548 = vld [vmem:[%s1287 + $0xb0] sm:$0x1]
      %v1549 = vld [vmem:[%s1287 + $0xc0] sm:$0xf]
      %v1550 = vld [vmem:[%s1287 + $0xd0] sm:$0x1]
      %v1551 = vld [vmem:[%s1287 + $0xe0] sm:$0xf]
      %v1552 = vld [vmem:[%s1287 + $0xf0] sm:$0x1]
      %v1553 = vunpack.c.l.bf16 %v1537
      %v1554 = vunpack.c.l.bf16 %v1538
      %v1555 = vunpack.c.l.bf16 %v1539
      %v1556 = vunpack.c.l.bf16 %v1540
      %v1557 = vunpack.c.l.bf16 %v1541
      %v1558 = vunpack.c.l.bf16 %v1542
      %v1559 = vunpack.c.l.bf16 %v1543
      %v1560 = vunpack.c.l.bf16 %v1544
      %v1561 = vunpack.c.l.bf16 %v1545
      %v1562 = vunpack.c.l.bf16 %v1546
      %v1563 = vunpack.c.l.bf16 %v1547
      %v1564 = vunpack.c.l.bf16 %v1548
      %v1565 = vunpack.c.l.bf16 %v1549
      %v1566 = vunpack.c.l.bf16 %v1550
      %v1567 = vunpack.c.l.bf16 %v1551
      %v1568 = vunpack.c.l.bf16 %v1552
      %v1585 = vrot.slane %v1553, 1
      %v1586 = vrot.slane %v1554, 1
      %v1587 = vsel %vm829, %v1585, %v1586
      %v1588 = vrot.slane %v1555, 1
      %v1589 = vrot.slane %v1556, 1
      %v1590 = vsel %vm829, %v1588, %v1589
      %v1591 = vrot.slane %v1557, 1
      %v1592 = vrot.slane %v1558, 1
      %v1593 = vsel %vm829, %v1591, %v1592
      %v1594 = vrot.slane %v1559, 1
      %v1595 = vrot.slane %v1560, 1
      %v1596 = vsel %vm829, %v1594, %v1595
      %v1597 = vrot.slane %v1561, 1
      %v1598 = vrot.slane %v1562, 1
      %v1599 = vsel %vm829, %v1597, %v1598
      %v1600 = vrot.slane %v1563, 1
      %v1601 = vrot.slane %v1564, 1
      %v1602 = vsel %vm829, %v1600, %v1601
      %v1603 = vrot.slane %v1565, 1
      %v1604 = vrot.slane %v1566, 1
      %v1605 = vsel %vm829, %v1603, %v1604
      %v1606 = vrot.slane %v1567, 1
      %v1607 = vrot.slane %v1568, 1
      %v1608 = vsel %vm829, %v1606, %v1607
      %v1617 = vpack.c.bf16 %v1590, %v1587
      %v1618 = vpack.c.bf16 %v1596, %v1593
      %v1619 = vpack.c.bf16 %v1602, %v1599
      %v1620 = vpack.c.bf16 %v1608, %v1605
      %v1621 = vld [vmem:[%s1 + $0x240] sm:$0xf]
      %v1622 = vld [vmem:[%s1 + $0x244] sm:$0xf]
      %v1623 = vld [vmem:[%s1 + $0x248] sm:$0xf]
      %v1624 = vld [vmem:[%s1 + $0x24c] sm:$0xf]
      %v1625 = vld [vmem:[%s1 + $0x250] sm:$0xf]
      %v1626 = vld [vmem:[%s1 + $0x254] sm:$0xf]
      %v1627 = vld [vmem:[%s1 + $0x258] sm:$0xf]
      %v1628 = vld [vmem:[%s1 + $0x25c] sm:$0xf]
      %v1629 = vld [vmem:[%s1 + $0x260] sm:$0xf]
      %v1630 = vld [vmem:[%s1 + $0x264] sm:$0xf]
      %v1631 = vld [vmem:[%s1 + $0x268] sm:$0xf]
      %v1632 = vld [vmem:[%s1 + $0x26c] sm:$0xf]
      %v1633 = vld [vmem:[%s1 + $0x270] sm:$0xf]
      %v1634 = vld [vmem:[%s1 + $0x274] sm:$0xf]
      %v1635 = vld [vmem:[%s1 + $0x278] sm:$0xf]
      %v1636 = vld [vmem:[%s1 + $0x27c] sm:$0xf]
      %v1653 = vunpack.c.l.b16 %v1621
      %v1654 = vunpack.c.l.b16 %v1622
      %v1655 = vunpack.c.l.b16 %v1623
      %v1656 = vunpack.c.l.b16 %v1624
      %v1657 = vunpack.c.l.b16 %v1625
      %v1658 = vunpack.c.l.b16 %v1626
      %v1659 = vunpack.c.l.b16 %v1627
      %v1660 = vunpack.c.l.b16 %v1628
      %v1661 = vunpack.c.l.b16 %v1629
      %v1662 = vunpack.c.l.b16 %v1630
      %v1663 = vunpack.c.l.b16 %v1631
      %v1664 = vunpack.c.l.b16 %v1632
      %v1665 = vunpack.c.l.b16 %v1633
      %v1666 = vunpack.c.l.b16 %v1634
      %v1667 = vunpack.c.l.b16 %v1635
      %v1668 = vunpack.c.l.b16 %v1636
      %v1669 = vpack.c.b16 %v1654, %v1653
      %v1670 = vpack.c.b16 %v1656, %v1655
      %v1671 = vpack.c.b16 %v1658, %v1657
      %v1672 = vpack.c.b16 %v1660, %v1659
      %v1673 = vpack.c.b16 %v1662, %v1661
      %v1674 = vpack.c.b16 %v1664, %v1663
      %v1675 = vpack.c.b16 %v1666, %v1665
      %v1676 = vpack.c.b16 %v1668, %v1667
      %1685 = vmatprep.subr.bf16.mxu0 0
      %1686 = vmatpush1.bf16.msra.mxu0 %v1669
      %1687 = vmatprep.subr.bf16.mxu0 0
      %1688 = vmatpush1.bf16.msra.mxu0 %v1670
      %1689 = vmatprep.subr.bf16.mxu0 0
      %1690 = vmatpush1.bf16.msra.mxu0 %v1671
      %1691 = vmatprep.subr.bf16.mxu0 0
      %1692 = vmatpush1.bf16.msra.mxu0 %v1672
      %1693 = vmatprep.subr.bf16.mxu0 0
      %1694 = vmatpush1.bf16.msra.mxu0 %v1673
      %1695 = vmatprep.subr.bf16.mxu0 0
      %1696 = vmatpush1.bf16.msra.mxu0 %v1674
      %1697 = vmatprep.subr.bf16.mxu0 0
      %1698 = vmatpush1.bf16.msra.mxu0 %v1675
      %1699 = vmatprep.subr.bf16.mxu0 0
      %1700 = vmatpush1.bf16.msra.mxu0 %v1676
      %1701 = vmatprep.subr.bf16.mxu0 0
      %1702 = vmatpush1.bf16.msra.mxu0 0
      %1703 = vmatprep.subr.bf16.mxu0 0
      %1704 = vmatpush1.bf16.msra.mxu0 0
      %1705 = vmatprep.subr.bf16.mxu0 0
      %1706 = vmatpush1.bf16.msra.mxu0 0
      %1707 = vmatprep.subr.bf16.mxu0 0
      %1708 = vmatpush1.bf16.msra.mxu0 0
      %1709 = vmatprep.subr.bf16.mxu0 0
      %1710 = vmatpush1.bf16.msra.mxu0 0
      %1711 = vmatprep.subr.bf16.mxu0 0
      %1712 = vmatpush1.bf16.msra.mxu0 0
      %1713 = vmatprep.subr.bf16.mxu0 0
      %1714 = vmatpush1.bf16.msra.mxu0 0
      %1715 = vmatprep.subr.bf16.mxu0 0
      %1716 = vmatpush1.bf16.msra.mxu0 0
      %1717 = vmatprep.mubr.bf16.mxu0 0
      %1718 = vmatmul.mubr.bf16.gmra.mrb[0].mxu0 %v1617
      %v1719 = vpop.f32.mrb[0].mxu0
      %v1720 = vadd.f32 0.0, %v1719
      %v1721 = vpop.f32.mrb[0].mxu0
      %v1722 = vpop.f32.mrb[0].mxu0
      %v1723 = vadd.f32 0.0, %v1722
      %v1724 = vpop.f32.mrb[0].mxu0
      %1725 = vmatprep.mubr.bf16.mxu0 0
      %1726 = vmatmul.mubr.bf16.gmra.mrb[0].mxu0 %v1618
      %v1727 = vpop.f32.mrb[0].mxu0
      %v1728 = vadd.f32 0.0, %v1727
      %v1729 = vpop.f32.mrb[0].mxu0
      %v1730 = vpop.f32.mrb[0].mxu0
      %v1731 = vadd.f32 0.0, %v1730
      %v1732 = vpop.f32.mrb[0].mxu0
      %1733 = vmatprep.mubr.bf16.mxu0 0
      %1734 = vmatmul.mubr.bf16.gmra.mrb[0].mxu0 %v1619
      %v1735 = vpop.f32.mrb[0].mxu0
      %v1736 = vadd.f32 0.0, %v1735
      %v1737 = vpop.f32.mrb[0].mxu0
      %v1738 = vpop.f32.mrb[0].mxu0
      %v1739 = vadd.f32 0.0, %v1738
      %v1740 = vpop.f32.mrb[0].mxu0
      %1741 = vmatprep.mubr.bf16.mxu0 0
      %1742 = vmatmul.mubr.bf16.gmra.mrb[0].mxu0 %v1620
      %v1743 = vpop.f32.mrb[0].mxu0
      %v1744 = vadd.f32 0.0, %v1743
      %v1745 = vpop.f32.mrb[0].mxu0
      %v1746 = vpop.f32.mrb[0].mxu0
      %v1747 = vadd.f32 0.0, %v1746
      %v1748 = vpop.f32.mrb[0].mxu0
      %1749 = vdwg.mxu0
      %v1750 = vld [vmem:[#allocation2] sm:$0xff]
      %v1751 = vld [vmem:[#allocation2 + $0x8] sm:$0xff]
      %v1752 = vld [vmem:[#allocation2 + $0x10] sm:$0xff]
      %v1753 = vld [vmem:[#allocation2 + $0x18] sm:$0xff]
      %v1754 = vld [vmem:[#allocation2 + $0x20] sm:$0xff]
      %v1755 = vld [vmem:[#allocation2 + $0x28] sm:$0xff]
      %v1756 = vld [vmem:[#allocation2 + $0x30] sm:$0xff]
      %v1757 = vld [vmem:[#allocation2 + $0x38] sm:$0xff]
      %v1758 = vadd.f32 %v1750, %v1720
      %v1759 = vadd.f32 %v1751, %v1723
      %v1760 = vadd.f32 %v1752, %v1728
      %v1761 = vadd.f32 %v1753, %v1731
      %v1762 = vadd.f32 %v1754, %v1736
      %v1763 = vadd.f32 %v1755, %v1739
      %v1764 = vadd.f32 %v1756, %v1744
      %v1765 = vadd.f32 %v1757, %v1747
      %1766 = vst [vmem:[#allocation2] sm:$0xff] %v1758
      %1767 = vst [vmem:[#allocation2 + $0x8] sm:$0xff] %v1759
      %1768 = vst [vmem:[#allocation2 + $0x10] sm:$0xff] %v1760
      %1769 = vst [vmem:[#allocation2 + $0x18] sm:$0xff] %v1761
      %1770 = vst [vmem:[#allocation2 + $0x20] sm:$0xff] %v1762
      %1771 = vst [vmem:[#allocation2 + $0x28] sm:$0xff] %v1763
      %1772 = vst [vmem:[#allocation2 + $0x30] sm:$0xff] %v1764
      %1773 = vst [vmem:[#allocation2 + $0x38] sm:$0xff] %v1765
      %v1774 = vld [vmem:[#allocation2] sm:$0xff]
      %v1775 = vld [vmem:[#allocation2 + $0x8] sm:$0xff]
      %v1776 = vld [vmem:[#allocation2 + $0x10] sm:$0xff]
      %v1777 = vld [vmem:[#allocation2 + $0x18] sm:$0xff]
      %v1778 = vld [vmem:[#allocation2 + $0x20] sm:$0xff]
      %v1779 = vld [vmem:[#allocation2 + $0x28] sm:$0xff]
      %v1780 = vld [vmem:[#allocation2 + $0x30] sm:$0xff]
      %v1781 = vld [vmem:[#allocation2 + $0x38] sm:$0xff]
      %p1782 = scmp.eq.s32.totalorder %s21, 0
      // Predicated region
      $region29: #{conv_block_forward.4} parent=27 // pred_check
        %p1783 = pneg %p1782
      $region30: #{conv_block_forward.4} parent=27 // pred_check_branch
        %1785 = sbr.rel (%p1783) target = $region32
      $region31: #{conv_block_forward.4} parent=27 // pred_region
        %1786 = vst [vmem:[%s234] sm:$0x1] 0.0
        %1787 = vst [vmem:[%s237] sm:$0x1] 0.0
      $region32: #{conv_block_forward.4} parent=27 // pred_fallthru
        _
      %v1788 = vld [vmem:[%s234] sm:$0x1]
      %v1789 = vadd.f32 %v1774, %v1775
      %v1790 = vadd.f32 %v1789, %v1776
      %v1791 = vadd.f32 %v1790, %v1777
      %v1792 = vadd.f32 %v1791, %v1778
      %v1793 = vadd.f32 %v1792, %v1779
      %v1794 = vadd.f32 %v1793, %v1780
      %v1795 = vadd.f32 %v1794, %v1781
      %v1796 = vrot.slane %v1795, 4
      %v1797 = vadd.f32 %v1795, %v1796
      %v1798 = vrot.slane %v1797, 2
      %v1799 = vadd.f32 %v1797, %v1798
      %v1800 = vrot.slane %v1799, 1
      %v1801 = vadd.f32 %v1799, %v1800
      %v1802 = vadd.f32 %v1788, %v1801
      %1803 = vst [vmem:[%s234] sm:$0x1] %v1802
      %v1804 = vld [vmem:[%s237] sm:$0x1]
      %v1805 = vmul.f32 %v1774, %v1774
      %v1806 = vmul.f32 %v1775, %v1775
      %v1807 = vmul.f32 %v1776, %v1776
      %v1808 = vmul.f32 %v1777, %v1777
      %v1809 = vmul.f32 %v1778, %v1778
      %v1810 = vmul.f32 %v1779, %v1779
      %v1811 = vmul.f32 %v1780, %v1780
      %v1812 = vmul.f32 %v1781, %v1781
      %v1813 = vadd.f32 %v1805, %v1806
      %v1814 = vadd.f32 %v1813, %v1807
      %v1815 = vadd.f32 %v1814, %v1808
      %v1816 = vadd.f32 %v1815, %v1809
      %v1817 = vadd.f32 %v1816, %v1810
      %v1818 = vadd.f32 %v1817, %v1811
      %v1819 = vadd.f32 %v1818, %v1812
      %v1820 = vrot.slane %v1819, 4
      %v1821 = vadd.f32 %v1819, %v1820
      %v1822 = vrot.slane %v1821, 2
      %v1823 = vadd.f32 %v1821, %v1822
      %v1824 = vrot.slane %v1823, 1
      %v1825 = vadd.f32 %v1823, %v1824
      %v1826 = vadd.f32 %v1804, %v1825
      %1827 = vst [vmem:[%s237] sm:$0x1] %v1826
      %1828 = vst [vmem:[%s230] sm:$0xff] %v1774
      %1829 = vst [vmem:[%s230 + $0x8] sm:$0xff] %v1775
      %1830 = vst [vmem:[%s230 + $0x10] sm:$0xff] %v1776
      %1831 = vst [vmem:[%s230 + $0x18] sm:$0xff] %v1777
      %1832 = vst [vmem:[%s230 + $0x20] sm:$0xff] %v1778
      %1833 = vst [vmem:[%s230 + $0x28] sm:$0xff] %v1779
      %1834 = vst [vmem:[%s230 + $0x30] sm:$0xff] %v1780
      %1835 = vst [vmem:[%s230 + $0x38] sm:$0xff] %v1781
      %s1836 = smul.u32 8, %s21
      %p1837 = scmp.lt.s32.totalorder %s20, 1
      %s1838 = scalar_select %p1837, %s20, 1
      %p1839 = scmp.lt.s32.totalorder %s1836, 7
      %s1840 = scalar_select %p1839, %s1836, 7
      %s1841 = smul.addr %s1838, 8
      %s1842 = sadd.s32 %s1840, %s1841
      %s1843 = smul.addr %s1842, 8
      %s1844 = scalar_lea.vmem %s2, %s1843
      %p1845 = scmp.lt.s32.totalorder %s20, 1
      %s1846 = scalar_select %p1845, %s20, 1
      %s1847 = scalar_lea.vmem %s3, %s1846
      %p1848 = scmp.lt.s32.totalorder %s20, 1
      %s1849 = scalar_select %p1848, %s20, 1
      %s1850 = scalar_lea.vmem %s4, %s1849
      // Predicated region
      $region33: #{conv_block_forward.4} parent=27 // pred_check
        %p1851 = pneg %p95
      $region34: #{conv_block_forward.4} parent=27 // pred_check_branch
        %1853 = sbr.rel (%p1851) target = $region36
      $region35: #{conv_block_forward.4} parent=27 // pred_region
        %s1854 = smul.u32 8, %s21
      $region36: #{conv_block_forward.4} parent=27 // pred_fallthru
        _
      // Predicated region
      $region37: #{conv_block_forward.4} parent=27 // pred_check
        %p1855 = pneg %p121
      $region38: #{conv_block_forward.4} parent=27 // pred_check_branch
        %1857 = sbr.rel (%p1855) target = $region40
      $region39: #{conv_block_forward.4} parent=27 // pred_region
        _
      $region40: #{conv_block_forward.4} parent=27 // pred_fallthru
        _
      // Predicated region
      $region41: #{conv_block_forward.4} parent=27 // pred_check
        %p1858 = pneg %p147
      $region42: #{conv_block_forward.4} parent=27 // pred_check_branch
        %1860 = sbr.rel (%p1858) target = $region44
      $region43: #{conv_block_forward.4} parent=27 // pred_region
        _
      $region44: #{conv_block_forward.4} parent=27 // pred_fallthru
        _
    $region28: #{conv_block_forward.4} parent=5 // pred_fallthru
      _
    %p1861 = scmp.le.s32.totalorder 2, %s11
    // Predicated region
    $region45: #{conv_block_forward.4} parent=5 // pred_check
      %p1862 = pneg %p1861
    $region46: #{conv_block_forward.4} parent=5 // pred_check_branch
      %1864 = sbr.rel (%p1862) target = $region48
    $region47: #{conv_block_forward.4} parent=5 // pred_region
      %s1865 = ssub.s32 %s11, 2
      // Predicated region
      $region49: #{conv_block_forward.4} parent=47 // pred_check
        %p1866 = pneg %p101
      $region50: #{conv_block_forward.4} parent=47 // pred_check_branch
        %1868 = sbr.rel (%p1866) target = $region52
      $region51: #{conv_block_forward.4} parent=47 // pred_region
        %s1869 = smul.u32 8, %s23
        %p1870 = scmp.lt.s32.totalorder %s22, 1
        %s1871 = scalar_select %p1870, %s22, 1
        %p1872 = scmp.lt.s32.totalorder %s1869, 7
        %s1873 = scalar_select %p1872, %s1869, 7
        %s1874 = smul.addr %s1871, 8
        %s1875 = sadd.s32 %s1873, %s1874
        %s1876 = smul.addr %s1875, 8
        %s1877 = scalar_lea.vmem %s2, %s1876
      $region52: #{conv_block_forward.4} parent=47 // pred_fallthru
        _
      // Predicated region
      $region53: #{conv_block_forward.4} parent=47 // pred_check
        %p1878 = pneg %p127
      $region54: #{conv_block_forward.4} parent=47 // pred_check_branch
        %1880 = sbr.rel (%p1878) target = $region56
      $region55: #{conv_block_forward.4} parent=47 // pred_region
        %p1881 = scmp.lt.s32.totalorder %s22, 1
        %s1882 = scalar_select %p1881, %s22, 1
        %s1883 = scalar_lea.vmem %s3, %s1882
      $region56: #{conv_block_forward.4} parent=47 // pred_fallthru
        _
      // Predicated region
      $region57: #{conv_block_forward.4} parent=47 // pred_check
        %p1884 = pneg %p153
      $region58: #{conv_block_forward.4} parent=47 // pred_check_branch
        %1886 = sbr.rel (%p1884) target = $region60
      $region59: #{conv_block_forward.4} parent=47 // pred_region
        %p1887 = scmp.lt.s32.totalorder %s22, 1
        %s1888 = scalar_select %p1887, %s22, 1
        %s1889 = scalar_lea.vmem %s4, %s1888
      $region60: #{conv_block_forward.4} parent=47 // pred_fallthru
        _
    $region48: #{conv_block_forward.4} parent=5 // pred_fallthru
      _
  $region6: #{conv_block_forward.4} parent=0 // loop_footer
    %s15 = sadd.s32 1, %s11
  $region7: #{conv_block_forward.4} parent=0 // loop_footer_branch
    %10 = sbr.rel target = $region3
  $region8: #{conv_block_forward.4} parent=0 // loop_exit
    _

</llo_original>
